<compile_context>
chip_gen: v5e
topology: v5e:2x2
jax: 0.10.0
libtpu: 0.0.40
codegen_flags: <defaults>
</compile_context>

<pallas_src>
import jax
import jax.numpy as jnp
from jax.experimental import pallas as pl
from jax.experimental.pallas import tpu as pltpu


# --------------------------------------------------------------------------
# Kernel: one grid step == CHUNK LSTM timesteps.
# --------------------------------------------------------------------------
def lstm_chunk_kernel(idx_ref,       # SMEM scalar-prefetch: (T,) int32 token ids
                      emb_ref,       # (V, HP)     embedding table (resident)
                      w_fused_ref,   # (2HP, 4HP)  [W_ih^T ; W_hh^T], gates [i,f,o,g]
                      b_ref,         # (1, 4HP)    b_ih + b_hh (reordered, padded)
                      h0_ref,        # (1, HP)     initial hidden (resident)
                      c0_ref,        # (1, HP)     initial cell   (resident)
                      w_dec_ref,     # (HP, OP)    decoder W^T    (resident)
                      b_dec_ref,     # (1, OP)     decoder bias   (resident)
                      logits_ref,    # (CHUNK, OP) per-chunk logits output
                      hc_ref,        # (1, 2HP)    packed final [h ; c] output
                      xh_scr,        # VMEM (1, 2HP) persistent [x ; h] operand
                      c_scr):        # VMEM (1, HP)  carried cell state
    HP = h0_ref.shape[-1]
    CHUNK = logits_ref.shape[0]
    chunk = pl.program_id(0)
    last_chunk = pl.num_programs(0) - 1

    # Initialize the carried state from the provided (hidden, cell) once.
    @pl.when(chunk == 0)
    def _init():
        xh_scr[:, HP:] = h0_ref[...]
        c_scr[...] = c0_ref[...]

    # Unrolled timestep loop (CHUNK is a small static constant).
    for s in range(CHUNK):
        t = chunk * CHUNK + s
        tok = idx_ref[t]

        # Embedding gather from the resident VMEM table into the x lanes of
        # the persistent [x ; h] operand.
        xh_scr[:, :HP] = emb_ref[pl.ds(tok, 1), :]

        # Fused gate pre-activations: [x, h] @ [W_ih^T ; W_hh^T] + bias.
        gates = (jnp.dot(xh_scr[...], w_fused_ref[...],
                         preferred_element_type=jnp.float32)
                 + b_ref[...])                                   # (1, 4HP)

        # Gate layout is [i | f | o | g] (each HP lanes): one sigmoid covers
        # the first 3 blocks, one tanh covers the last block.
        sig = jax.nn.sigmoid(gates[:, :3 * HP])
        i_g = sig[:, 0 * HP:1 * HP]
        f_g = sig[:, 1 * HP:2 * HP]
        o_g = sig[:, 2 * HP:3 * HP]
        g_g = jnp.tanh(gates[:, 3 * HP:])

        c1 = f_g * c_scr[...] + i_g * g_g
        h1 = o_g * jnp.tanh(c1)

        # Decoder: Linear(hidden_size, output_size).  Rows accumulate in the
        # (CHUNK, OP) VMEM output block; HBM writeback is one aligned block.
        logits_ref[s:s + 1, :] = (
            jnp.dot(h1, w_dec_ref[...], preferred_element_type=jnp.float32)
            + b_dec_ref[...])

        # Carry state: h1 into the h lanes of xh, c1 into the cell scratch.
        xh_scr[:, HP:] = h1
        c_scr[...] = c1

    # Packed final [h ; c] is only observable once -> write on last chunk.
    @pl.when(chunk == last_chunk)
    def _final():
        hc_ref[:, :HP] = xh_scr[:, HP:]
        hc_ref[:, HP:] = c_scr[...]


# --------------------------------------------------------------------------
# One-time parameter preprocessing: transpose, gate reorder [i,f,o,g],
# zero-pad H -> HP (=128) and O -> OP (multiple of 128), fold biases.
# --------------------------------------------------------------------------
def prepare_params(params, lane=128):
    emb, w_ih, w_hh, b_ih, b_hh, w_dec, b_dec = params
    V, H = emb.shape
    O = w_dec.shape[0]
    HP = ((H + lane - 1) // lane) * lane
    OP = ((O + lane - 1) // lane) * lane
    f32 = jnp.float32

    # Embedding: pad the feature dim to HP with zeros.
    emb_p = jnp.zeros((V, HP), f32).at[:, :H].set(emb.astype(f32))

    # PyTorch LSTM weight layout: rows are [i; f; g; o] blocks of size H.
    # Reorder to [i, f, o, g] so sigmoid gates are contiguous.
    def split_reorder(w):
        i, f, g, o = jnp.split(w, 4, axis=0)
        return (i, f, o, g)

    def pad_block(wt):   # wt: (H, H) transposed gate block -> (HP, HP)
        return jnp.zeros((HP, HP), f32).at[:H, :H].set(wt.astype(f32))

    ih_blocks = [pad_block(g.T) for g in split_reorder(w_ih)]
    hh_blocks = [pad_block(g.T) for g in split_reorder(w_hh)]
    w_fused = jnp.concatenate(
        [jnp.concatenate(ih_blocks, axis=1),
         jnp.concatenate(hh_blocks, axis=1)], axis=0)            # (2HP, 4HP)

    def pad_bias(bb):    # (H,) -> (HP,)
        return jnp.zeros((HP,), f32).at[:H].set(bb.astype(f32))

    bi, bf, bo, bg = split_reorder(b_ih + b_hh)
    b = jnp.concatenate(
        [pad_bias(bi), pad_bias(bf), pad_bias(bo), pad_bias(bg)]
    ).reshape(1, 4 * HP)

    w_dec_t = jnp.zeros((HP, OP), f32).at[:H, :O].set(w_dec.T.astype(f32))
    b_dec2 = jnp.zeros((1, OP), f32).at[0, :O].set(b_dec.astype(f32))

    dims = (V, H, HP, O, OP)
    return (emb_p, w_fused, b, w_dec_t, b_dec2, dims)


# --------------------------------------------------------------------------
# Wrapper: runs the whole token sequence inside one pallas_call.
# Equivalent to calling RNN.forward(token[t], hidden, cell) for t = 0..T-1
# with the returned (hidden, cell) fed back each step (batch=1, 1 layer).
# --------------------------------------------------------------------------
def rnn_forward_sequence(tokens, hidden, cell, prepared):
    emb_p, w_fused, b, w_dec_t, b_dec2, dims = prepared
    V, H, HP, O, OP = dims
    T = int(tokens.shape[0])

    # Chunk of 8 timesteps per grid step (sublane-aligned logits block);
    # if T is not a multiple of 8 the whole sequence runs in one grid step
    # (block == full array, still legal).
    CHUNK = 8 if (T % 8 == 0) else T
    n_chunks = T // CHUNK

    h0 = jnp.zeros((1, HP), jnp.float32).at[:, :H].set(
        hidden.reshape(1, H).astype(jnp.float32))
    c0 = jnp.zeros((1, HP), jnp.float32).at[:, :H].set(
        cell.reshape(1, H).astype(jnp.float32))
    idx = tokens.reshape(T).astype(jnp.int32)

    grid_spec = pltpu.PrefetchScalarGridSpec(
        num_scalar_prefetch=1,
        grid=(n_chunks,),
        in_specs=[
            # Constant index_maps -> everything stays resident in VMEM and is
            # DMA'd from HBM exactly once.
            pl.BlockSpec((V, HP), lambda c, idx: (0, 0)),          # emb table
            pl.BlockSpec((2 * HP, 4 * HP), lambda c, idx: (0, 0)),  # w_fused
            pl.BlockSpec((1, 4 * HP), lambda c, idx: (0, 0)),       # bias
            pl.BlockSpec((1, HP), lambda c, idx: (0, 0)),           # h0
            pl.BlockSpec((1, HP), lambda c, idx: (0, 0)),           # c0
            pl.BlockSpec((HP, OP), lambda c, idx: (0, 0)),          # w_dec^T
            pl.BlockSpec((1, OP), lambda c, idx: (0, 0)),           # b_dec
        ],
        out_specs=[
            pl.BlockSpec((CHUNK, OP), lambda c, idx: (c, 0)),       # logits
            pl.BlockSpec((1, 2 * HP), lambda c, idx: (0, 0)),       # packed h,c
        ],
        scratch_shapes=[
            pltpu.VMEM((1, 2 * HP), jnp.float32),   # persistent [x ; h]
            pltpu.VMEM((1, HP), jnp.float32),       # carried cell state
        ],
    )

    logits_p, hc = pl.pallas_call(
        lstm_chunk_kernel,
        grid_spec=grid_spec,
        out_shape=(
            jax.ShapeDtypeStruct((T, OP), jnp.float32),
            jax.ShapeDtypeStruct((1, 2 * HP), jnp.float32),
        ),
        compiler_params=pltpu.CompilerParams(
            dimension_semantics=("arbitrary",)),   # sequential h->h carry
    )(idx, emb_p, w_fused, b, h0, c0, w_dec_t, b_dec2)

    logits = logits_p[:, :O]
    h_final = hc[:, :H].reshape(1, 1, H)
    c_final = hc[:, HP:HP + H].reshape(1, 1, H)
    return logits, h_final, c_final


def rnn_forward(token_idx, hidden, cell, prepared):
    """Single-step forward matching RNN.forward() exactly (T=1)."""
    return rnn_forward_sequence(token_idx.reshape(1), hidden, cell, prepared)


# --------------------------------------------------------------------------
# Pure-JAX reference replicating the PyTorch semantics exactly.
# --------------------------------------------------------------------------
def ref_forward_step(token_idx, hidden, cell, params):
    emb, w_ih, w_hh, b_ih, b_hh, w_dec, b_dec = params
    H = emb.shape[1]
    x = emb[token_idx.reshape(1)]                       # (1, H)
    h0 = hidden.reshape(1, H)
    c0 = cell.reshape(1, H)
    gates = x @ w_ih.T + b_ih + h0 @ w_hh.T + b_hh
    i, f, g, o = jnp.split(gates, 4, axis=-1)           # PyTorch order i,f,g,o
    c1 = jax.nn.sigmoid(f) * c0 + jax.nn.sigmoid(i) * jnp.tanh(g)
    h1 = jax.nn.sigmoid(o) * jnp.tanh(c1)
    out = h1 @ w_dec.T + b_dec
    return out, h1.reshape(1, 1, H), c1.reshape(1, 1, H)


def ref_forward_sequence(tokens, hidden, cell, params):
    outs = []
    h, c = hidden, cell
    for t in range(tokens.shape[0]):
        out, h, c = ref_forward_step(tokens[t:t + 1], h, c, params)
        outs.append(out)
    return jnp.concatenate(outs, axis=0), h, c


if __name__ == "__main__":
    # Shapes consistent with the module: hidden_size = 100, 1 layer, batch = 1,
    # vocab = output_size = 100 (printable-character-sized), sequence T = 16.
    V, H, O, T = 100, 100, 100, 16

    key = jax.random.PRNGKey(0)
    keys = jax.random.split(key, 10)
    emb = jax.random.normal(keys[0], (V, H), jnp.float32) * 0.1
    w_ih = jax.random.normal(keys[1], (4 * H, H), jnp.float32) * 0.1
    w_hh = jax.random.normal(keys[2], (4 * H, H), jnp.float32) * 0.1
    b_ih = jax.random.normal(keys[3], (4 * H,), jnp.float32) * 0.1
    b_hh = jax.random.normal(keys[4], (4 * H,), jnp.float32) * 0.1
    w_dec = jax.random.normal(keys[5], (O, H), jnp.float32) * 0.1
    b_dec = jax.random.normal(keys[6], (O,), jnp.float32) * 0.1
    params = (emb, w_ih, w_hh, b_ih, b_hh, w_dec, b_dec)

    prepared = prepare_params(params)   # one-time preprocessing

    tokens = jax.random.randint(keys[7], (T,), 0, V, dtype=jnp.int32)
    # Non-zero initial state exercises the h/c carry (init_hidden() is zeros).
    hidden = jax.random.normal(keys[8], (1, 1, H), jnp.float32) * 0.1
    cell = jax.random.normal(keys[9], (1, 1, H), jnp.float32) * 0.1

    # TODO(synk): autoregressive sampling (torch.multinomial in generate.py)
    # stays outside the kernel; the kernel processes a given token sequence.
    logits, h_f, c_f = rnn_forward_sequence(tokens, hidden, cell, prepared)
    jax.block_until_ready((logits, h_f, c_f))

    # Correctness check against a pure-JAX reference of the PyTorch forward,
    # applied step by step with the carried (hidden, cell).
    r_logits, r_h, r_c = ref_forward_sequence(tokens, hidden, cell, params)
    assert jnp.allclose(logits, r_logits, atol=1e-4), "logits mismatch"
    assert jnp.allclose(h_f, r_h, atol=1e-4), "hidden mismatch"
    assert jnp.allclose(c_f, r_c, atol=1e-4), "cell mismatch"

    # Also sanity-check the single-step API (T=1) matching RNN.forward().
    out1, h1, c1 = rnn_forward(tokens[0:1], hidden, cell, prepared)
    r_out1, r_h1, r_c1 = ref_forward_step(tokens[0:1], hidden, cell, params)
    assert jnp.allclose(out1, r_out1, atol=1e-4), "single-step logits mismatch"
    assert jnp.allclose(h1, r_h1, atol=1e-4), "single-step hidden mismatch"
    assert jnp.allclose(c1, r_c1, atol=1e-4), "single-step cell mismatch"

    print("KERNEL_OK")
</pallas_src>

<mosaic_0001>
module attributes {stable_mosaic.version = 11 : i64} {
  func.func @lstm_chunk_kernel(%arg0: i32, %arg1: memref<16xi32, #tpu.memory_space<smem>>, %arg2: memref<100x128xf32, #tpu.memory_space<vmem>>, %arg3: memref<256x512xf32, #tpu.memory_space<vmem>>, %arg4: memref<1x512xf32, #tpu.memory_space<vmem>>, %arg5: memref<1x128xf32, #tpu.memory_space<vmem>>, %arg6: memref<1x128xf32, #tpu.memory_space<vmem>>, %arg7: memref<128x128xf32, #tpu.memory_space<vmem>>, %arg8: memref<1x128xf32, #tpu.memory_space<vmem>>, %arg9: memref<8x128xf32, #tpu.memory_space<vmem>>, %arg10: memref<1x256xf32, #tpu.memory_space<vmem>>, %arg11: memref<1x256xf32, #tpu.memory_space<vmem>>, %arg12: memref<1x128xf32, #tpu.memory_space<vmem>>) attributes {dimension_semantics = [#tpu.dimension_semantics<arbitrary>], iteration_bounds = array<i64: 2>, scalar_prefetch = 1 : i64, scratch_operands = 2 : i64, tpu.core_type = #tpu.core_type<tc>, window_params = [{pipeline_mode = #tpu.pipeline_mode<synchronous>, transform_indices = @transform_0, window_bounds = array<i64: 100, 128>}, {pipeline_mode = #tpu.pipeline_mode<synchronous>, transform_indices = @transform_1, window_bounds = array<i64: 256, 512>}, {pipeline_mode = #tpu.pipeline_mode<synchronous>, transform_indices = @transform_2, window_bounds = array<i64: 1, 512>}, {pipeline_mode = #tpu.pipeline_mode<synchronous>, transform_indices = @transform_3, window_bounds = array<i64: 1, 128>}, {pipeline_mode = #tpu.pipeline_mode<synchronous>, transform_indices = @transform_4, window_bounds = array<i64: 1, 128>}, {pipeline_mode = #tpu.pipeline_mode<synchronous>, transform_indices = @transform_5, window_bounds = array<i64: 128, 128>}, {pipeline_mode = #tpu.pipeline_mode<synchronous>, transform_indices = @transform_6, window_bounds = array<i64: 1, 128>}, {transform_indices = @transform_7, window_bounds = array<i64: 8, 128>}, {pipeline_mode = #tpu.pipeline_mode<synchronous>, transform_indices = @transform_8, window_bounds = array<i64: 1, 256>}]} {
    %c0_i32 = arith.constant 0 : i32
    %0 = arith.cmpi eq, %arg0, %c0_i32 : i32
    %1 = arith.extui %0 : i1 to i32
    %c0_i32_0 = arith.constant 0 : i32
    %2 = arith.cmpi ne, %1, %c0_i32_0 : i32
    scf.if %2 {
      %c0_193 = arith.constant 0 : index
      %c0_194 = arith.constant 0 : index
      %294 = vector.load %arg5[%c0_193, %c0_194] : memref<1x128xf32, #tpu.memory_space<vmem>>, vector<1x128xf32>
      %c0_195 = arith.constant 0 : index
      %c128_196 = arith.constant 128 : index
      %295 = vector.load %arg11[%c0_195, %c128_196] : memref<1x256xf32, #tpu.memory_space<vmem>>, vector<1x128xf32>
      tpu.vector_store %arg11[%c0_195, %c128_196], %294 {strides = array<i32>} : memref<1x256xf32, #tpu.memory_space<vmem>>, vector<1x128xf32>,
      %c0_197 = arith.constant 0 : index
      %c0_198 = arith.constant 0 : index
      %296 = vector.load %arg6[%c0_197, %c0_198] : memref<1x128xf32, #tpu.memory_space<vmem>>, vector<1x128xf32>
      %c0_199 = arith.constant 0 : index
      %c0_200 = arith.constant 0 : index
      %297 = vector.load %arg12[%c0_199, %c0_200] : memref<1x128xf32, #tpu.memory_space<vmem>>, vector<1x128xf32>
      tpu.vector_store %arg12[%c0_199, %c0_200], %296 {strides = array<i32>} : memref<1x128xf32, #tpu.memory_space<vmem>>, vector<1x128xf32>,
    } else {
    }
    %c8_i32 = arith.constant 8 : i32
    %3 = arith.muli %arg0, %c8_i32 : i32
    %c0_i32_1 = arith.constant 0 : i32
    %4 = arith.addi %3, %c0_i32_1 : i32
    %5 = arith.index_cast %4 : i32 to index
    %6 = memref.load %arg1[%5] : memref<16xi32, #tpu.memory_space<smem>>
    %7 = arith.index_cast %6 : i32 to index
    %c0 = arith.constant 0 : index
    %8 = vector.load %arg2[%7, %c0] : memref<100x128xf32, #tpu.memory_space<vmem>>, vector<1x128xf32>
    %c0_2 = arith.constant 0 : index
    %c0_3 = arith.constant 0 : index
    %9 = vector.load %arg11[%c0_2, %c0_3] : memref<1x256xf32, #tpu.memory_space<vmem>>, vector<1x128xf32>
    tpu.vector_store %arg11[%c0_2, %c0_3], %8 {strides = array<i32>} : memref<1x256xf32, #tpu.memory_space<vmem>>, vector<1x128xf32>,
    %c0_4 = arith.constant 0 : index
    %c0_5 = arith.constant 0 : index
    %10 = vector.load %arg11[%c0_4, %c0_5] : memref<1x256xf32, #tpu.memory_space<vmem>>, vector<1x256xf32>
    %c0_6 = arith.constant 0 : index
    %c0_7 = arith.constant 0 : index
    %11 = vector.load %arg3[%c0_6, %c0_7] : memref<256x512xf32, #tpu.memory_space<vmem>>, vector<256x512xf32>
    %cst = arith.constant dense<0.000000e+00> : vector<1x512xf32>
    %12 = tpu.matmul %10, %11, %cst {dimension_numbers = #tpu.dot_dimension_numbers<[1], [0], [0], [1], [0, 0, 1, 1], [], []>} : vector<1x256xf32>, vector<256x512xf32>, vector<1x512xf32> -> vector<1x512xf32>
    %c0_8 = arith.constant 0 : index
    %c0_9 = arith.constant 0 : index
    %13 = vector.load %arg4[%c0_8, %c0_9] : memref<1x512xf32, #tpu.memory_space<vmem>>, vector<1x512xf32>
    %14 = arith.addf %12, %13 : vector<1x512xf32>
    %15 = vector.extract_strided_slice %14 {offsets = [0, 0], sizes = [1, 384], strides = [1, 1]} : vector<1x512xf32> to vector<1x384xf32>
    %16 = arith.negf %15 : vector<1x384xf32>
    %17 = math.exp %16 : vector<1x384xf32>
    %cst_10 = arith.constant 1.000000e+00 : f32
    %18 = vector.broadcast %cst_10 : f32 to vector<1x384xf32>
    %19 = arith.addf %18, %17 : vector<1x384xf32>
    %20 = arith.divf %18, %19 : vector<1x384xf32>
    %21 = vector.extract_strided_slice %20 {offsets = [0, 0], sizes = [1, 128], strides = [1, 1]} : vector<1x384xf32> to vector<1x128xf32>
    %22 = vector.extract_strided_slice %20 {offsets = [0, 128], sizes = [1, 128], strides = [1, 1]} : vector<1x384xf32> to vector<1x128xf32>
    %23 = vector.extract_strided_slice %20 {offsets = [0, 256], sizes = [1, 128], strides = [1, 1]} : vector<1x384xf32> to vector<1x128xf32>
    %24 = vector.extract_strided_slice %14 {offsets = [0, 384], sizes = [1, 128], strides = [1, 1]} : vector<1x512xf32> to vector<1x128xf32>
    %25 = math.tanh %24 : vector<1x128xf32>
    %c0_11 = arith.constant 0 : index
    %c0_12 = arith.constant 0 : index
    %26 = vector.load %arg12[%c0_11, %c0_12] : memref<1x128xf32, #tpu.memory_space<vmem>>, vector<1x128xf32>
    %27 = arith.mulf %22, %26 : vector<1x128xf32>
    %28 = arith.mulf %21, %25 : vector<1x128xf32>
    %29 = arith.addf %27, %28 : vector<1x128xf32>
    %30 = math.tanh %29 : vector<1x128xf32>
    %31 = arith.mulf %23, %30 : vector<1x128xf32>
    %c0_13 = arith.constant 0 : index
    %c0_14 = arith.constant 0 : index
    %32 = vector.load %arg7[%c0_13, %c0_14] : memref<128x128xf32, #tpu.memory_space<vmem>>, vector<128x128xf32>
    %cst_15 = arith.constant dense<0.000000e+00> : vector<1x128xf32>
    %33 = tpu.matmul %31, %32, %cst_15 {dimension_numbers = #tpu.dot_dimension_numbers<[1], [0], [0], [1], [0, 0, 1, 1], [], []>} : vector<1x128xf32>, vector<128x128xf32>, vector<1x128xf32> -> vector<1x128xf32>
    %c0_16 = arith.constant 0 : index
    %c0_17 = arith.constant 0 : index
    %34 = vector.load %arg8[%c0_16, %c0_17] : memref<1x128xf32, #tpu.memory_space<vmem>>, vector<1x128xf32>
    %35 = arith.addf %33, %34 : vector<1x128xf32>
    %c0_18 = arith.constant 0 : index
    %c0_19 = arith.constant 0 : index
    %36 = vector.load %arg9[%c0_18, %c0_19] : memref<8x128xf32, #tpu.memory_space<vmem>>, vector<1x128xf32>
    tpu.vector_store %arg9[%c0_18, %c0_19], %35 {strides = array<i32>} : memref<8x128xf32, #tpu.memory_space<vmem>>, vector<1x128xf32>,
    %c0_20 = arith.constant 0 : index
    %c128 = arith.constant 128 : index
    %37 = vector.load %arg11[%c0_20, %c128] : memref<1x256xf32, #tpu.memory_space<vmem>>, vector<1x128xf32>
    tpu.vector_store %arg11[%c0_20, %c128], %31 {strides = array<i32>} : memref<1x256xf32, #tpu.memory_space<vmem>>, vector<1x128xf32>,
    %c0_21 = arith.constant 0 : index
    %c0_22 = arith.constant 0 : index
    %38 = vector.load %arg12[%c0_21, %c0_22] : memref<1x128xf32, #tpu.memory_space<vmem>>, vector<1x128xf32>
    tpu.vector_store %arg12[%c0_21, %c0_22], %29 {strides = array<i32>} : memref<1x128xf32, #tpu.memory_space<vmem>>, vector<1x128xf32>,
    %c8_i32_23 = arith.constant 8 : i32
    %39 = arith.muli %arg0, %c8_i32_23 : i32
    %c1_i32 = arith.constant 1 : i32
    %40 = arith.addi %39, %c1_i32 : i32
    %41 = arith.index_cast %40 : i32 to index
    %42 = memref.load %arg1[%41] : memref<16xi32, #tpu.memory_space<smem>>
    %43 = arith.index_cast %42 : i32 to index
    %c0_24 = arith.constant 0 : index
    %44 = vector.load %arg2[%43, %c0_24] : memref<100x128xf32, #tpu.memory_space<vmem>>, vector<1x128xf32>
    %c0_25 = arith.constant 0 : index
    %c0_26 = arith.constant 0 : index
    %45 = vector.load %arg11[%c0_25, %c0_26] : memref<1x256xf32, #tpu.memory_space<vmem>>, vector<1x128xf32>
    tpu.vector_store %arg11[%c0_25, %c0_26], %44 {strides = array<i32>} : memref<1x256xf32, #tpu.memory_space<vmem>>, vector<1x128xf32>,
    %c0_27 = arith.constant 0 : index
    %c0_28 = arith.constant 0 : index
    %46 = vector.load %arg11[%c0_27, %c0_28] : memref<1x256xf32, #tpu.memory_space<vmem>>, vector<1x256xf32>
    %c0_29 = arith.constant 0 : index
    %c0_30 = arith.constant 0 : index
    %47 = vector.load %arg3[%c0_29, %c0_30] : memref<256x512xf32, #tpu.memory_space<vmem>>, vector<256x512xf32>
    %cst_31 = arith.constant dense<0.000000e+00> : vector<1x512xf32>
    %48 = tpu.matmul %46, %47, %cst_31 {dimension_numbers = #tpu.dot_dimension_numbers<[1], [0], [0], [1], [0, 0, 1, 1], [], []>} : vector<1x256xf32>, vector<256x512xf32>, vector<1x512xf32> -> vector<1x512xf32>
    %c0_32 = arith.constant 0 : index
    %c0_33 = arith.constant 0 : index
    %49 = vector.load %arg4[%c0_32, %c0_33] : memref<1x512xf32, #tpu.memory_space<vmem>>, vector<1x512xf32>
    %50 = arith.addf %48, %49 : vector<1x512xf32>
    %51 = vector.extract_strided_slice %50 {offsets = [0, 0], sizes = [1, 384], strides = [1, 1]} : vector<1x512xf32> to vector<1x384xf32>
    %52 = arith.negf %51 : vector<1x384xf32>
    %53 = math.exp %52 : vector<1x384xf32>
    %cst_34 = arith.constant 1.000000e+00 : f32
    %54 = vector.broadcast %cst_34 : f32 to vector<1x384xf32>
    %55 = arith.addf %54, %53 : vector<1x384xf32>
    %56 = arith.divf %54, %55 : vector<1x384xf32>
    %57 = vector.extract_strided_slice %56 {offsets = [0, 0], sizes = [1, 128], strides = [1, 1]} : vector<1x384xf32> to vector<1x128xf32>
    %58 = vector.extract_strided_slice %56 {offsets = [0, 128], sizes = [1, 128], strides = [1, 1]} : vector<1x384xf32> to vector<1x128xf32>
    %59 = vector.extract_strided_slice %56 {offsets = [0, 256], sizes = [1, 128], strides = [1, 1]} : vector<1x384xf32> to vector<1x128xf32>
    %60 = vector.extract_strided_slice %50 {offsets = [0, 384], sizes = [1, 128], strides = [1, 1]} : vector<1x512xf32> to vector<1x128xf32>
    %61 = math.tanh %60 : vector<1x128xf32>
    %c0_35 = arith.constant 0 : index
    %c0_36 = arith.constant 0 : index
    %62 = vector.load %arg12[%c0_35, %c0_36] : memref<1x128xf32, #tpu.memory_space<vmem>>, vector<1x128xf32>
    %63 = arith.mulf %58, %62 : vector<1x128xf32>
    %64 = arith.mulf %57, %61 : vector<1x128xf32>
    %65 = arith.addf %63, %64 : vector<1x128xf32>
    %66 = math.tanh %65 : vector<1x128xf32>
    %67 = arith.mulf %59, %66 : vector<1x128xf32>
    %c0_37 = arith.constant 0 : index
    %c0_38 = arith.constant 0 : index
    %68 = vector.load %arg7[%c0_37, %c0_38] : memref<128x128xf32, #tpu.memory_space<vmem>>, vector<128x128xf32>
    %cst_39 = arith.constant dense<0.000000e+00> : vector<1x128xf32>
    %69 = tpu.matmul %67, %68, %cst_39 {dimension_numbers = #tpu.dot_dimension_numbers<[1], [0], [0], [1], [0, 0, 1, 1], [], []>} : vector<1x128xf32>, vector<128x128xf32>, vector<1x128xf32> -> vector<1x128xf32>
    %c0_40 = arith.constant 0 : index
    %c0_41 = arith.constant 0 : index
    %70 = vector.load %arg8[%c0_40, %c0_41] : memref<1x128xf32, #tpu.memory_space<vmem>>, vector<1x128xf32>
    %71 = arith.addf %69, %70 : vector<1x128xf32>
    %c1 = arith.constant 1 : index
    %c0_42 = arith.constant 0 : index
    %72 = vector.load %arg9[%c1, %c0_42] : memref<8x128xf32, #tpu.memory_space<vmem>>, vector<1x128xf32>
    tpu.vector_store %arg9[%c1, %c0_42], %71 {strides = array<i32>} : memref<8x128xf32, #tpu.memory_space<vmem>>, vector<1x128xf32>,
    %c0_43 = arith.constant 0 : index
    %c128_44 = arith.constant 128 : index
    %73 = vector.load %arg11[%c0_43, %c128_44] : memref<1x256xf32, #tpu.memory_space<vmem>>, vector<1x128xf32>
    tpu.vector_store %arg11[%c0_43, %c128_44], %67 {strides = array<i32>} : memref<1x256xf32, #tpu.memory_space<vmem>>, vector<1x128xf32>,
    %c0_45 = arith.constant 0 : index
    %c0_46 = arith.constant 0 : index
    %74 = vector.load %arg12[%c0_45, %c0_46] : memref<1x128xf32, #tpu.memory_space<vmem>>, vector<1x128xf32>
    tpu.vector_store %arg12[%c0_45, %c0_46], %65 {strides = array<i32>} : memref<1x128xf32, #tpu.memory_space<vmem>>, vector<1x128xf32>,
    %c8_i32_47 = arith.constant 8 : i32
    %75 = arith.muli %arg0, %c8_i32_47 : i32
    %c2_i32 = arith.constant 2 : i32
    %76 = arith.addi %75, %c2_i32 : i32
    %77 = arith.index_cast %76 : i32 to index
    %78 = memref.load %arg1[%77] : memref<16xi32, #tpu.memory_space<smem>>
    %79 = arith.index_cast %78 : i32 to index
    %c0_48 = arith.constant 0 : index
    %80 = vector.load %arg2[%79, %c0_48] : memref<100x128xf32, #tpu.memory_space<vmem>>, vector<1x128xf32>
    %c0_49 = arith.constant 0 : index
    %c0_50 = arith.constant 0 : index
    %81 = vector.load %arg11[%c0_49, %c0_50] : memref<1x256xf32, #tpu.memory_space<vmem>>, vector<1x128xf32>
    tpu.vector_store %arg11[%c0_49, %c0_50], %80 {strides = array<i32>} : memref<1x256xf32, #tpu.memory_space<vmem>>, vector<1x128xf32>,
    %c0_51 = arith.constant 0 : index
    %c0_52 = arith.constant 0 : index
    %82 = vector.load %arg11[%c0_51, %c0_52] : memref<1x256xf32, #tpu.memory_space<vmem>>, vector<1x256xf32>
    %c0_53 = arith.constant 0 : index
    %c0_54 = arith.constant 0 : index
    %83 = vector.load %arg3[%c0_53, %c0_54] : memref<256x512xf32, #tpu.memory_space<vmem>>, vector<256x512xf32>
    %cst_55 = arith.constant dense<0.000000e+00> : vector<1x512xf32>
    %84 = tpu.matmul %82, %83, %cst_55 {dimension_numbers = #tpu.dot_dimension_numbers<[1], [0], [0], [1], [0, 0, 1, 1], [], []>} : vector<1x256xf32>, vector<256x512xf32>, vector<1x512xf32> -> vector<1x512xf32>
    %c0_56 = arith.constant 0 : index
    %c0_57 = arith.constant 0 : index
    %85 = vector.load %arg4[%c0_56, %c0_57] : memref<1x512xf32, #tpu.memory_space<vmem>>, vector<1x512xf32>
    %86 = arith.addf %84, %85 : vector<1x512xf32>
    %87 = vector.extract_strided_slice %86 {offsets = [0, 0], sizes = [1, 384], strides = [1, 1]} : vector<1x512xf32> to vector<1x384xf32>
    %88 = arith.negf %87 : vector<1x384xf32>
    %89 = math.exp %88 : vector<1x384xf32>
    %cst_58 = arith.constant 1.000000e+00 : f32
    %90 = vector.broadcast %cst_58 : f32 to vector<1x384xf32>
    %91 = arith.addf %90, %89 : vector<1x384xf32>
    %92 = arith.divf %90, %91 : vector<1x384xf32>
    %93 = vector.extract_strided_slice %92 {offsets = [0, 0], sizes = [1, 128], strides = [1, 1]} : vector<1x384xf32> to vector<1x128xf32>
    %94 = vector.extract_strided_slice %92 {offsets = [0, 128], sizes = [1, 128], strides = [1, 1]} : vector<1x384xf32> to vector<1x128xf32>
    %95 = vector.extract_strided_slice %92 {offsets = [0, 256], sizes = [1, 128], strides = [1, 1]} : vector<1x384xf32> to vector<1x128xf32>
    %96 = vector.extract_strided_slice %86 {offsets = [0, 384], sizes = [1, 128], strides = [1, 1]} : vector<1x512xf32> to vector<1x128xf32>
    %97 = math.tanh %96 : vector<1x128xf32>
    %c0_59 = arith.constant 0 : index
    %c0_60 = arith.constant 0 : index
    %98 = vector.load %arg12[%c0_59, %c0_60] : memref<1x128xf32, #tpu.memory_space<vmem>>, vector<1x128xf32>
    %99 = arith.mulf %94, %98 : vector<1x128xf32>
    %100 = arith.mulf %93, %97 : vector<1x128xf32>
    %101 = arith.addf %99, %100 : vector<1x128xf32>
    %102 = math.tanh %101 : vector<1x128xf32>
    %103 = arith.mulf %95, %102 : vector<1x128xf32>
    %c0_61 = arith.constant 0 : index
    %c0_62 = arith.constant 0 : index
    %104 = vector.load %arg7[%c0_61, %c0_62] : memref<128x128xf32, #tpu.memory_space<vmem>>, vector<128x128xf32>
    %cst_63 = arith.constant dense<0.000000e+00> : vector<1x128xf32>
    %105 = tpu.matmul %103, %104, %cst_63 {dimension_numbers = #tpu.dot_dimension_numbers<[1], [0], [0], [1], [0, 0, 1, 1], [], []>} : vector<1x128xf32>, vector<128x128xf32>, vector<1x128xf32> -> vector<1x128xf32>
    %c0_64 = arith.constant 0 : index
    %c0_65 = arith.constant 0 : index
    %106 = vector.load %arg8[%c0_64, %c0_65] : memref<1x128xf32, #tpu.memory_space<vmem>>, vector<1x128xf32>
    %107 = arith.addf %105, %106 : vector<1x128xf32>
    %c2 = arith.constant 2 : index
    %c0_66 = arith.constant 0 : index
    %108 = vector.load %arg9[%c2, %c0_66] : memref<8x128xf32, #tpu.memory_space<vmem>>, vector<1x128xf32>
    tpu.vector_store %arg9[%c2, %c0_66], %107 {strides = array<i32>} : memref<8x128xf32, #tpu.memory_space<vmem>>, vector<1x128xf32>,
    %c0_67 = arith.constant 0 : index
    %c128_68 = arith.constant 128 : index
    %109 = vector.load %arg11[%c0_67, %c128_68] : memref<1x256xf32, #tpu.memory_space<vmem>>, vector<1x128xf32>
    tpu.vector_store %arg11[%c0_67, %c128_68], %103 {strides = array<i32>} : memref<1x256xf32, #tpu.memory_space<vmem>>, vector<1x128xf32>,
    %c0_69 = arith.constant 0 : index
    %c0_70 = arith.constant 0 : index
    %110 = vector.load %arg12[%c0_69, %c0_70] : memref<1x128xf32, #tpu.memory_space<vmem>>, vector<1x128xf32>
    tpu.vector_store %arg12[%c0_69, %c0_70], %101 {strides = array<i32>} : memref<1x128xf32, #tpu.memory_space<vmem>>, vector<1x128xf32>,
    %c8_i32_71 = arith.constant 8 : i32
    %111 = arith.muli %arg0, %c8_i32_71 : i32
    %c3_i32 = arith.constant 3 : i32
    %112 = arith.addi %111, %c3_i32 : i32
    %113 = arith.index_cast %112 : i32 to index
    %114 = memref.load %arg1[%113] : memref<16xi32, #tpu.memory_space<smem>>
    %115 = arith.index_cast %114 : i32 to index
    %c0_72 = arith.constant 0 : index
    %116 = vector.load %arg2[%115, %c0_72] : memref<100x128xf32, #tpu.memory_space<vmem>>, vector<1x128xf32>
    %c0_73 = arith.constant 0 : index
    %c0_74 = arith.constant 0 : index
    %117 = vector.load %arg11[%c0_73, %c0_74] : memref<1x256xf32, #tpu.memory_space<vmem>>, vector<1x128xf32>
    tpu.vector_store %arg11[%c0_73, %c0_74], %116 {strides = array<i32>} : memref<1x256xf32, #tpu.memory_space<vmem>>, vector<1x128xf32>,
    %c0_75 = arith.constant 0 : index
    %c0_76 = arith.constant 0 : index
    %118 = vector.load %arg11[%c0_75, %c0_76] : memref<1x256xf32, #tpu.memory_space<vmem>>, vector<1x256xf32>
    %c0_77 = arith.constant 0 : index
    %c0_78 = arith.constant 0 : index
    %119 = vector.load %arg3[%c0_77, %c0_78] : memref<256x512xf32, #tpu.memory_space<vmem>>, vector<256x512xf32>
    %cst_79 = arith.constant dense<0.000000e+00> : vector<1x512xf32>
    %120 = tpu.matmul %118, %119, %cst_79 {dimension_numbers = #tpu.dot_dimension_numbers<[1], [0], [0], [1], [0, 0, 1, 1], [], []>} : vector<1x256xf32>, vector<256x512xf32>, vector<1x512xf32> -> vector<1x512xf32>
    %c0_80 = arith.constant 0 : index
    %c0_81 = arith.constant 0 : index
    %121 = vector.load %arg4[%c0_80, %c0_81] : memref<1x512xf32, #tpu.memory_space<vmem>>, vector<1x512xf32>
    %122 = arith.addf %120, %121 : vector<1x512xf32>
    %123 = vector.extract_strided_slice %122 {offsets = [0, 0], sizes = [1, 384], strides = [1, 1]} : vector<1x512xf32> to vector<1x384xf32>
    %124 = arith.negf %123 : vector<1x384xf32>
    %125 = math.exp %124 : vector<1x384xf32>
    %cst_82 = arith.constant 1.000000e+00 : f32
    %126 = vector.broadcast %cst_82 : f32 to vector<1x384xf32>
    %127 = arith.addf %126, %125 : vector<1x384xf32>
    %128 = arith.divf %126, %127 : vector<1x384xf32>
    %129 = vector.extract_strided_slice %128 {offsets = [0, 0], sizes = [1, 128], strides = [1, 1]} : vector<1x384xf32> to vector<1x128xf32>
    %130 = vector.extract_strided_slice %128 {offsets = [0, 128], sizes = [1, 128], strides = [1, 1]} : vector<1x384xf32> to vector<1x128xf32>
    %131 = vector.extract_strided_slice %128 {offsets = [0, 256], sizes = [1, 128], strides = [1, 1]} : vector<1x384xf32> to vector<1x128xf32>
    %132 = vector.extract_strided_slice %122 {offsets = [0, 384], sizes = [1, 128], strides = [1, 1]} : vector<1x512xf32> to vector<1x128xf32>
    %133 = math.tanh %132 : vector<1x128xf32>
    %c0_83 = arith.constant 0 : index
    %c0_84 = arith.constant 0 : index
    %134 = vector.load %arg12[%c0_83, %c0_84] : memref<1x128xf32, #tpu.memory_space<vmem>>, vector<1x128xf32>
    %135 = arith.mulf %130, %134 : vector<1x128xf32>
    %136 = arith.mulf %129, %133 : vector<1x128xf32>
    %137 = arith.addf %135, %136 : vector<1x128xf32>
    %138 = math.tanh %137 : vector<1x128xf32>
    %139 = arith.mulf %131, %138 : vector<1x128xf32>
    %c0_85 = arith.constant 0 : index
    %c0_86 = arith.constant 0 : index
    %140 = vector.load %arg7[%c0_85, %c0_86] : memref<128x128xf32, #tpu.memory_space<vmem>>, vector<128x128xf32>
    %cst_87 = arith.constant dense<0.000000e+00> : vector<1x128xf32>
    %141 = tpu.matmul %139, %140, %cst_87 {dimension_numbers = #tpu.dot_dimension_numbers<[1], [0], [0], [1], [0, 0, 1, 1], [], []>} : vector<1x128xf32>, vector<128x128xf32>, vector<1x128xf32> -> vector<1x128xf32>
    %c0_88 = arith.constant 0 : index
    %c0_89 = arith.constant 0 : index
    %142 = vector.load %arg8[%c0_88, %c0_89] : memref<1x128xf32, #tpu.memory_space<vmem>>, vector<1x128xf32>
    %143 = arith.addf %141, %142 : vector<1x128xf32>
    %c3 = arith.constant 3 : index
    %c0_90 = arith.constant 0 : index
    %144 = vector.load %arg9[%c3, %c0_90] : memref<8x128xf32, #tpu.memory_space<vmem>>, vector<1x128xf32>
    tpu.vector_store %arg9[%c3, %c0_90], %143 {strides = array<i32>} : memref<8x128xf32, #tpu.memory_space<vmem>>, vector<1x128xf32>,
    %c0_91 = arith.constant 0 : index
    %c128_92 = arith.constant 128 : index
    %145 = vector.load %arg11[%c0_91, %c128_92] : memref<1x256xf32, #tpu.memory_space<vmem>>, vector<1x128xf32>
    tpu.vector_store %arg11[%c0_91, %c128_92], %139 {strides = array<i32>} : memref<1x256xf32, #tpu.memory_space<vmem>>, vector<1x128xf32>,
    %c0_93 = arith.constant 0 : index
    %c0_94 = arith.constant 0 : index
    %146 = vector.load %arg12[%c0_93, %c0_94] : memref<1x128xf32, #tpu.memory_space<vmem>>, vector<1x128xf32>
    tpu.vector_store %arg12[%c0_93, %c0_94], %137 {strides = array<i32>} : memref<1x128xf32, #tpu.memory_space<vmem>>, vector<1x128xf32>,
    %c8_i32_95 = arith.constant 8 : i32
    %147 = arith.muli %arg0, %c8_i32_95 : i32
    %c4_i32 = arith.constant 4 : i32
    %148 = arith.addi %147, %c4_i32 : i32
    %149 = arith.index_cast %148 : i32 to index
    %150 = memref.load %arg1[%149] : memref<16xi32, #tpu.memory_space<smem>>
    %151 = arith.index_cast %150 : i32 to index
    %c0_96 = arith.constant 0 : index
    %152 = vector.load %arg2[%151, %c0_96] : memref<100x128xf32, #tpu.memory_space<vmem>>, vector<1x128xf32>
    %c0_97 = arith.constant 0 : index
    %c0_98 = arith.constant 0 : index
    %153 = vector.load %arg11[%c0_97, %c0_98] : memref<1x256xf32, #tpu.memory_space<vmem>>, vector<1x128xf32>
    tpu.vector_store %arg11[%c0_97, %c0_98], %152 {strides = array<i32>} : memref<1x256xf32, #tpu.memory_space<vmem>>, vector<1x128xf32>,
    %c0_99 = arith.constant 0 : index
    %c0_100 = arith.constant 0 : index
    %154 = vector.load %arg11[%c0_99, %c0_100] : memref<1x256xf32, #tpu.memory_space<vmem>>, vector<1x256xf32>
    %c0_101 = arith.constant 0 : index
    %c0_102 = arith.constant 0 : index
    %155 = vector.load %arg3[%c0_101, %c0_102] : memref<256x512xf32, #tpu.memory_space<vmem>>, vector<256x512xf32>
    %cst_103 = arith.constant dense<0.000000e+00> : vector<1x512xf32>
    %156 = tpu.matmul %154, %155, %cst_103 {dimension_numbers = #tpu.dot_dimension_numbers<[1], [0], [0], [1], [0, 0, 1, 1], [], []>} : vector<1x256xf32>, vector<256x512xf32>, vector<1x512xf32> -> vector<1x512xf32>
    %c0_104 = arith.constant 0 : index
    %c0_105 = arith.constant 0 : index
    %157 = vector.load %arg4[%c0_104, %c0_105] : memref<1x512xf32, #tpu.memory_space<vmem>>, vector<1x512xf32>
    %158 = arith.addf %156, %157 : vector<1x512xf32>
    %159 = vector.extract_strided_slice %158 {offsets = [0, 0], sizes = [1, 384], strides = [1, 1]} : vector<1x512xf32> to vector<1x384xf32>
    %160 = arith.negf %159 : vector<1x384xf32>
    %161 = math.exp %160 : vector<1x384xf32>
    %cst_106 = arith.constant 1.000000e+00 : f32
    %162 = vector.broadcast %cst_106 : f32 to vector<1x384xf32>
    %163 = arith.addf %162, %161 : vector<1x384xf32>
    %164 = arith.divf %162, %163 : vector<1x384xf32>
    %165 = vector.extract_strided_slice %164 {offsets = [0, 0], sizes = [1, 128], strides = [1, 1]} : vector<1x384xf32> to vector<1x128xf32>
    %166 = vector.extract_strided_slice %164 {offsets = [0, 128], sizes = [1, 128], strides = [1, 1]} : vector<1x384xf32> to vector<1x128xf32>
    %167 = vector.extract_strided_slice %164 {offsets = [0, 256], sizes = [1, 128], strides = [1, 1]} : vector<1x384xf32> to vector<1x128xf32>
    %168 = vector.extract_strided_slice %158 {offsets = [0, 384], sizes = [1, 128], strides = [1, 1]} : vector<1x512xf32> to vector<1x128xf32>
    %169 = math.tanh %168 : vector<1x128xf32>
    %c0_107 = arith.constant 0 : index
    %c0_108 = arith.constant 0 : index
    %170 = vector.load %arg12[%c0_107, %c0_108] : memref<1x128xf32, #tpu.memory_space<vmem>>, vector<1x128xf32>
    %171 = arith.mulf %166, %170 : vector<1x128xf32>
    %172 = arith.mulf %165, %169 : vector<1x128xf32>
    %173 = arith.addf %171, %172 : vector<1x128xf32>
    %174 = math.tanh %173 : vector<1x128xf32>
    %175 = arith.mulf %167, %174 : vector<1x128xf32>
    %c0_109 = arith.constant 0 : index
    %c0_110 = arith.constant 0 : index
    %176 = vector.load %arg7[%c0_109, %c0_110] : memref<128x128xf32, #tpu.memory_space<vmem>>, vector<128x128xf32>
    %cst_111 = arith.constant dense<0.000000e+00> : vector<1x128xf32>
    %177 = tpu.matmul %175, %176, %cst_111 {dimension_numbers = #tpu.dot_dimension_numbers<[1], [0], [0], [1], [0, 0, 1, 1], [], []>} : vector<1x128xf32>, vector<128x128xf32>, vector<1x128xf32> -> vector<1x128xf32>
    %c0_112 = arith.constant 0 : index
    %c0_113 = arith.constant 0 : index
    %178 = vector.load %arg8[%c0_112, %c0_113] : memref<1x128xf32, #tpu.memory_space<vmem>>, vector<1x128xf32>
    %179 = arith.addf %177, %178 : vector<1x128xf32>
    %c4 = arith.constant 4 : index
    %c0_114 = arith.constant 0 : index
    %180 = vector.load %arg9[%c4, %c0_114] : memref<8x128xf32, #tpu.memory_space<vmem>>, vector<1x128xf32>
    tpu.vector_store %arg9[%c4, %c0_114], %179 {strides = array<i32>} : memref<8x128xf32, #tpu.memory_space<vmem>>, vector<1x128xf32>,
    %c0_115 = arith.constant 0 : index
    %c128_116 = arith.constant 128 : index
    %181 = vector.load %arg11[%c0_115, %c128_116] : memref<1x256xf32, #tpu.memory_space<vmem>>, vector<1x128xf32>
    tpu.vector_store %arg11[%c0_115, %c128_116], %175 {strides = array<i32>} : memref<1x256xf32, #tpu.memory_space<vmem>>, vector<1x128xf32>,
    %c0_117 = arith.constant 0 : index
    %c0_118 = arith.constant 0 : index
    %182 = vector.load %arg12[%c0_117, %c0_118] : memref<1x128xf32, #tpu.memory_space<vmem>>, vector<1x128xf32>
    tpu.vector_store %arg12[%c0_117, %c0_118], %173 {strides = array<i32>} : memref<1x128xf32, #tpu.memory_space<vmem>>, vector<1x128xf32>,
    %c8_i32_119 = arith.constant 8 : i32
    %183 = arith.muli %arg0, %c8_i32_119 : i32
    %c5_i32 = arith.constant 5 : i32
    %184 = arith.addi %183, %c5_i32 : i32
    %185 = arith.index_cast %184 : i32 to index
    %186 = memref.load %arg1[%185] : memref<16xi32, #tpu.memory_space<smem>>
    %187 = arith.index_cast %186 : i32 to index
    %c0_120 = arith.constant 0 : index
    %188 = vector.load %arg2[%187, %c0_120] : memref<100x128xf32, #tpu.memory_space<vmem>>, vector<1x128xf32>
    %c0_121 = arith.constant 0 : index
    %c0_122 = arith.constant 0 : index
    %189 = vector.load %arg11[%c0_121, %c0_122] : memref<1x256xf32, #tpu.memory_space<vmem>>, vector<1x128xf32>
    tpu.vector_store %arg11[%c0_121, %c0_122], %188 {strides = array<i32>} : memref<1x256xf32, #tpu.memory_space<vmem>>, vector<1x128xf32>,
    %c0_123 = arith.constant 0 : index
    %c0_124 = arith.constant 0 : index
    %190 = vector.load %arg11[%c0_123, %c0_124] : memref<1x256xf32, #tpu.memory_space<vmem>>, vector<1x256xf32>
    %c0_125 = arith.constant 0 : index
    %c0_126 = arith.constant 0 : index
    %191 = vector.load %arg3[%c0_125, %c0_126] : memref<256x512xf32, #tpu.memory_space<vmem>>, vector<256x512xf32>
    %cst_127 = arith.constant dense<0.000000e+00> : vector<1x512xf32>
    %192 = tpu.matmul %190, %191, %cst_127 {dimension_numbers = #tpu.dot_dimension_numbers<[1], [0], [0], [1], [0, 0, 1, 1], [], []>} : vector<1x256xf32>, vector<256x512xf32>, vector<1x512xf32> -> vector<1x512xf32>
    %c0_128 = arith.constant 0 : index
    %c0_129 = arith.constant 0 : index
    %193 = vector.load %arg4[%c0_128, %c0_129] : memref<1x512xf32, #tpu.memory_space<vmem>>, vector<1x512xf32>
    %194 = arith.addf %192, %193 : vector<1x512xf32>
    %195 = vector.extract_strided_slice %194 {offsets = [0, 0], sizes = [1, 384], strides = [1, 1]} : vector<1x512xf32> to vector<1x384xf32>
    %196 = arith.negf %195 : vector<1x384xf32>
    %197 = math.exp %196 : vector<1x384xf32>
    %cst_130 = arith.constant 1.000000e+00 : f32
    %198 = vector.broadcast %cst_130 : f32 to vector<1x384xf32>
    %199 = arith.addf %198, %197 : vector<1x384xf32>
    %200 = arith.divf %198, %199 : vector<1x384xf32>
    %201 = vector.extract_strided_slice %200 {offsets = [0, 0], sizes = [1, 128], strides = [1, 1]} : vector<1x384xf32> to vector<1x128xf32>
    %202 = vector.extract_strided_slice %200 {offsets = [0, 128], sizes = [1, 128], strides = [1, 1]} : vector<1x384xf32> to vector<1x128xf32>
    %203 = vector.extract_strided_slice %200 {offsets = [0, 256], sizes = [1, 128], strides = [1, 1]} : vector<1x384xf32> to vector<1x128xf32>
    %204 = vector.extract_strided_slice %194 {offsets = [0, 384], sizes = [1, 128], strides = [1, 1]} : vector<1x512xf32> to vector<1x128xf32>
    %205 = math.tanh %204 : vector<1x128xf32>
    %c0_131 = arith.constant 0 : index
    %c0_132 = arith.constant 0 : index
    %206 = vector.load %arg12[%c0_131, %c0_132] : memref<1x128xf32, #tpu.memory_space<vmem>>, vector<1x128xf32>
    %207 = arith.mulf %202, %206 : vector<1x128xf32>
    %208 = arith.mulf %201, %205 : vector<1x128xf32>
    %209 = arith.addf %207, %208 : vector<1x128xf32>
    %210 = math.tanh %209 : vector<1x128xf32>
    %211 = arith.mulf %203, %210 : vector<1x128xf32>
    %c0_133 = arith.constant 0 : index
    %c0_134 = arith.constant 0 : index
    %212 = vector.load %arg7[%c0_133, %c0_134] : memref<128x128xf32, #tpu.memory_space<vmem>>, vector<128x128xf32>
    %cst_135 = arith.constant dense<0.000000e+00> : vector<1x128xf32>
    %213 = tpu.matmul %211, %212, %cst_135 {dimension_numbers = #tpu.dot_dimension_numbers<[1], [0], [0], [1], [0, 0, 1, 1], [], []>} : vector<1x128xf32>, vector<128x128xf32>, vector<1x128xf32> -> vector<1x128xf32>
    %c0_136 = arith.constant 0 : index
    %c0_137 = arith.constant 0 : index
    %214 = vector.load %arg8[%c0_136, %c0_137] : memref<1x128xf32, #tpu.memory_space<vmem>>, vector<1x128xf32>
    %215 = arith.addf %213, %214 : vector<1x128xf32>
    %c5 = arith.constant 5 : index
    %c0_138 = arith.constant 0 : index
    %216 = vector.load %arg9[%c5, %c0_138] : memref<8x128xf32, #tpu.memory_space<vmem>>, vector<1x128xf32>
    tpu.vector_store %arg9[%c5, %c0_138], %215 {strides = array<i32>} : memref<8x128xf32, #tpu.memory_space<vmem>>, vector<1x128xf32>,
    %c0_139 = arith.constant 0 : index
    %c128_140 = arith.constant 128 : index
    %217 = vector.load %arg11[%c0_139, %c128_140] : memref<1x256xf32, #tpu.memory_space<vmem>>, vector<1x128xf32>
    tpu.vector_store %arg11[%c0_139, %c128_140], %211 {strides = array<i32>} : memref<1x256xf32, #tpu.memory_space<vmem>>, vector<1x128xf32>,
    %c0_141 = arith.constant 0 : index
    %c0_142 = arith.constant 0 : index
    %218 = vector.load %arg12[%c0_141, %c0_142] : memref<1x128xf32, #tpu.memory_space<vmem>>, vector<1x128xf32>
    tpu.vector_store %arg12[%c0_141, %c0_142], %209 {strides = array<i32>} : memref<1x128xf32, #tpu.memory_space<vmem>>, vector<1x128xf32>,
    %c8_i32_143 = arith.constant 8 : i32
    %219 = arith.muli %arg0, %c8_i32_143 : i32
    %c6_i32 = arith.constant 6 : i32
    %220 = arith.addi %219, %c6_i32 : i32
    %221 = arith.index_cast %220 : i32 to index
    %222 = memref.load %arg1[%221] : memref<16xi32, #tpu.memory_space<smem>>
    %223 = arith.index_cast %222 : i32 to index
    %c0_144 = arith.constant 0 : index
    %224 = vector.load %arg2[%223, %c0_144] : memref<100x128xf32, #tpu.memory_space<vmem>>, vector<1x128xf32>
    %c0_145 = arith.constant 0 : index
    %c0_146 = arith.constant 0 : index
    %225 = vector.load %arg11[%c0_145, %c0_146] : memref<1x256xf32, #tpu.memory_space<vmem>>, vector<1x128xf32>
    tpu.vector_store %arg11[%c0_145, %c0_146], %224 {strides = array<i32>} : memref<1x256xf32, #tpu.memory_space<vmem>>, vector<1x128xf32>,
    %c0_147 = arith.constant 0 : index
    %c0_148 = arith.constant 0 : index
    %226 = vector.load %arg11[%c0_147, %c0_148] : memref<1x256xf32, #tpu.memory_space<vmem>>, vector<1x256xf32>
    %c0_149 = arith.constant 0 : index
    %c0_150 = arith.constant 0 : index
    %227 = vector.load %arg3[%c0_149, %c0_150] : memref<256x512xf32, #tpu.memory_space<vmem>>, vector<256x512xf32>
    %cst_151 = arith.constant dense<0.000000e+00> : vector<1x512xf32>
    %228 = tpu.matmul %226, %227, %cst_151 {dimension_numbers = #tpu.dot_dimension_numbers<[1], [0], [0], [1], [0, 0, 1, 1], [], []>} : vector<1x256xf32>, vector<256x512xf32>, vector<1x512xf32> -> vector<1x512xf32>
    %c0_152 = arith.constant 0 : index
    %c0_153 = arith.constant 0 : index
    %229 = vector.load %arg4[%c0_152, %c0_153] : memref<1x512xf32, #tpu.memory_space<vmem>>, vector<1x512xf32>
    %230 = arith.addf %228, %229 : vector<1x512xf32>
    %231 = vector.extract_strided_slice %230 {offsets = [0, 0], sizes = [1, 384], strides = [1, 1]} : vector<1x512xf32> to vector<1x384xf32>
    %232 = arith.negf %231 : vector<1x384xf32>
    %233 = math.exp %232 : vector<1x384xf32>
    %cst_154 = arith.constant 1.000000e+00 : f32
    %234 = vector.broadcast %cst_154 : f32 to vector<1x384xf32>
    %235 = arith.addf %234, %233 : vector<1x384xf32>
    %236 = arith.divf %234, %235 : vector<1x384xf32>
    %237 = vector.extract_strided_slice %236 {offsets = [0, 0], sizes = [1, 128], strides = [1, 1]} : vector<1x384xf32> to vector<1x128xf32>
    %238 = vector.extract_strided_slice %236 {offsets = [0, 128], sizes = [1, 128], strides = [1, 1]} : vector<1x384xf32> to vector<1x128xf32>
    %239 = vector.extract_strided_slice %236 {offsets = [0, 256], sizes = [1, 128], strides = [1, 1]} : vector<1x384xf32> to vector<1x128xf32>
    %240 = vector.extract_strided_slice %230 {offsets = [0, 384], sizes = [1, 128], strides = [1, 1]} : vector<1x512xf32> to vector<1x128xf32>
    %241 = math.tanh %240 : vector<1x128xf32>
    %c0_155 = arith.constant 0 : index
    %c0_156 = arith.constant 0 : index
    %242 = vector.load %arg12[%c0_155, %c0_156] : memref<1x128xf32, #tpu.memory_space<vmem>>, vector<1x128xf32>
    %243 = arith.mulf %238, %242 : vector<1x128xf32>
    %244 = arith.mulf %237, %241 : vector<1x128xf32>
    %245 = arith.addf %243, %244 : vector<1x128xf32>
    %246 = math.tanh %245 : vector<1x128xf32>
    %247 = arith.mulf %239, %246 : vector<1x128xf32>
    %c0_157 = arith.constant 0 : index
    %c0_158 = arith.constant 0 : index
    %248 = vector.load %arg7[%c0_157, %c0_158] : memref<128x128xf32, #tpu.memory_space<vmem>>, vector<128x128xf32>
    %cst_159 = arith.constant dense<0.000000e+00> : vector<1x128xf32>
    %249 = tpu.matmul %247, %248, %cst_159 {dimension_numbers = #tpu.dot_dimension_numbers<[1], [0], [0], [1], [0, 0, 1, 1], [], []>} : vector<1x128xf32>, vector<128x128xf32>, vector<1x128xf32> -> vector<1x128xf32>
    %c0_160 = arith.constant 0 : index
    %c0_161 = arith.constant 0 : index
    %250 = vector.load %arg8[%c0_160, %c0_161] : memref<1x128xf32, #tpu.memory_space<vmem>>, vector<1x128xf32>
    %251 = arith.addf %249, %250 : vector<1x128xf32>
    %c6 = arith.constant 6 : index
    %c0_162 = arith.constant 0 : index
    %252 = vector.load %arg9[%c6, %c0_162] : memref<8x128xf32, #tpu.memory_space<vmem>>, vector<1x128xf32>
    tpu.vector_store %arg9[%c6, %c0_162], %251 {strides = array<i32>} : memref<8x128xf32, #tpu.memory_space<vmem>>, vector<1x128xf32>,
    %c0_163 = arith.constant 0 : index
    %c128_164 = arith.constant 128 : index
    %253 = vector.load %arg11[%c0_163, %c128_164] : memref<1x256xf32, #tpu.memory_space<vmem>>, vector<1x128xf32>
    tpu.vector_store %arg11[%c0_163, %c128_164], %247 {strides = array<i32>} : memref<1x256xf32, #tpu.memory_space<vmem>>, vector<1x128xf32>,
    %c0_165 = arith.constant 0 : index
    %c0_166 = arith.constant 0 : index
    %254 = vector.load %arg12[%c0_165, %c0_166] : memref<1x128xf32, #tpu.memory_space<vmem>>, vector<1x128xf32>
    tpu.vector_store %arg12[%c0_165, %c0_166], %245 {strides = array<i32>} : memref<1x128xf32, #tpu.memory_space<vmem>>, vector<1x128xf32>,
    %c8_i32_167 = arith.constant 8 : i32
    %255 = arith.muli %arg0, %c8_i32_167 : i32
    %c7_i32 = arith.constant 7 : i32
    %256 = arith.addi %255, %c7_i32 : i32
    %257 = arith.index_cast %256 : i32 to index
    %258 = memref.load %arg1[%257] : memref<16xi32, #tpu.memory_space<smem>>
    %259 = arith.index_cast %258 : i32 to index
    %c0_168 = arith.constant 0 : index
    %260 = vector.load %arg2[%259, %c0_168] : memref<100x128xf32, #tpu.memory_space<vmem>>, vector<1x128xf32>
    %c0_169 = arith.constant 0 : index
    %c0_170 = arith.constant 0 : index
    %261 = vector.load %arg11[%c0_169, %c0_170] : memref<1x256xf32, #tpu.memory_space<vmem>>, vector<1x128xf32>
    tpu.vector_store %arg11[%c0_169, %c0_170], %260 {strides = array<i32>} : memref<1x256xf32, #tpu.memory_space<vmem>>, vector<1x128xf32>,
    %c0_171 = arith.constant 0 : index
    %c0_172 = arith.constant 0 : index
    %262 = vector.load %arg11[%c0_171, %c0_172] : memref<1x256xf32, #tpu.memory_space<vmem>>, vector<1x256xf32>
    %c0_173 = arith.constant 0 : index
    %c0_174 = arith.constant 0 : index
    %263 = vector.load %arg3[%c0_173, %c0_174] : memref<256x512xf32, #tpu.memory_space<vmem>>, vector<256x512xf32>
    %cst_175 = arith.constant dense<0.000000e+00> : vector<1x512xf32>
    %264 = tpu.matmul %262, %263, %cst_175 {dimension_numbers = #tpu.dot_dimension_numbers<[1], [0], [0], [1], [0, 0, 1, 1], [], []>} : vector<1x256xf32>, vector<256x512xf32>, vector<1x512xf32> -> vector<1x512xf32>
    %c0_176 = arith.constant 0 : index
    %c0_177 = arith.constant 0 : index
    %265 = vector.load %arg4[%c0_176, %c0_177] : memref<1x512xf32, #tpu.memory_space<vmem>>, vector<1x512xf32>
    %266 = arith.addf %264, %265 : vector<1x512xf32>
    %267 = vector.extract_strided_slice %266 {offsets = [0, 0], sizes = [1, 384], strides = [1, 1]} : vector<1x512xf32> to vector<1x384xf32>
    %268 = arith.negf %267 : vector<1x384xf32>
    %269 = math.exp %268 : vector<1x384xf32>
    %cst_178 = arith.constant 1.000000e+00 : f32
    %270 = vector.broadcast %cst_178 : f32 to vector<1x384xf32>
    %271 = arith.addf %270, %269 : vector<1x384xf32>
    %272 = arith.divf %270, %271 : vector<1x384xf32>
    %273 = vector.extract_strided_slice %272 {offsets = [0, 0], sizes = [1, 128], strides = [1, 1]} : vector<1x384xf32> to vector<1x128xf32>
    %274 = vector.extract_strided_slice %272 {offsets = [0, 128], sizes = [1, 128], strides = [1, 1]} : vector<1x384xf32> to vector<1x128xf32>
    %275 = vector.extract_strided_slice %272 {offsets = [0, 256], sizes = [1, 128], strides = [1, 1]} : vector<1x384xf32> to vector<1x128xf32>
    %276 = vector.extract_strided_slice %266 {offsets = [0, 384], sizes = [1, 128], strides = [1, 1]} : vector<1x512xf32> to vector<1x128xf32>
    %277 = math.tanh %276 : vector<1x128xf32>
    %c0_179 = arith.constant 0 : index
    %c0_180 = arith.constant 0 : index
    %278 = vector.load %arg12[%c0_179, %c0_180] : memref<1x128xf32, #tpu.memory_space<vmem>>, vector<1x128xf32>
    %279 = arith.mulf %274, %278 : vector<1x128xf32>
    %280 = arith.mulf %273, %277 : vector<1x128xf32>
    %281 = arith.addf %279, %280 : vector<1x128xf32>
    %282 = math.tanh %281 : vector<1x128xf32>
    %283 = arith.mulf %275, %282 : vector<1x128xf32>
    %c0_181 = arith.constant 0 : index
    %c0_182 = arith.constant 0 : index
    %284 = vector.load %arg7[%c0_181, %c0_182] : memref<128x128xf32, #tpu.memory_space<vmem>>, vector<128x128xf32>
    %cst_183 = arith.constant dense<0.000000e+00> : vector<1x128xf32>
    %285 = tpu.matmul %283, %284, %cst_183 {dimension_numbers = #tpu.dot_dimension_numbers<[1], [0], [0], [1], [0, 0, 1, 1], [], []>} : vector<1x128xf32>, vector<128x128xf32>, vector<1x128xf32> -> vector<1x128xf32>
    %c0_184 = arith.constant 0 : index
    %c0_185 = arith.constant 0 : index
    %286 = vector.load %arg8[%c0_184, %c0_185] : memref<1x128xf32, #tpu.memory_space<vmem>>, vector<1x128xf32>
    %287 = arith.addf %285, %286 : vector<1x128xf32>
    %c7 = arith.constant 7 : index
    %c0_186 = arith.constant 0 : index
    %288 = vector.load %arg9[%c7, %c0_186] : memref<8x128xf32, #tpu.memory_space<vmem>>, vector<1x128xf32>
    tpu.vector_store %arg9[%c7, %c0_186], %287 {strides = array<i32>} : memref<8x128xf32, #tpu.memory_space<vmem>>, vector<1x128xf32>,
    %c0_187 = arith.constant 0 : index
    %c128_188 = arith.constant 128 : index
    %289 = vector.load %arg11[%c0_187, %c128_188] : memref<1x256xf32, #tpu.memory_space<vmem>>, vector<1x128xf32>
    tpu.vector_store %arg11[%c0_187, %c128_188], %283 {strides = array<i32>} : memref<1x256xf32, #tpu.memory_space<vmem>>, vector<1x128xf32>,
    %c0_189 = arith.constant 0 : index
    %c0_190 = arith.constant 0 : index
    %290 = vector.load %arg12[%c0_189, %c0_190] : memref<1x128xf32, #tpu.memory_space<vmem>>, vector<1x128xf32>
    tpu.vector_store %arg12[%c0_189, %c0_190], %281 {strides = array<i32>} : memref<1x128xf32, #tpu.memory_space<vmem>>, vector<1x128xf32>,
    %c1_i32_191 = arith.constant 1 : i32
    %291 = arith.cmpi eq, %arg0, %c1_i32_191 : i32
    %292 = arith.extui %291 : i1 to i32
    %c0_i32_192 = arith.constant 0 : i32
    %293 = arith.cmpi ne, %292, %c0_i32_192 : i32
    scf.if %293 {
      %c0_193 = arith.constant 0 : index
      %c128_194 = arith.constant 128 : index
      %294 = vector.load %arg11[%c0_193, %c128_194] : memref<1x256xf32, #tpu.memory_space<vmem>>, vector<1x128xf32>
      %c0_195 = arith.constant 0 : index
      %c0_196 = arith.constant 0 : index
      %295 = vector.load %arg10[%c0_195, %c0_196] : memref<1x256xf32, #tpu.memory_space<vmem>>, vector<1x128xf32>
      tpu.vector_store %arg10[%c0_195, %c0_196], %294 {strides = array<i32>} : memref<1x256xf32, #tpu.memory_space<vmem>>, vector<1x128xf32>,
      %c0_197 = arith.constant 0 : index
      %c0_198 = arith.constant 0 : index
      %296 = vector.load %arg12[%c0_197, %c0_198] : memref<1x128xf32, #tpu.memory_space<vmem>>, vector<1x128xf32>
      %c0_199 = arith.constant 0 : index
      %c128_200 = arith.constant 128 : index
      %297 = vector.load %arg10[%c0_199, %c128_200] : memref<1x256xf32, #tpu.memory_space<vmem>>, vector<1x128xf32>
      tpu.vector_store %arg10[%c0_199, %c128_200], %296 {strides = array<i32>} : memref<1x256xf32, #tpu.memory_space<vmem>>, vector<1x128xf32>,
    } else {
    }
    return
  }
  func.func @transform_0(%arg0: i32, %arg1: memref<16xi32, #tpu.memory_space<smem>>) -> (i32, i32) {
    %c0_i32 = arith.constant 0 : i32
    %c0_i32_0 = arith.constant 0 : i32
    %c0_i32_1 = arith.constant 0 : i32
    return %c0_i32, %c0_i32_0 : i32, i32
  }
  func.func @transform_1(%arg0: i32, %arg1: memref<16xi32, #tpu.memory_space<smem>>) -> (i32, i32) {
    %c0_i32 = arith.constant 0 : i32
    %c0_i32_0 = arith.constant 0 : i32
    %c0_i32_1 = arith.constant 0 : i32
    return %c0_i32, %c0_i32_0 : i32, i32
  }
  func.func @transform_2(%arg0: i32, %arg1: memref<16xi32, #tpu.memory_space<smem>>) -> (i32, i32) {
    %c0_i32 = arith.constant 0 : i32
    %c0_i32_0 = arith.constant 0 : i32
    %c0_i32_1 = arith.constant 0 : i32
    return %c0_i32, %c0_i32_0 : i32, i32
  }
  func.func @transform_3(%arg0: i32, %arg1: memref<16xi32, #tpu.memory_space<smem>>) -> (i32, i32) {
    %c0_i32 = arith.constant 0 : i32
    %c0_i32_0 = arith.constant 0 : i32
    %c0_i32_1 = arith.constant 0 : i32
    return %c0_i32, %c0_i32_0 : i32, i32
  }
  func.func @transform_4(%arg0: i32, %arg1: memref<16xi32, #tpu.memory_space<smem>>) -> (i32, i32) {
    %c0_i32 = arith.constant 0 : i32
    %c0_i32_0 = arith.constant 0 : i32
    %c0_i32_1 = arith.constant 0 : i32
    return %c0_i32, %c0_i32_0 : i32, i32
  }
  func.func @transform_5(%arg0: i32, %arg1: memref<16xi32, #tpu.memory_space<smem>>) -> (i32, i32) {
    %c0_i32 = arith.constant 0 : i32
    %c0_i32_0 = arith.constant 0 : i32
    %c0_i32_1 = arith.constant 0 : i32
    return %c0_i32, %c0_i32_0 : i32, i32
  }
  func.func @transform_6(%arg0: i32, %arg1: memref<16xi32, #tpu.memory_space<smem>>) -> (i32, i32) {
    %c0_i32 = arith.constant 0 : i32
    %c0_i32_0 = arith.constant 0 : i32
    %c0_i32_1 = arith.constant 0 : i32
    return %c0_i32, %c0_i32_0 : i32, i32
  }
  func.func @transform_7(%arg0: i32, %arg1: memref<16xi32, #tpu.memory_space<smem>>) -> (i32, i32) {
    %c0_i32 = arith.constant 0 : i32
    %c0_i32_0 = arith.constant 0 : i32
    return %arg0, %c0_i32 : i32, i32
  }
  func.func @transform_8(%arg0: i32, %arg1: memref<16xi32, #tpu.memory_space<smem>>) -> (i32, i32) {
    %c0_i32 = arith.constant 0 : i32
    %c0_i32_0 = arith.constant 0 : i32
    %c0_i32_1 = arith.constant 0 : i32
    return %c0_i32, %c0_i32_0 : i32, i32
  }
}

</mosaic_0001>

<llo_original>
// kernel: tpu_custom_call.1
$region0: #{tpu_custom_call.1}
  #allocation0 [shape = 'u32[]', space=smem, size = 0x4, offset = 0x4, fixed_abs, tag = 'smem constant byte address 0x4 - core index']
  #allocation1 [shape = 'u32[72,128]{1,0:T(1,128)}', space=vmem, size = 0x9000, scoped, tag = 'internal scratch']
  #allocation2 [shape = 'f32[1,256]{1,0:T(1,128)}', space=vmem, size = 0x400, scoped, tag = 'scratch operand']
  #allocation3 [shape = 'f32[1,128]{1,0:T(1,128)}', space=vmem, size = 0x200, scoped, tag = 'scratch operand']
  #allocation4 [shape = 's32[1]{0}', space=sflag, size = 0x4, scoped, tag = 'scoped memory for tpu_custom_call.1']
  #allocation5 [shape = 'u8[512]{0}', space=smem, size = 0x200, scoped, tag = 'prefetched SMEM operand 0']
  %s0 = inlined_call_operand.hbm [shape: s32[16], index: 0, kind: input, shape index: {}]
  %s1 = inlined_call_operand.hbm [shape: f32[100,128], index: 1, kind: input, shape index: {}]
  %s2 = inlined_call_operand.hbm [shape: f32[256,512], index: 2, kind: input, shape index: {}]
  %s3 = inlined_call_operand.hbm [shape: f32[1,512], index: 3, kind: input, shape index: {}]
  %s4 = inlined_call_operand.vmem [shape: f32[1,128], index: 4, kind: input, shape index: {}]
  %s5 = inlined_call_operand.vmem [shape: f32[1,128], index: 5, kind: input, shape index: {}]
  %s6 = inlined_call_operand.hbm [shape: f32[128,128], index: 6, kind: input, shape index: {}]
  %s7 = inlined_call_operand.vmem [shape: f32[1,128], index: 7, kind: input, shape index: {}]
  %s8 = inlined_call_operand.hbm [shape: f32[16,128], index: 8, kind: output, shape index: {0}]
  %s9 = inlined_call_operand.hbm [shape: f32[1,256], index: 9, kind: output, shape index: {1}]
  %10 = xla_tuple %s8, %s9
  %s11 = sld [smem:[#allocation0]]
  $region93: #{tpu_custom_call.1} parent=0
    _
  %s13 = ssub.s32 1, %s11
  %s14 = scalar_select 0, %s13, %s11
  %s16 = sshll.u32 %s0, 4
  %s17 = int_to_ptr.hbm [resolvable:$true] %s16
  %19 = dma.hbm_to_smem %s17, 16, [#allocation5], [#allocation4]
  %21 = dma.done [#allocation4], 16
  %22 = sfence
  $region1: #{tpu_custom_call.1} parent=0
    #allocation6 [shape = 'u8[53248]{0}', space=vmem, size = 0xd000, scoped, tag = 'input window, operand 1, single buffered']
    #allocation7 [shape = 's32[2]{0}', space=sflag, size = 0x8, scoped, tag = 'scoped memory for tpu_custom_call.1']
    #allocation8 [shape = 's32[2]{0}', space=sflag, size = 0x8, scoped, tag = 'scoped memory for tpu_custom_call.1']
    #allocation9 [shape = 'u8[524288]{0}', space=vmem, size = 0x80000, scoped, tag = 'input window, operand 2, single buffered']
    #allocation10 [shape = 's32[1]{0}', space=sflag, size = 0x4, scoped, tag = 'scoped memory for tpu_custom_call.1']
    #allocation11 [shape = 'u8[2048]{0}', space=vmem, size = 0x800, scoped, tag = 'input window, operand 3, single buffered']
    #allocation12 [shape = 'u8[65536]{0}', space=vmem, size = 0x10000, scoped, tag = 'input window, operand 6, single buffered']
    #allocation13 [shape = 's32[1]{0}', space=sflag, size = 0x4, scoped, tag = 'scoped memory for tpu_custom_call.1']
    #allocation14 [shape = 'u8[8192]{0}', space=vmem, size = 0x2000, scoped, tag = 'output window, operand 0']
    #allocation15 [shape = 'u8[1024]{0}', space=vmem, size = 0x400, scoped, tag = 'output window, operand 1, single buffered']
    #allocation16 [shape = 's32[1]{0}', space=sflag, size = 0x4, scoped, tag = 'scoped memory for tpu_custom_call.1']
    %23 = vsyncpa [#allocation7], 0
    %24 = vsyncpa [#allocation10], 0
    %25 = vsyncpa [#allocation13], 0
    %26 = vsyncpa [#allocation8], 0
    %s27 = scalar_lea.sflag [#allocation8], 1
    %28 = vsyncpa %s27, 0
    %29 = vsyncpa [#allocation16], 0
    loop: start=0, step=1, limit=4
    $region2: #{tpu_custom_call.1} parent=1 // loop_pre_header
      _
    $region3: #{tpu_custom_call.1} parent=1 // loop_header
      %s31 = sphi 0, %s35
      %p32 = scmp.ge.s32.totalorder %s31, 4
      %s39 = sphi 0, %s39
      %s41 = sphi 0, %s39
      %s42 = sphi 0, %s41
      %s56 = sphi 0, %s42
      %s60 = sphi 0, %s60
      %s62 = sphi 0, %s60
      %s63 = sphi 0, %s62
      %s77 = sphi 0, %s63
      %s81 = sphi 0, %s81
      %s83 = sphi 0, %s81
      %s84 = sphi 0, %s83
      %s98 = sphi 0, %s84
      %s102 = sphi 0, %s102
      %s104 = sphi 0, %s102
      %s105 = sphi 0, %s104
      %s119 = sphi 0, %s105
      %s123 = sphi 0, %s123
      %s125 = sphi 0, %s123
      %s126 = sphi 0, %s125
      %s140 = sphi 0, %s126
      %s144 = sphi 0, %s144
      %s146 = sphi 0, %s144
      %s147 = sphi 0, %s146
      %s161 = sphi 0, %s147
      %s165 = sphi 0, %s165
      %s167 = sphi 0, %s165
      %s168 = sphi 0, %s167
      %s182 = sphi 0, %s168
      %s188 = sphi 0, %s190
      %s191 = sphi 0, %s188
      %s192 = sphi 0, %s191
      %s208 = sphi 0, %s192
      %s212 = sphi 0, %s212
      %s214 = sphi 0, %s212
      %s215 = sphi 0, %s214
      %s229 = sphi 0, %s215
    $region4: #{tpu_custom_call.1} parent=1 // loop_header_branch
      %34 = sbr.rel (%p32) target = $region8
    $region5: #{tpu_custom_call.1} parent=1 // loop_body
      %s36 = ssub.s32 %s31, 1
      %s37 = ssub.s32 %s31, 2
      %s38 = sadd.s32 %s31, 1
      %s40 = sadd.s32 %s39, 1
      %p43 = scmp.eq.s32.totalorder %s31, 1
      %p44 = scmp.ne.s32.totalorder %s39, %s41
      %p45 = scmp.eq.s32.totalorder %s31, 0
      %p46 = por %p44, %p45
      %p47 = scmp.ne.s32.totalorder %s39, %s41
      %p48 = scmp.eq.s32.totalorder %s36, 1
      %p49 = por %p47, %p48
      %p50 = scmp.ne.s32.totalorder %s41, %s42
      %p51 = scmp.eq.s32.totalorder %s36, 0
      %p52 = por %p50, %p51
      %p53 = scmp.ne.s32.totalorder %s41, %s42
      %p54 = scmp.eq.s32.totalorder %s37, 1
      %p55 = por %p53, %p54
      %p57 = scmp.ne.s32.totalorder %s42, %s56
      %p58 = scmp.eq.s32.totalorder %s37, 0
      %p59 = por %p57, %p58
      %s61 = sadd.s32 %s60, 1
      %p64 = scmp.eq.s32.totalorder %s31, 1
      %p65 = scmp.ne.s32.totalorder %s60, %s62
      %p66 = scmp.eq.s32.totalorder %s31, 0
      %p67 = por %p65, %p66
      %p68 = scmp.ne.s32.totalorder %s60, %s62
      %p69 = scmp.eq.s32.totalorder %s36, 1
      %p70 = por %p68, %p69
      %p71 = scmp.ne.s32.totalorder %s62, %s63
      %p72 = scmp.eq.s32.totalorder %s36, 0
      %p73 = por %p71, %p72
      %p74 = scmp.ne.s32.totalorder %s62, %s63
      %p75 = scmp.eq.s32.totalorder %s37, 1
      %p76 = por %p74, %p75
      %p78 = scmp.ne.s32.totalorder %s63, %s77
      %p79 = scmp.eq.s32.totalorder %s37, 0
      %p80 = por %p78, %p79
      %s82 = sadd.s32 %s81, 1
      %p85 = scmp.eq.s32.totalorder %s31, 1
      %p86 = scmp.ne.s32.totalorder %s81, %s83
      %p87 = scmp.eq.s32.totalorder %s31, 0
      %p88 = por %p86, %p87
      %p89 = scmp.ne.s32.totalorder %s81, %s83
      %p90 = scmp.eq.s32.totalorder %s36, 1
      %p91 = por %p89, %p90
      %p92 = scmp.ne.s32.totalorder %s83, %s84
      %p93 = scmp.eq.s32.totalorder %s36, 0
      %p94 = por %p92, %p93
      %p95 = scmp.ne.s32.totalorder %s83, %s84
      %p96 = scmp.eq.s32.totalorder %s37, 1
      %p97 = por %p95, %p96
      %p99 = scmp.ne.s32.totalorder %s84, %s98
      %p100 = scmp.eq.s32.totalorder %s37, 0
      %p101 = por %p99, %p100
      %s103 = sadd.s32 %s102, 1
      %p106 = scmp.eq.s32.totalorder %s31, 1
      %p107 = scmp.ne.s32.totalorder %s102, %s104
      %p108 = scmp.eq.s32.totalorder %s31, 0
      %p109 = por %p107, %p108
      %p110 = scmp.ne.s32.totalorder %s102, %s104
      %p111 = scmp.eq.s32.totalorder %s36, 1
      %p112 = por %p110, %p111
      %p113 = scmp.ne.s32.totalorder %s104, %s105
      %p114 = scmp.eq.s32.totalorder %s36, 0
      %p115 = por %p113, %p114
      %p116 = scmp.ne.s32.totalorder %s104, %s105
      %p117 = scmp.eq.s32.totalorder %s37, 1
      %p118 = por %p116, %p117
      %p120 = scmp.ne.s32.totalorder %s105, %s119
      %p121 = scmp.eq.s32.totalorder %s37, 0
      %p122 = por %p120, %p121
      %s124 = sadd.s32 %s123, 1
      %p127 = scmp.eq.s32.totalorder %s31, 1
      %p128 = scmp.ne.s32.totalorder %s123, %s125
      %p129 = scmp.eq.s32.totalorder %s31, 0
      %p130 = por %p128, %p129
      %p131 = scmp.ne.s32.totalorder %s123, %s125
      %p132 = scmp.eq.s32.totalorder %s36, 1
      %p133 = por %p131, %p132
      %p134 = scmp.ne.s32.totalorder %s125, %s126
      %p135 = scmp.eq.s32.totalorder %s36, 0
      %p136 = por %p134, %p135
      %p137 = scmp.ne.s32.totalorder %s125, %s126
      %p138 = scmp.eq.s32.totalorder %s37, 1
      %p139 = por %p137, %p138
      %p141 = scmp.ne.s32.totalorder %s126, %s140
      %p142 = scmp.eq.s32.totalorder %s37, 0
      %p143 = por %p141, %p142
      %s145 = sadd.s32 %s144, 1
      %p148 = scmp.eq.s32.totalorder %s31, 1
      %p149 = scmp.ne.s32.totalorder %s144, %s146
      %p150 = scmp.eq.s32.totalorder %s31, 0
      %p151 = por %p149, %p150
      %p152 = scmp.ne.s32.totalorder %s144, %s146
      %p153 = scmp.eq.s32.totalorder %s36, 1
      %p154 = por %p152, %p153
      %p155 = scmp.ne.s32.totalorder %s146, %s147
      %p156 = scmp.eq.s32.totalorder %s36, 0
      %p157 = por %p155, %p156
      %p158 = scmp.ne.s32.totalorder %s146, %s147
      %p159 = scmp.eq.s32.totalorder %s37, 1
      %p160 = por %p158, %p159
      %p162 = scmp.ne.s32.totalorder %s147, %s161
      %p163 = scmp.eq.s32.totalorder %s37, 0
      %p164 = por %p162, %p163
      %s166 = sadd.s32 %s165, 1
      %p169 = scmp.eq.s32.totalorder %s31, 1
      %p170 = scmp.ne.s32.totalorder %s165, %s167
      %p171 = scmp.eq.s32.totalorder %s31, 0
      %p172 = por %p170, %p171
      %p173 = scmp.ne.s32.totalorder %s165, %s167
      %p174 = scmp.eq.s32.totalorder %s36, 1
      %p175 = por %p173, %p174
      %p176 = scmp.ne.s32.totalorder %s167, %s168
      %p177 = scmp.eq.s32.totalorder %s36, 0
      %p178 = por %p176, %p177
      %p179 = scmp.ne.s32.totalorder %s167, %s168
      %p180 = scmp.eq.s32.totalorder %s37, 1
      %p181 = por %p179, %p180
      %p183 = scmp.ne.s32.totalorder %s168, %s182
      %p184 = scmp.eq.s32.totalorder %s37, 0
      %p185 = por %p183, %p184
      %s186 = ssub.s32 %s31, %s38
      %p187 = scmp.eq.s32.totalorder %s186, 0
      %s189 = sadd.s32 %s188, 1
      %s190 = scalar_select %p187, %s188, %s189
      %p193 = pneg %p187
      %p194 = scmp.eq.s32.totalorder %s31, 1
      %p195 = por %p193, %p194
      %p196 = scmp.ne.s32.totalorder %s188, %s191
      %p197 = scmp.eq.s32.totalorder %s31, 0
      %p198 = por %p196, %p197
      %p199 = scmp.ne.s32.totalorder %s188, %s191
      %p200 = scmp.eq.s32.totalorder %s36, 1
      %p201 = por %p199, %p200
      %p202 = scmp.ne.s32.totalorder %s191, %s192
      %p203 = scmp.eq.s32.totalorder %s36, 0
      %p204 = por %p202, %p203
      %p205 = scmp.ne.s32.totalorder %s191, %s192
      %p206 = scmp.eq.s32.totalorder %s37, 1
      %p207 = por %p205, %p206
      %p209 = scmp.ne.s32.totalorder %s192, %s208
      %p210 = scmp.eq.s32.totalorder %s37, 0
      %p211 = por %p209, %p210
      %s213 = sadd.s32 %s212, 1
      %p216 = scmp.eq.s32.totalorder %s31, 1
      %p217 = scmp.ne.s32.totalorder %s212, %s214
      %p218 = scmp.eq.s32.totalorder %s31, 0
      %p219 = por %p217, %p218
      %p220 = scmp.ne.s32.totalorder %s212, %s214
      %p221 = scmp.eq.s32.totalorder %s36, 1
      %p222 = por %p220, %p221
      %p223 = scmp.ne.s32.totalorder %s214, %s215
      %p224 = scmp.eq.s32.totalorder %s36, 0
      %p225 = por %p223, %p224
      %p226 = scmp.ne.s32.totalorder %s214, %s215
      %p227 = scmp.eq.s32.totalorder %s37, 1
      %p228 = por %p226, %p227
      %p230 = scmp.ne.s32.totalorder %s215, %s229
      %p231 = scmp.eq.s32.totalorder %s37, 0
      %p232 = por %p230, %p231
      %p233 = scmp.le.s32.totalorder 1, %s31
      %p234 = scmp.lt.s32.totalorder %s31, 3
      %p235 = pnand %p233, %p234
      %p236 = pneg %p235
      // Predicated region
      $region9: #{tpu_custom_call.1} parent=5 // pred_check
        _
      $region10: #{tpu_custom_call.1} parent=5 // pred_check_branch
        %238 = sbr.rel (%p235) target = $region12
      $region11: #{tpu_custom_call.1} parent=5 // pred_region
        %s239 = ssub.s32 %s31, 1
        // Predicated region
        $region13: #{tpu_custom_call.1} parent=11 // pred_check
          %p240 = pneg %p52
        $region14: #{tpu_custom_call.1} parent=11 // pred_check_branch
          %242 = sbr.rel (%p240) target = $region16
        $region15: #{tpu_custom_call.1} parent=11 // pred_region
          %244 = vsyncadd [#allocation7], 0
          %s245 = sshll.u32 %s1, 4
          %s246 = int_to_ptr.hbm [resolvable:$true] %s245
          %s247 = sshll.u32 [#allocation6], 4
          %s248 = int_to_ptr.vmem [resolvable:$true] %s247
          %253 = dma.hbm_to_vmem [thread:$0]  %s246, 1664, %s248, [#allocation7], 128, 128, 8
        $region16: #{tpu_custom_call.1} parent=11 // pred_fallthru
          _
        // Predicated region
        $region17: #{tpu_custom_call.1} parent=11 // pred_check
          %p254 = pneg %p73
        $region18: #{tpu_custom_call.1} parent=11 // pred_check_branch
          %256 = sbr.rel (%p254) target = $region20
        $region19: #{tpu_custom_call.1} parent=11 // pred_region
          %258 = vsyncadd [#allocation10], 0
          %s259 = sshll.u32 %s2, 4
          %s260 = int_to_ptr.hbm [resolvable:$true] %s259
          %s261 = sshll.u32 [#allocation9], 4
          %s262 = int_to_ptr.vmem [resolvable:$true] %s261
          %267 = dma.hbm_to_vmem [thread:$0]  %s260, 16384, %s262, [#allocation10], 512, 512, 32
        $region20: #{tpu_custom_call.1} parent=11 // pred_fallthru
          _
        // Predicated region
        $region21: #{tpu_custom_call.1} parent=11 // pred_check
          %p268 = pneg %p94
        $region22: #{tpu_custom_call.1} parent=11 // pred_check_branch
          %270 = sbr.rel (%p268) target = $region24
        $region23: #{tpu_custom_call.1} parent=11 // pred_region
          %272 = vsyncadd [#allocation10], 0
          %s274 = sshll.u32 %s3, 4
          %s275 = int_to_ptr.hbm [resolvable:$true] %s274
          %s276 = sshll.u32 [#allocation11], 4
          %s277 = int_to_ptr.vmem [resolvable:$true] %s276
          %279 = dma.hbm_to_vmem [thread:$0]  %s275, 64, %s277, [#allocation10]
        $region24: #{tpu_custom_call.1} parent=11 // pred_fallthru
          _
        // Predicated region
        $region25: #{tpu_custom_call.1} parent=11 // pred_check
          %p280 = pneg %p115
        $region26: #{tpu_custom_call.1} parent=11 // pred_check_branch
          %282 = sbr.rel (%p280) target = $region28
        $region27: #{tpu_custom_call.1} parent=11 // pred_region
          _
        $region28: #{tpu_custom_call.1} parent=11 // pred_fallthru
          _
        // Predicated region
        $region29: #{tpu_custom_call.1} parent=11 // pred_check
          %p283 = pneg %p136
        $region30: #{tpu_custom_call.1} parent=11 // pred_check_branch
          %285 = sbr.rel (%p283) target = $region32
        $region31: #{tpu_custom_call.1} parent=11 // pred_region
          _
        $region32: #{tpu_custom_call.1} parent=11 // pred_fallthru
          _
        // Predicated region
        $region33: #{tpu_custom_call.1} parent=11 // pred_check
          %p286 = pneg %p157
        $region34: #{tpu_custom_call.1} parent=11 // pred_check_branch
          %288 = sbr.rel (%p286) target = $region36
        $region35: #{tpu_custom_call.1} parent=11 // pred_region
          %290 = vsyncadd [#allocation13], 0
          %s291 = sshll.u32 %s6, 4
          %s292 = int_to_ptr.hbm [resolvable:$true] %s291
          %s293 = sshll.u32 [#allocation12], 4
          %s294 = int_to_ptr.vmem [resolvable:$true] %s293
          %299 = dma.hbm_to_vmem [thread:$0]  %s292, 2048, %s294, [#allocation13], 128, 128, 8
        $region36: #{tpu_custom_call.1} parent=11 // pred_fallthru
          _
        // Predicated region
        $region37: #{tpu_custom_call.1} parent=11 // pred_check
          %p300 = pneg %p178
        $region38: #{tpu_custom_call.1} parent=11 // pred_check_branch
          %302 = sbr.rel (%p300) target = $region40
        $region39: #{tpu_custom_call.1} parent=11 // pred_region
          _
        $region40: #{tpu_custom_call.1} parent=11 // pred_fallthru
          _
      $region12: #{tpu_custom_call.1} parent=5 // pred_fallthru
        _
      %p303 = scmp.lt.s32.totalorder %s31, 2
      // Predicated region
      $region41: #{tpu_custom_call.1} parent=5 // pred_check
        %p304 = pneg %p303
      $region42: #{tpu_custom_call.1} parent=5 // pred_check_branch
        %306 = sbr.rel (%p304) target = $region44
      $region43: #{tpu_custom_call.1} parent=5 // pred_region
        _
      $region44: #{tpu_custom_call.1} parent=5 // pred_fallthru
        _
      %p307 = scmp.le.s32.totalorder 1, %s31
      %p308 = scmp.lt.s32.totalorder %s31, 3
      %p309 = pnand %p307, %p308
      %p310 = pneg %p309
      // Predicated region
      $region45: #{tpu_custom_call.1} parent=5 // pred_check
        _
      $region46: #{tpu_custom_call.1} parent=5 // pred_check_branch
        %312 = sbr.rel (%p309) target = $region48
      $region47: #{tpu_custom_call.1} parent=5 // pred_region
        %s313 = ssub.s32 %s31, 1
        // Predicated region
        $region49: #{tpu_custom_call.1} parent=47 // pred_check
          %p314 = pneg %p52
        $region50: #{tpu_custom_call.1} parent=47 // pred_check_branch
          %316 = sbr.rel (%p314) target = $region52
        $region51: #{tpu_custom_call.1} parent=47 // pred_region
          %318 = dma.done [#allocation7], 1664
        $region52: #{tpu_custom_call.1} parent=47 // pred_fallthru
          _
        // Predicated region
        $region53: #{tpu_custom_call.1} parent=47 // pred_check
          %p319 = pneg %p73
        $region54: #{tpu_custom_call.1} parent=47 // pred_check_branch
          %321 = sbr.rel (%p319) target = $region56
        $region55: #{tpu_custom_call.1} parent=47 // pred_region
          %323 = dma.done [#allocation10], 16384
        $region56: #{tpu_custom_call.1} parent=47 // pred_fallthru
          _
        // Predicated region
        $region57: #{tpu_custom_call.1} parent=47 // pred_check
          %p324 = pneg %p94
        $region58: #{tpu_custom_call.1} parent=47 // pred_check_branch
          %326 = sbr.rel (%p324) target = $region60
        $region59: #{tpu_custom_call.1} parent=47 // pred_region
          %328 = dma.done [#allocation10], 64
        $region60: #{tpu_custom_call.1} parent=47 // pred_fallthru
          _
        // Predicated region
        $region61: #{tpu_custom_call.1} parent=47 // pred_check
          %p329 = pneg %p157
        $region62: #{tpu_custom_call.1} parent=47 // pred_check_branch
          %331 = sbr.rel (%p329) target = $region64
        $region63: #{tpu_custom_call.1} parent=47 // pred_region
          %333 = dma.done [#allocation13], 2048
        $region64: #{tpu_custom_call.1} parent=47 // pred_fallthru
          _
        %p334 = pneg %p52
        %p335 = pneg %p49
        %p336 = pneg %p73
        %p337 = pneg %p70
        %p338 = pneg %p94
        %p339 = pneg %p91
        %p340 = pneg %p115
        %p341 = pneg %p112
        %p342 = pneg %p136
        %p343 = pneg %p133
        %p344 = pneg %p157
        %p345 = pneg %p154
        %p346 = pneg %p178
        %p347 = pneg %p175
        %p348 = pneg %p204
        %p349 = pneg %p201
        %s350 = sand.u32 %s191, 1
        %s351 = scalar_lea.sflag [#allocation8], %s350
        %s352 = sand.u32 %s191, 1
        %s353 = smul.addr %s352, 8
        %s354 = scalar_lea.vmem [#allocation14], %s353
        %p355 = pneg %p225
        %p356 = pneg %p222
        %p357 = scmp.eq.s32.totalorder %s36, 0
        // Predicated region
        $region65: #{tpu_custom_call.1} parent=47 // pred_check
          %p358 = pneg %p357
        $region66: #{tpu_custom_call.1} parent=47 // pred_check_branch
          %360 = sbr.rel (%p358) target = $region68
        $region67: #{tpu_custom_call.1} parent=47 // pred_region
          %v361 = vld [vmem:[%s4] sm:$0x1]
          %v362 = vlaneseq
          %vm363 = vcmp.ge.s32.totalorder %v362, 0
          %vm364 = vcmp.lt.s32.totalorder %v362, 128
          %vm365 = vmand %vm363, %vm364
          %366 = vst.msk [vmem:[#allocation2 + $0x1] sm:$0x1] %vm365, %v361
          %v367 = vld [vmem:[%s5] sm:$0x1]
          %368 = vst [vmem:[#allocation3] sm:$0x1] %v367
        $region68: #{tpu_custom_call.1} parent=47 // pred_fallthru
          _
        %s369 = smul.u32 %s36, 8
        %s370 = sld [smem:[#allocation5 + %s369]]
        %s371 = scalar_lea.vmem [#allocation6], %s370
        %v372 = vld [vmem:[%s371] sm:$0x1]
        %v373 = vlaneseq
        %vm374 = vcmp.ge.s32.totalorder %v373, 0
        %vm375 = vcmp.lt.s32.totalorder %v373, 128
        %vm376 = vmand %vm374, %vm375
        %377 = vst.msk [vmem:[#allocation2] sm:$0x1] %vm376, %v372
        %v378 = vld [vmem:[#allocation2] sm:$0x3]
        %v379 = vld [vmem:[#allocation9] sm:$0xff]
        %v380 = vld [vmem:[#allocation9 + $0x8] sm:$0xff]
        %v381 = vld [vmem:[#allocation9 + $0x10] sm:$0xff]
        %v382 = vld [vmem:[#allocation9 + $0x18] sm:$0xff]
        %v383 = vld [vmem:[#allocation9 + $0x20] sm:$0xff]
        %v384 = vld [vmem:[#allocation9 + $0x28] sm:$0xff]
        %v385 = vld [vmem:[#allocation9 + $0x30] sm:$0xff]
        %v386 = vld [vmem:[#allocation9 + $0x38] sm:$0xff]
        %v387 = vld [vmem:[#allocation9 + $0x40] sm:$0xff]
        %v388 = vld [vmem:[#allocation9 + $0x48] sm:$0xff]
        %v389 = vld [vmem:[#allocation9 + $0x50] sm:$0xff]
        %v390 = vld [vmem:[#allocation9 + $0x58] sm:$0xff]
        %v391 = vld [vmem:[#allocation9 + $0x60] sm:$0xff]
        %v392 = vld [vmem:[#allocation9 + $0x68] sm:$0xff]
        %v393 = vld [vmem:[#allocation9 + $0x70] sm:$0xff]
        %v394 = vld [vmem:[#allocation9 + $0x78] sm:$0xff]
        %v395 = vld [vmem:[#allocation9 + $0x80] sm:$0xff]
        %v396 = vld [vmem:[#allocation9 + $0x88] sm:$0xff]
        %v397 = vld [vmem:[#allocation9 + $0x90] sm:$0xff]
        %v398 = vld [vmem:[#allocation9 + $0x98] sm:$0xff]
        %v399 = vld [vmem:[#allocation9 + $0xa0] sm:$0xff]
        %v400 = vld [vmem:[#allocation9 + $0xa8] sm:$0xff]
        %v401 = vld [vmem:[#allocation9 + $0xb0] sm:$0xff]
        %v402 = vld [vmem:[#allocation9 + $0xb8] sm:$0xff]
        %v403 = vld [vmem:[#allocation9 + $0xc0] sm:$0xff]
        %v404 = vld [vmem:[#allocation9 + $0xc8] sm:$0xff]
        %v405 = vld [vmem:[#allocation9 + $0xd0] sm:$0xff]
        %v406 = vld [vmem:[#allocation9 + $0xd8] sm:$0xff]
        %v407 = vld [vmem:[#allocation9 + $0xe0] sm:$0xff]
        %v408 = vld [vmem:[#allocation9 + $0xe8] sm:$0xff]
        %v409 = vld [vmem:[#allocation9 + $0xf0] sm:$0xff]
        %v410 = vld [vmem:[#allocation9 + $0xf8] sm:$0xff]
        %v411 = vld [vmem:[#allocation9 + $0x100] sm:$0xff]
        %v412 = vld [vmem:[#allocation9 + $0x108] sm:$0xff]
        %v413 = vld [vmem:[#allocation9 + $0x110] sm:$0xff]
        %v414 = vld [vmem:[#allocation9 + $0x118] sm:$0xff]
        %v415 = vld [vmem:[#allocation9 + $0x120] sm:$0xff]
        %v416 = vld [vmem:[#allocation9 + $0x128] sm:$0xff]
        %v417 = vld [vmem:[#allocation9 + $0x130] sm:$0xff]
        %v418 = vld [vmem:[#allocation9 + $0x138] sm:$0xff]
        %v419 = vld [vmem:[#allocation9 + $0x140] sm:$0xff]
        %v420 = vld [vmem:[#allocation9 + $0x148] sm:$0xff]
        %v421 = vld [vmem:[#allocation9 + $0x150] sm:$0xff]
        %v422 = vld [vmem:[#allocation9 + $0x158] sm:$0xff]
        %v423 = vld [vmem:[#allocation9 + $0x160] sm:$0xff]
        %v424 = vld [vmem:[#allocation9 + $0x168] sm:$0xff]
        %v425 = vld [vmem:[#allocation9 + $0x170] sm:$0xff]
        %v426 = vld [vmem:[#allocation9 + $0x178] sm:$0xff]
        %v427 = vld [vmem:[#allocation9 + $0x180] sm:$0xff]
        %v428 = vld [vmem:[#allocation9 + $0x188] sm:$0xff]
        %v429 = vld [vmem:[#allocation9 + $0x190] sm:$0xff]
        %v430 = vld [vmem:[#allocation9 + $0x198] sm:$0xff]
        %v431 = vld [vmem:[#allocation9 + $0x1a0] sm:$0xff]
        %v432 = vld [vmem:[#allocation9 + $0x1a8] sm:$0xff]
        %v433 = vld [vmem:[#allocation9 + $0x1b0] sm:$0xff]
        %v434 = vld [vmem:[#allocation9 + $0x1b8] sm:$0xff]
        %v435 = vld [vmem:[#allocation9 + $0x1c0] sm:$0xff]
        %v436 = vld [vmem:[#allocation9 + $0x1c8] sm:$0xff]
        %v437 = vld [vmem:[#allocation9 + $0x1d0] sm:$0xff]
        %v438 = vld [vmem:[#allocation9 + $0x1d8] sm:$0xff]
        %v439 = vld [vmem:[#allocation9 + $0x1e0] sm:$0xff]
        %v440 = vld [vmem:[#allocation9 + $0x1e8] sm:$0xff]
        %v441 = vld [vmem:[#allocation9 + $0x1f0] sm:$0xff]
        %v442 = vld [vmem:[#allocation9 + $0x1f8] sm:$0xff]
        %v443 = vld [vmem:[#allocation9 + $0x200] sm:$0xff]
        %v444 = vld [vmem:[#allocation9 + $0x208] sm:$0xff]
        %v445 = vld [vmem:[#allocation9 + $0x210] sm:$0xff]
        %v446 = vld [vmem:[#allocation9 + $0x218] sm:$0xff]
        %v447 = vld [vmem:[#allocation9 + $0x220] sm:$0xff]
        %v448 = vld [vmem:[#allocation9 + $0x228] sm:$0xff]
        %v449 = vld [vmem:[#allocation9 + $0x230] sm:$0xff]
        %v450 = vld [vmem:[#allocation9 + $0x238] sm:$0xff]
        %v451 = vld [vmem:[#allocation9 + $0x240] sm:$0xff]
        %v452 = vld [vmem:[#allocation9 + $0x248] sm:$0xff]
        %v453 = vld [vmem:[#allocation9 + $0x250] sm:$0xff]
        %v454 = vld [vmem:[#allocation9 + $0x258] sm:$0xff]
        %v455 = vld [vmem:[#allocation9 + $0x260] sm:$0xff]
        %v456 = vld [vmem:[#allocation9 + $0x268] sm:$0xff]
        %v457 = vld [vmem:[#allocation9 + $0x270] sm:$0xff]
        %v458 = vld [vmem:[#allocation9 + $0x278] sm:$0xff]
        %v459 = vld [vmem:[#allocation9 + $0x280] sm:$0xff]
        %v460 = vld [vmem:[#allocation9 + $0x288] sm:$0xff]
        %v461 = vld [vmem:[#allocation9 + $0x290] sm:$0xff]
        %v462 = vld [vmem:[#allocation9 + $0x298] sm:$0xff]
        %v463 = vld [vmem:[#allocation9 + $0x2a0] sm:$0xff]
        %v464 = vld [vmem:[#allocation9 + $0x2a8] sm:$0xff]
        %v465 = vld [vmem:[#allocation9 + $0x2b0] sm:$0xff]
        %v466 = vld [vmem:[#allocation9 + $0x2b8] sm:$0xff]
        %v467 = vld [vmem:[#allocation9 + $0x2c0] sm:$0xff]
        %v468 = vld [vmem:[#allocation9 + $0x2c8] sm:$0xff]
        %v469 = vld [vmem:[#allocation9 + $0x2d0] sm:$0xff]
        %v470 = vld [vmem:[#allocation9 + $0x2d8] sm:$0xff]
        %v471 = vld [vmem:[#allocation9 + $0x2e0] sm:$0xff]
        %v472 = vld [vmem:[#allocation9 + $0x2e8] sm:$0xff]
        %v473 = vld [vmem:[#allocation9 + $0x2f0] sm:$0xff]
        %v474 = vld [vmem:[#allocation9 + $0x2f8] sm:$0xff]
        %v475 = vld [vmem:[#allocation9 + $0x300] sm:$0xff]
        %v476 = vld [vmem:[#allocation9 + $0x308] sm:$0xff]
        %v477 = vld [vmem:[#allocation9 + $0x310] sm:$0xff]
        %v478 = vld [vmem:[#allocation9 + $0x318] sm:$0xff]
        %v479 = vld [vmem:[#allocation9 + $0x320] sm:$0xff]
        %v480 = vld [vmem:[#allocation9 + $0x328] sm:$0xff]
        %v481 = vld [vmem:[#allocation9 + $0x330] sm:$0xff]
        %v482 = vld [vmem:[#allocation9 + $0x338] sm:$0xff]
        %v483 = vld [vmem:[#allocation9 + $0x340] sm:$0xff]
        %v484 = vld [vmem:[#allocation9 + $0x348] sm:$0xff]
        %v485 = vld [vmem:[#allocation9 + $0x350] sm:$0xff]
        %v486 = vld [vmem:[#allocation9 + $0x358] sm:$0xff]
        %v487 = vld [vmem:[#allocation9 + $0x360] sm:$0xff]
        %v488 = vld [vmem:[#allocation9 + $0x368] sm:$0xff]
        %v489 = vld [vmem:[#allocation9 + $0x370] sm:$0xff]
        %v490 = vld [vmem:[#allocation9 + $0x378] sm:$0xff]
        %v491 = vld [vmem:[#allocation9 + $0x380] sm:$0xff]
        %v492 = vld [vmem:[#allocation9 + $0x388] sm:$0xff]
        %v493 = vld [vmem:[#allocation9 + $0x390] sm:$0xff]
        %v494 = vld [vmem:[#allocation9 + $0x398] sm:$0xff]
        %v495 = vld [vmem:[#allocation9 + $0x3a0] sm:$0xff]
        %v496 = vld [vmem:[#allocation9 + $0x3a8] sm:$0xff]
        %v497 = vld [vmem:[#allocation9 + $0x3b0] sm:$0xff]
        %v498 = vld [vmem:[#allocation9 + $0x3b8] sm:$0xff]
        %v499 = vld [vmem:[#allocation9 + $0x3c0] sm:$0xff]
        %v500 = vld [vmem:[#allocation9 + $0x3c8] sm:$0xff]
        %v501 = vld [vmem:[#allocation9 + $0x3d0] sm:$0xff]
        %v502 = vld [vmem:[#allocation9 + $0x3d8] sm:$0xff]
        %v503 = vld [vmem:[#allocation9 + $0x3e0] sm:$0xff]
        %v504 = vld [vmem:[#allocation9 + $0x3e8] sm:$0xff]
        %v505 = vld [vmem:[#allocation9 + $0x3f0] sm:$0xff]
        %v506 = vld [vmem:[#allocation9 + $0x3f8] sm:$0xff]
        %v507 = vld [vmem:[#allocation11] sm:$0xf]
        %v509 = vperm.slane %v378, 0
        %v510 = vperm.slane %v378, 1
        %v514 = vperm.slane %v507, 0
        %v515 = vperm.slane %v507, 1
        %v516 = vperm.slane %v507, 2
        %v517 = vperm.slane %v507, 3
        %522 = vmatpush.msra.mxu0 %v439
        %523 = vmatpush.msra.mxu0 %v435
        %524 = vmatpush.msra.mxu0 %v431
        %525 = vmatpush.msra.mxu0 %v427
        %526 = vmatpush.msra.mxu0 %v423
        %527 = vmatpush.msra.mxu0 %v419
        %528 = vmatpush.msra.mxu0 %v415
        %529 = vmatpush.msra.mxu0 %v411
        %530 = vmatpush.msra.mxu0 %v407
        %531 = vmatpush.msra.mxu0 %v403
        %532 = vmatpush.msra.mxu0 %v399
        %533 = vmatpush.msra.mxu0 %v395
        %534 = vmatpush.msra.mxu0 %v391
        %535 = vmatpush.msra.mxu0 %v387
        %536 = vmatpush.msra.mxu0 %v383
        %537 = vmatpush.msra.mxu0 %v379
        %538 = vmatmul.f32.gmra.mxu0 %v509
        %v539 = vpop.f32.mrf.mxu0
        %v540 = vadd.f32 %v514, %v539
        %541 = vdwg.mxu0
        %542 = vmatpush.msra.mxu0 %v503
        %543 = vmatpush.msra.mxu0 %v499
        %544 = vmatpush.msra.mxu0 %v495
        %545 = vmatpush.msra.mxu0 %v491
        %546 = vmatpush.msra.mxu0 %v487
        %547 = vmatpush.msra.mxu0 %v483
        %548 = vmatpush.msra.mxu0 %v479
        %549 = vmatpush.msra.mxu0 %v475
        %550 = vmatpush.msra.mxu0 %v471
        %551 = vmatpush.msra.mxu0 %v467
        %552 = vmatpush.msra.mxu0 %v463
        %553 = vmatpush.msra.mxu0 %v459
        %554 = vmatpush.msra.mxu0 %v455
        %555 = vmatpush.msra.mxu0 %v451
        %556 = vmatpush.msra.mxu0 %v447
        %557 = vmatpush.msra.mxu0 %v443
        %558 = vmatmul.f32.gmra.mxu0 %v510
        %v559 = vpop.f32.mrf.mxu0
        %v560 = vadd.f32 %v540, %v559
        %561 = vdwg.mxu0
        %562 = vmatpush.msra.mxu0 %v440
        %563 = vmatpush.msra.mxu0 %v436
        %564 = vmatpush.msra.mxu0 %v432
        %565 = vmatpush.msra.mxu0 %v428
        %566 = vmatpush.msra.mxu0 %v424
        %567 = vmatpush.msra.mxu0 %v420
        %568 = vmatpush.msra.mxu0 %v416
        %569 = vmatpush.msra.mxu0 %v412
        %570 = vmatpush.msra.mxu0 %v408
        %571 = vmatpush.msra.mxu0 %v404
        %572 = vmatpush.msra.mxu0 %v400
        %573 = vmatpush.msra.mxu0 %v396
        %574 = vmatpush.msra.mxu0 %v392
        %575 = vmatpush.msra.mxu0 %v388
        %576 = vmatpush.msra.mxu0 %v384
        %577 = vmatpush.msra.mxu0 %v380
        %578 = vmatmul.f32.gmra.mxu0 %v509
        %v579 = vpop.f32.mrf.mxu0
        %v580 = vadd.f32 %v515, %v579
        %581 = vdwg.mxu0
        %582 = vmatpush.msra.mxu0 %v504
        %583 = vmatpush.msra.mxu0 %v500
        %584 = vmatpush.msra.mxu0 %v496
        %585 = vmatpush.msra.mxu0 %v492
        %586 = vmatpush.msra.mxu0 %v488
        %587 = vmatpush.msra.mxu0 %v484
        %588 = vmatpush.msra.mxu0 %v480
        %589 = vmatpush.msra.mxu0 %v476
        %590 = vmatpush.msra.mxu0 %v472
        %591 = vmatpush.msra.mxu0 %v468
        %592 = vmatpush.msra.mxu0 %v464
        %593 = vmatpush.msra.mxu0 %v460
        %594 = vmatpush.msra.mxu0 %v456
        %595 = vmatpush.msra.mxu0 %v452
        %596 = vmatpush.msra.mxu0 %v448
        %597 = vmatpush.msra.mxu0 %v444
        %598 = vmatmul.f32.gmra.mxu0 %v510
        %v599 = vpop.f32.mrf.mxu0
        %v600 = vadd.f32 %v580, %v599
        %601 = vdwg.mxu0
        %602 = vmatpush.msra.mxu0 %v441
        %603 = vmatpush.msra.mxu0 %v437
        %604 = vmatpush.msra.mxu0 %v433
        %605 = vmatpush.msra.mxu0 %v429
        %606 = vmatpush.msra.mxu0 %v425
        %607 = vmatpush.msra.mxu0 %v421
        %608 = vmatpush.msra.mxu0 %v417
        %609 = vmatpush.msra.mxu0 %v413
        %610 = vmatpush.msra.mxu0 %v409
        %611 = vmatpush.msra.mxu0 %v405
        %612 = vmatpush.msra.mxu0 %v401
        %613 = vmatpush.msra.mxu0 %v397
        %614 = vmatpush.msra.mxu0 %v393
        %615 = vmatpush.msra.mxu0 %v389
        %616 = vmatpush.msra.mxu0 %v385
        %617 = vmatpush.msra.mxu0 %v381
        %618 = vmatmul.f32.gmra.mxu0 %v509
        %v619 = vpop.f32.mrf.mxu0
        %v620 = vadd.f32 %v516, %v619
        %621 = vdwg.mxu0
        %622 = vmatpush.msra.mxu0 %v505
        %623 = vmatpush.msra.mxu0 %v501
        %624 = vmatpush.msra.mxu0 %v497
        %625 = vmatpush.msra.mxu0 %v493
        %626 = vmatpush.msra.mxu0 %v489
        %627 = vmatpush.msra.mxu0 %v485
        %628 = vmatpush.msra.mxu0 %v481
        %629 = vmatpush.msra.mxu0 %v477
        %630 = vmatpush.msra.mxu0 %v473
        %631 = vmatpush.msra.mxu0 %v469
        %632 = vmatpush.msra.mxu0 %v465
        %633 = vmatpush.msra.mxu0 %v461
        %634 = vmatpush.msra.mxu0 %v457
        %635 = vmatpush.msra.mxu0 %v453
        %636 = vmatpush.msra.mxu0 %v449
        %637 = vmatpush.msra.mxu0 %v445
        %638 = vmatmul.f32.gmra.mxu0 %v510
        %v639 = vpop.f32.mrf.mxu0
        %v640 = vadd.f32 %v620, %v639
        %641 = vdwg.mxu0
        %642 = vmatpush.msra.mxu0 %v442
        %643 = vmatpush.msra.mxu0 %v438
        %644 = vmatpush.msra.mxu0 %v434
        %645 = vmatpush.msra.mxu0 %v430
        %646 = vmatpush.msra.mxu0 %v426
        %647 = vmatpush.msra.mxu0 %v422
        %648 = vmatpush.msra.mxu0 %v418
        %649 = vmatpush.msra.mxu0 %v414
        %650 = vmatpush.msra.mxu0 %v410
        %651 = vmatpush.msra.mxu0 %v406
        %652 = vmatpush.msra.mxu0 %v402
        %653 = vmatpush.msra.mxu0 %v398
        %654 = vmatpush.msra.mxu0 %v394
        %655 = vmatpush.msra.mxu0 %v390
        %656 = vmatpush.msra.mxu0 %v386
        %657 = vmatpush.msra.mxu0 %v382
        %658 = vmatmul.f32.gmra.mxu0 %v509
        %v659 = vpop.f32.mrf.mxu0
        %v660 = vadd.f32 %v517, %v659
        %661 = vdwg.mxu0
        %662 = vmatpush.msra.mxu0 %v506
        %663 = vmatpush.msra.mxu0 %v502
        %664 = vmatpush.msra.mxu0 %v498
        %665 = vmatpush.msra.mxu0 %v494
        %666 = vmatpush.msra.mxu0 %v490
        %667 = vmatpush.msra.mxu0 %v486
        %668 = vmatpush.msra.mxu0 %v482
        %669 = vmatpush.msra.mxu0 %v478
        %670 = vmatpush.msra.mxu0 %v474
        %671 = vmatpush.msra.mxu0 %v470
        %672 = vmatpush.msra.mxu0 %v466
        %673 = vmatpush.msra.mxu0 %v462
        %674 = vmatpush.msra.mxu0 %v458
        %675 = vmatpush.msra.mxu0 %v454
        %676 = vmatpush.msra.mxu0 %v450
        %677 = vmatpush.msra.mxu0 %v446
        %678 = vmatmul.f32.gmra.mxu0 %v510
        %v679 = vpop.f32.mrf.mxu0
        %v680 = vadd.f32 %v660, %v679
        %681 = vdwg.mxu0
        %v682 = vxor.u32 %v560, 2147483648
        %v683 = vxor.u32 %v600, 2147483648
        %v684 = vxor.u32 %v640, 2147483648
        %v685 = vmul.f32 %v682, 1.442695
        %v686 = vpow.pop %v685
        %v687 = vmul.f32 %v683, 1.442695
        %v688 = vpow.pop %v687
        %v689 = vmul.f32 %v684, 1.442695
        %v690 = vpow.pop %v689
        %v691 = vadd.f32 %v686, 1.0
        %v692 = vadd.f32 %v688, 1.0
        %v693 = vadd.f32 %v690, 1.0
        %v694 = vrcp.pop %v691
        %v695 = vmul.f32 %v691, %v694
        %v696 = vsub.f32 1.0, %v695
        %v697 = vmul.f32 %v694, %v696
        %v698 = vadd.f32 %v694, %v697
        %vm699 = vweird.f32 %v691
        %vm700 = vweird.f32 %v694
        %vm701 = vmor %vm699, %vm700
        %v702 = vsel %vm701, %v694, %v698
        %v703 = vand.u32 2147483647, %v691
        %vm704 = vcmp.eq.f32.partialorder %v703, 8.507059e+37
        %v705 = vand.u32 %v691, 2147483648
        %v706 = vor.u32 1.1754944e-38, %v705
        %v707 = vsel %vm704, %v706, %v702
        %v708 = vmul.f32 1.0, %v707
        %v709 = vrcp.pop %v692
        %v710 = vmul.f32 %v692, %v709
        %v711 = vsub.f32 1.0, %v710
        %v712 = vmul.f32 %v709, %v711
        %v713 = vadd.f32 %v709, %v712
        %vm714 = vweird.f32 %v692
        %vm715 = vweird.f32 %v709
        %vm716 = vmor %vm714, %vm715
        %v717 = vsel %vm716, %v709, %v713
        %v718 = vand.u32 2147483647, %v692
        %vm719 = vcmp.eq.f32.partialorder %v718, 8.507059e+37
        %v720 = vand.u32 %v692, 2147483648
        %v721 = vor.u32 1.1754944e-38, %v720
        %v722 = vsel %vm719, %v721, %v717
        %v723 = vmul.f32 1.0, %v722
        %v724 = vrcp.pop %v693
        %v725 = vmul.f32 %v693, %v724
        %v726 = vsub.f32 1.0, %v725
        %v727 = vmul.f32 %v724, %v726
        %v728 = vadd.f32 %v724, %v727
        %vm729 = vweird.f32 %v693
        %vm730 = vweird.f32 %v724
        %vm731 = vmor %vm729, %vm730
        %v732 = vsel %vm731, %v724, %v728
        %v733 = vand.u32 2147483647, %v693
        %vm734 = vcmp.eq.f32.partialorder %v733, 8.507059e+37
        %v735 = vand.u32 %v693, 2147483648
        %v736 = vor.u32 1.1754944e-38, %v735
        %v737 = vsel %vm734, %v736, %v732
        %v738 = vmul.f32 1.0, %v737
        %v739 = vtanh.pop %v680
        %v740 = vld [vmem:[#allocation3] sm:$0x1]
        %v741 = vmul.f32 %v723, %v740
        %v742 = vmul.f32 %v708, %v739
        %v743 = vadd.f32 %v741, %v742
        %v744 = vtanh.pop %v743
        %v745 = vmul.f32 %v738, %v744
        %v746 = vld [vmem:[#allocation12] sm:$0xff]
        %v747 = vld [vmem:[#allocation12 + $0x8] sm:$0xff]
        %v748 = vld [vmem:[#allocation12 + $0x10] sm:$0xff]
        %v749 = vld [vmem:[#allocation12 + $0x18] sm:$0xff]
        %v750 = vld [vmem:[#allocation12 + $0x20] sm:$0xff]
        %v751 = vld [vmem:[#allocation12 + $0x28] sm:$0xff]
        %v752 = vld [vmem:[#allocation12 + $0x30] sm:$0xff]
        %v753 = vld [vmem:[#allocation12 + $0x38] sm:$0xff]
        %v754 = vld [vmem:[#allocation12 + $0x40] sm:$0xff]
        %v755 = vld [vmem:[#allocation12 + $0x48] sm:$0xff]
        %v756 = vld [vmem:[#allocation12 + $0x50] sm:$0xff]
        %v757 = vld [vmem:[#allocation12 + $0x58] sm:$0xff]
        %v758 = vld [vmem:[#allocation12 + $0x60] sm:$0xff]
        %v759 = vld [vmem:[#allocation12 + $0x68] sm:$0xff]
        %v760 = vld [vmem:[#allocation12 + $0x70] sm:$0xff]
        %v761 = vld [vmem:[#allocation12 + $0x78] sm:$0xff]
        %v762 = vld [vmem:[%s7] sm:$0x1]
        %763 = vmatpush.msra.mxu0 %v761
        %764 = vmatpush.msra.mxu0 %v760
        %765 = vmatpush.msra.mxu0 %v759
        %766 = vmatpush.msra.mxu0 %v758
        %767 = vmatpush.msra.mxu0 %v757
        %768 = vmatpush.msra.mxu0 %v756
        %769 = vmatpush.msra.mxu0 %v755
        %770 = vmatpush.msra.mxu0 %v754
        %771 = vmatpush.msra.mxu0 %v753
        %772 = vmatpush.msra.mxu0 %v752
        %773 = vmatpush.msra.mxu0 %v751
        %774 = vmatpush.msra.mxu0 %v750
        %775 = vmatpush.msra.mxu0 %v749
        %776 = vmatpush.msra.mxu0 %v748
        %777 = vmatpush.msra.mxu0 %v747
        %778 = vmatpush.msra.mxu0 %v746
        %779 = vmatmul.f32.gmra.mxu0 %v745
        %v780 = vpop.f32.mrf.mxu0
        %v781 = vadd.f32 %v762, %v780
        %782 = vdwg.mxu0
        %783 = vst [vmem:[%s354] sm:$0x1] %v781
        %784 = vst.msk [vmem:[#allocation2 + $0x1] sm:$0x1] %vm376, %v745
        %785 = vst [vmem:[#allocation3] sm:$0x1] %v743
        %s786 = sadd.s32 %s369, 1
        %s787 = sld [smem:[#allocation5 + %s786]]
        %s788 = scalar_lea.vmem [#allocation6], %s787
        %v789 = vld [vmem:[%s788] sm:$0x1]
        %790 = vst.msk [vmem:[#allocation2] sm:$0x1] %vm376, %v789
        %v791 = vld [vmem:[#allocation2] sm:$0x3]
        %v792 = vld [vmem:[#allocation9] sm:$0xff]
        %v793 = vld [vmem:[#allocation9 + $0x8] sm:$0xff]
        %v794 = vld [vmem:[#allocation9 + $0x10] sm:$0xff]
        %v795 = vld [vmem:[#allocation9 + $0x18] sm:$0xff]
        %v796 = vld [vmem:[#allocation9 + $0x20] sm:$0xff]
        %v797 = vld [vmem:[#allocation9 + $0x28] sm:$0xff]
        %v798 = vld [vmem:[#allocation9 + $0x30] sm:$0xff]
        %v799 = vld [vmem:[#allocation9 + $0x38] sm:$0xff]
        %v800 = vld [vmem:[#allocation9 + $0x40] sm:$0xff]
        %v801 = vld [vmem:[#allocation9 + $0x48] sm:$0xff]
        %v802 = vld [vmem:[#allocation9 + $0x50] sm:$0xff]
        %v803 = vld [vmem:[#allocation9 + $0x58] sm:$0xff]
        %v804 = vld [vmem:[#allocation9 + $0x60] sm:$0xff]
        %v805 = vld [vmem:[#allocation9 + $0x68] sm:$0xff]
        %v806 = vld [vmem:[#allocation9 + $0x70] sm:$0xff]
        %v807 = vld [vmem:[#allocation9 + $0x78] sm:$0xff]
        %v808 = vld [vmem:[#allocation9 + $0x80] sm:$0xff]
        %v809 = vld [vmem:[#allocation9 + $0x88] sm:$0xff]
        %v810 = vld [vmem:[#allocation9 + $0x90] sm:$0xff]
        %v811 = vld [vmem:[#allocation9 + $0x98] sm:$0xff]
        %v812 = vld [vmem:[#allocation9 + $0xa0] sm:$0xff]
        %v813 = vld [vmem:[#allocation9 + $0xa8] sm:$0xff]
        %v814 = vld [vmem:[#allocation9 + $0xb0] sm:$0xff]
        %v815 = vld [vmem:[#allocation9 + $0xb8] sm:$0xff]
        %v816 = vld [vmem:[#allocation9 + $0xc0] sm:$0xff]
        %v817 = vld [vmem:[#allocation9 + $0xc8] sm:$0xff]
        %v818 = vld [vmem:[#allocation9 + $0xd0] sm:$0xff]
        %v819 = vld [vmem:[#allocation9 + $0xd8] sm:$0xff]
        %v820 = vld [vmem:[#allocation9 + $0xe0] sm:$0xff]
        %v821 = vld [vmem:[#allocation9 + $0xe8] sm:$0xff]
        %v822 = vld [vmem:[#allocation9 + $0xf0] sm:$0xff]
        %v823 = vld [vmem:[#allocation9 + $0xf8] sm:$0xff]
        %v824 = vld [vmem:[#allocation9 + $0x100] sm:$0xff]
        %v825 = vld [vmem:[#allocation9 + $0x108] sm:$0xff]
        %v826 = vld [vmem:[#allocation9 + $0x110] sm:$0xff]
        %v827 = vld [vmem:[#allocation9 + $0x118] sm:$0xff]
        %v828 = vld [vmem:[#allocation9 + $0x120] sm:$0xff]
        %v829 = vld [vmem:[#allocation9 + $0x128] sm:$0xff]
        %v830 = vld [vmem:[#allocation9 + $0x130] sm:$0xff]
        %v831 = vld [vmem:[#allocation9 + $0x138] sm:$0xff]
        %v832 = vld [vmem:[#allocation9 + $0x140] sm:$0xff]
        %v833 = vld [vmem:[#allocation9 + $0x148] sm:$0xff]
        %v834 = vld [vmem:[#allocation9 + $0x150] sm:$0xff]
        %v835 = vld [vmem:[#allocation9 + $0x158] sm:$0xff]
        %v836 = vld [vmem:[#allocation9 + $0x160] sm:$0xff]
        %v837 = vld [vmem:[#allocation9 + $0x168] sm:$0xff]
        %v838 = vld [vmem:[#allocation9 + $0x170] sm:$0xff]
        %v839 = vld [vmem:[#allocation9 + $0x178] sm:$0xff]
        %v840 = vld [vmem:[#allocation9 + $0x180] sm:$0xff]
        %v841 = vld [vmem:[#allocation9 + $0x188] sm:$0xff]
        %v842 = vld [vmem:[#allocation9 + $0x190] sm:$0xff]
        %v843 = vld [vmem:[#allocation9 + $0x198] sm:$0xff]
        %v844 = vld [vmem:[#allocation9 + $0x1a0] sm:$0xff]
        %v845 = vld [vmem:[#allocation9 + $0x1a8] sm:$0xff]
        %v846 = vld [vmem:[#allocation9 + $0x1b0] sm:$0xff]
        %v847 = vld [vmem:[#allocation9 + $0x1b8] sm:$0xff]
        %v848 = vld [vmem:[#allocation9 + $0x1c0] sm:$0xff]
        %v849 = vld [vmem:[#allocation9 + $0x1c8] sm:$0xff]
        %v850 = vld [vmem:[#allocation9 + $0x1d0] sm:$0xff]
        %v851 = vld [vmem:[#allocation9 + $0x1d8] sm:$0xff]
        %v852 = vld [vmem:[#allocation9 + $0x1e0] sm:$0xff]
        %v853 = vld [vmem:[#allocation9 + $0x1e8] sm:$0xff]
        %v854 = vld [vmem:[#allocation9 + $0x1f0] sm:$0xff]
        %v855 = vld [vmem:[#allocation9 + $0x1f8] sm:$0xff]
        %v856 = vld [vmem:[#allocation9 + $0x200] sm:$0xff]
        %v857 = vld [vmem:[#allocation9 + $0x208] sm:$0xff]
        %v858 = vld [vmem:[#allocation9 + $0x210] sm:$0xff]
        %v859 = vld [vmem:[#allocation9 + $0x218] sm:$0xff]
        %v860 = vld [vmem:[#allocation9 + $0x220] sm:$0xff]
        %v861 = vld [vmem:[#allocation9 + $0x228] sm:$0xff]
        %v862 = vld [vmem:[#allocation9 + $0x230] sm:$0xff]
        %v863 = vld [vmem:[#allocation9 + $0x238] sm:$0xff]
        %v864 = vld [vmem:[#allocation9 + $0x240] sm:$0xff]
        %v865 = vld [vmem:[#allocation9 + $0x248] sm:$0xff]
        %v866 = vld [vmem:[#allocation9 + $0x250] sm:$0xff]
        %v867 = vld [vmem:[#allocation9 + $0x258] sm:$0xff]
        %v868 = vld [vmem:[#allocation9 + $0x260] sm:$0xff]
        %v869 = vld [vmem:[#allocation9 + $0x268] sm:$0xff]
        %v870 = vld [vmem:[#allocation9 + $0x270] sm:$0xff]
        %v871 = vld [vmem:[#allocation9 + $0x278] sm:$0xff]
        %v872 = vld [vmem:[#allocation9 + $0x280] sm:$0xff]
        %v873 = vld [vmem:[#allocation9 + $0x288] sm:$0xff]
        %v874 = vld [vmem:[#allocation9 + $0x290] sm:$0xff]
        %v875 = vld [vmem:[#allocation9 + $0x298] sm:$0xff]
        %v876 = vld [vmem:[#allocation9 + $0x2a0] sm:$0xff]
        %v877 = vld [vmem:[#allocation9 + $0x2a8] sm:$0xff]
        %v878 = vld [vmem:[#allocation9 + $0x2b0] sm:$0xff]
        %v879 = vld [vmem:[#allocation9 + $0x2b8] sm:$0xff]
        %v880 = vld [vmem:[#allocation9 + $0x2c0] sm:$0xff]
        %v881 = vld [vmem:[#allocation9 + $0x2c8] sm:$0xff]
        %v882 = vld [vmem:[#allocation9 + $0x2d0] sm:$0xff]
        %v883 = vld [vmem:[#allocation9 + $0x2d8] sm:$0xff]
        %v884 = vld [vmem:[#allocation9 + $0x2e0] sm:$0xff]
        %v885 = vld [vmem:[#allocation9 + $0x2e8] sm:$0xff]
        %v886 = vld [vmem:[#allocation9 + $0x2f0] sm:$0xff]
        %v887 = vld [vmem:[#allocation9 + $0x2f8] sm:$0xff]
        %v888 = vld [vmem:[#allocation9 + $0x300] sm:$0xff]
        %v889 = vld [vmem:[#allocation9 + $0x308] sm:$0xff]
        %v890 = vld [vmem:[#allocation9 + $0x310] sm:$0xff]
        %v891 = vld [vmem:[#allocation9 + $0x318] sm:$0xff]
        %v892 = vld [vmem:[#allocation9 + $0x320] sm:$0xff]
        %v893 = vld [vmem:[#allocation9 + $0x328] sm:$0xff]
        %v894 = vld [vmem:[#allocation9 + $0x330] sm:$0xff]
        %v895 = vld [vmem:[#allocation9 + $0x338] sm:$0xff]
        %v896 = vld [vmem:[#allocation9 + $0x340] sm:$0xff]
        %v897 = vld [vmem:[#allocation9 + $0x348] sm:$0xff]
        %v898 = vld [vmem:[#allocation9 + $0x350] sm:$0xff]
        %v899 = vld [vmem:[#allocation9 + $0x358] sm:$0xff]
        %v900 = vld [vmem:[#allocation9 + $0x360] sm:$0xff]
        %v901 = vld [vmem:[#allocation9 + $0x368] sm:$0xff]
        %v902 = vld [vmem:[#allocation9 + $0x370] sm:$0xff]
        %v903 = vld [vmem:[#allocation9 + $0x378] sm:$0xff]
        %v904 = vld [vmem:[#allocation9 + $0x380] sm:$0xff]
        %v905 = vld [vmem:[#allocation9 + $0x388] sm:$0xff]
        %v906 = vld [vmem:[#allocation9 + $0x390] sm:$0xff]
        %v907 = vld [vmem:[#allocation9 + $0x398] sm:$0xff]
        %v908 = vld [vmem:[#allocation9 + $0x3a0] sm:$0xff]
        %v909 = vld [vmem:[#allocation9 + $0x3a8] sm:$0xff]
        %v910 = vld [vmem:[#allocation9 + $0x3b0] sm:$0xff]
        %v911 = vld [vmem:[#allocation9 + $0x3b8] sm:$0xff]
        %v912 = vld [vmem:[#allocation9 + $0x3c0] sm:$0xff]
        %v913 = vld [vmem:[#allocation9 + $0x3c8] sm:$0xff]
        %v914 = vld [vmem:[#allocation9 + $0x3d0] sm:$0xff]
        %v915 = vld [vmem:[#allocation9 + $0x3d8] sm:$0xff]
        %v916 = vld [vmem:[#allocation9 + $0x3e0] sm:$0xff]
        %v917 = vld [vmem:[#allocation9 + $0x3e8] sm:$0xff]
        %v918 = vld [vmem:[#allocation9 + $0x3f0] sm:$0xff]
        %v919 = vld [vmem:[#allocation9 + $0x3f8] sm:$0xff]
        %v920 = vld [vmem:[#allocation11] sm:$0xf]
        %v922 = vperm.slane %v791, 0
        %v923 = vperm.slane %v791, 1
        %v927 = vperm.slane %v920, 0
        %v928 = vperm.slane %v920, 1
        %v929 = vperm.slane %v920, 2
        %v930 = vperm.slane %v920, 3
        %935 = vmatpush.msra.mxu0 %v852
        %936 = vmatpush.msra.mxu0 %v848
        %937 = vmatpush.msra.mxu0 %v844
        %938 = vmatpush.msra.mxu0 %v840
        %939 = vmatpush.msra.mxu0 %v836
        %940 = vmatpush.msra.mxu0 %v832
        %941 = vmatpush.msra.mxu0 %v828
        %942 = vmatpush.msra.mxu0 %v824
        %943 = vmatpush.msra.mxu0 %v820
        %944 = vmatpush.msra.mxu0 %v816
        %945 = vmatpush.msra.mxu0 %v812
        %946 = vmatpush.msra.mxu0 %v808
        %947 = vmatpush.msra.mxu0 %v804
        %948 = vmatpush.msra.mxu0 %v800
        %949 = vmatpush.msra.mxu0 %v796
        %950 = vmatpush.msra.mxu0 %v792
        %951 = vmatmul.f32.gmra.mxu0 %v922
        %v952 = vpop.f32.mrf.mxu0
        %v953 = vadd.f32 %v927, %v952
        %954 = vdwg.mxu0
        %955 = vmatpush.msra.mxu0 %v916
        %956 = vmatpush.msra.mxu0 %v912
        %957 = vmatpush.msra.mxu0 %v908
        %958 = vmatpush.msra.mxu0 %v904
        %959 = vmatpush.msra.mxu0 %v900
        %960 = vmatpush.msra.mxu0 %v896
        %961 = vmatpush.msra.mxu0 %v892
        %962 = vmatpush.msra.mxu0 %v888
        %963 = vmatpush.msra.mxu0 %v884
        %964 = vmatpush.msra.mxu0 %v880
        %965 = vmatpush.msra.mxu0 %v876
        %966 = vmatpush.msra.mxu0 %v872
        %967 = vmatpush.msra.mxu0 %v868
        %968 = vmatpush.msra.mxu0 %v864
        %969 = vmatpush.msra.mxu0 %v860
        %970 = vmatpush.msra.mxu0 %v856
        %971 = vmatmul.f32.gmra.mxu0 %v923
        %v972 = vpop.f32.mrf.mxu0
        %v973 = vadd.f32 %v953, %v972
        %974 = vdwg.mxu0
        %975 = vmatpush.msra.mxu0 %v853
        %976 = vmatpush.msra.mxu0 %v849
        %977 = vmatpush.msra.mxu0 %v845
        %978 = vmatpush.msra.mxu0 %v841
        %979 = vmatpush.msra.mxu0 %v837
        %980 = vmatpush.msra.mxu0 %v833
        %981 = vmatpush.msra.mxu0 %v829
        %982 = vmatpush.msra.mxu0 %v825
        %983 = vmatpush.msra.mxu0 %v821
        %984 = vmatpush.msra.mxu0 %v817
        %985 = vmatpush.msra.mxu0 %v813
        %986 = vmatpush.msra.mxu0 %v809
        %987 = vmatpush.msra.mxu0 %v805
        %988 = vmatpush.msra.mxu0 %v801
        %989 = vmatpush.msra.mxu0 %v797
        %990 = vmatpush.msra.mxu0 %v793
        %991 = vmatmul.f32.gmra.mxu0 %v922
        %v992 = vpop.f32.mrf.mxu0
        %v993 = vadd.f32 %v928, %v992
        %994 = vdwg.mxu0
        %995 = vmatpush.msra.mxu0 %v917
        %996 = vmatpush.msra.mxu0 %v913
        %997 = vmatpush.msra.mxu0 %v909
        %998 = vmatpush.msra.mxu0 %v905
        %999 = vmatpush.msra.mxu0 %v901
        %1000 = vmatpush.msra.mxu0 %v897
        %1001 = vmatpush.msra.mxu0 %v893
        %1002 = vmatpush.msra.mxu0 %v889
        %1003 = vmatpush.msra.mxu0 %v885
        %1004 = vmatpush.msra.mxu0 %v881
        %1005 = vmatpush.msra.mxu0 %v877
        %1006 = vmatpush.msra.mxu0 %v873
        %1007 = vmatpush.msra.mxu0 %v869
        %1008 = vmatpush.msra.mxu0 %v865
        %1009 = vmatpush.msra.mxu0 %v861
        %1010 = vmatpush.msra.mxu0 %v857
        %1011 = vmatmul.f32.gmra.mxu0 %v923
        %v1012 = vpop.f32.mrf.mxu0
        %v1013 = vadd.f32 %v993, %v1012
        %1014 = vdwg.mxu0
        %1015 = vmatpush.msra.mxu0 %v854
        %1016 = vmatpush.msra.mxu0 %v850
        %1017 = vmatpush.msra.mxu0 %v846
        %1018 = vmatpush.msra.mxu0 %v842
        %1019 = vmatpush.msra.mxu0 %v838
        %1020 = vmatpush.msra.mxu0 %v834
        %1021 = vmatpush.msra.mxu0 %v830
        %1022 = vmatpush.msra.mxu0 %v826
        %1023 = vmatpush.msra.mxu0 %v822
        %1024 = vmatpush.msra.mxu0 %v818
        %1025 = vmatpush.msra.mxu0 %v814
        %1026 = vmatpush.msra.mxu0 %v810
        %1027 = vmatpush.msra.mxu0 %v806
        %1028 = vmatpush.msra.mxu0 %v802
        %1029 = vmatpush.msra.mxu0 %v798
        %1030 = vmatpush.msra.mxu0 %v794
        %1031 = vmatmul.f32.gmra.mxu0 %v922
        %v1032 = vpop.f32.mrf.mxu0
        %v1033 = vadd.f32 %v929, %v1032
        %1034 = vdwg.mxu0
        %1035 = vmatpush.msra.mxu0 %v918
        %1036 = vmatpush.msra.mxu0 %v914
        %1037 = vmatpush.msra.mxu0 %v910
        %1038 = vmatpush.msra.mxu0 %v906
        %1039 = vmatpush.msra.mxu0 %v902
        %1040 = vmatpush.msra.mxu0 %v898
        %1041 = vmatpush.msra.mxu0 %v894
        %1042 = vmatpush.msra.mxu0 %v890
        %1043 = vmatpush.msra.mxu0 %v886
        %1044 = vmatpush.msra.mxu0 %v882
        %1045 = vmatpush.msra.mxu0 %v878
        %1046 = vmatpush.msra.mxu0 %v874
        %1047 = vmatpush.msra.mxu0 %v870
        %1048 = vmatpush.msra.mxu0 %v866
        %1049 = vmatpush.msra.mxu0 %v862
        %1050 = vmatpush.msra.mxu0 %v858
        %1051 = vmatmul.f32.gmra.mxu0 %v923
        %v1052 = vpop.f32.mrf.mxu0
        %v1053 = vadd.f32 %v1033, %v1052
        %1054 = vdwg.mxu0
        %1055 = vmatpush.msra.mxu0 %v855
        %1056 = vmatpush.msra.mxu0 %v851
        %1057 = vmatpush.msra.mxu0 %v847
        %1058 = vmatpush.msra.mxu0 %v843
        %1059 = vmatpush.msra.mxu0 %v839
        %1060 = vmatpush.msra.mxu0 %v835
        %1061 = vmatpush.msra.mxu0 %v831
        %1062 = vmatpush.msra.mxu0 %v827
        %1063 = vmatpush.msra.mxu0 %v823
        %1064 = vmatpush.msra.mxu0 %v819
        %1065 = vmatpush.msra.mxu0 %v815
        %1066 = vmatpush.msra.mxu0 %v811
        %1067 = vmatpush.msra.mxu0 %v807
        %1068 = vmatpush.msra.mxu0 %v803
        %1069 = vmatpush.msra.mxu0 %v799
        %1070 = vmatpush.msra.mxu0 %v795
        %1071 = vmatmul.f32.gmra.mxu0 %v922
        %v1072 = vpop.f32.mrf.mxu0
        %v1073 = vadd.f32 %v930, %v1072
        %1074 = vdwg.mxu0
        %1075 = vmatpush.msra.mxu0 %v919
        %1076 = vmatpush.msra.mxu0 %v915
        %1077 = vmatpush.msra.mxu0 %v911
        %1078 = vmatpush.msra.mxu0 %v907
        %1079 = vmatpush.msra.mxu0 %v903
        %1080 = vmatpush.msra.mxu0 %v899
        %1081 = vmatpush.msra.mxu0 %v895
        %1082 = vmatpush.msra.mxu0 %v891
        %1083 = vmatpush.msra.mxu0 %v887
        %1084 = vmatpush.msra.mxu0 %v883
        %1085 = vmatpush.msra.mxu0 %v879
        %1086 = vmatpush.msra.mxu0 %v875
        %1087 = vmatpush.msra.mxu0 %v871
        %1088 = vmatpush.msra.mxu0 %v867
        %1089 = vmatpush.msra.mxu0 %v863
        %1090 = vmatpush.msra.mxu0 %v859
        %1091 = vmatmul.f32.gmra.mxu0 %v923
        %v1092 = vpop.f32.mrf.mxu0
        %v1093 = vadd.f32 %v1073, %v1092
        %1094 = vdwg.mxu0
        %v1095 = vxor.u32 %v973, 2147483648
        %v1096 = vxor.u32 %v1013, 2147483648
        %v1097 = vxor.u32 %v1053, 2147483648
        %v1098 = vmul.f32 %v1095, 1.442695
        %v1099 = vpow.pop %v1098
        %v1100 = vmul.f32 %v1096, 1.442695
        %v1101 = vpow.pop %v1100
        %v1102 = vmul.f32 %v1097, 1.442695
        %v1103 = vpow.pop %v1102
        %v1104 = vadd.f32 %v1099, 1.0
        %v1105 = vadd.f32 %v1101, 1.0
        %v1106 = vadd.f32 %v1103, 1.0
        %v1107 = vrcp.pop %v1104
        %v1108 = vmul.f32 %v1104, %v1107
        %v1109 = vsub.f32 1.0, %v1108
        %v1110 = vmul.f32 %v1107, %v1109
        %v1111 = vadd.f32 %v1107, %v1110
        %vm1112 = vweird.f32 %v1104
        %vm1113 = vweird.f32 %v1107
        %vm1114 = vmor %vm1112, %vm1113
        %v1115 = vsel %vm1114, %v1107, %v1111
        %v1116 = vand.u32 2147483647, %v1104
        %vm1117 = vcmp.eq.f32.partialorder %v1116, 8.507059e+37
        %v1118 = vand.u32 %v1104, 2147483648
        %v1119 = vor.u32 1.1754944e-38, %v1118
        %v1120 = vsel %vm1117, %v1119, %v1115
        %v1121 = vmul.f32 1.0, %v1120
        %v1122 = vrcp.pop %v1105
        %v1123 = vmul.f32 %v1105, %v1122
        %v1124 = vsub.f32 1.0, %v1123
        %v1125 = vmul.f32 %v1122, %v1124
        %v1126 = vadd.f32 %v1122, %v1125
        %vm1127 = vweird.f32 %v1105
        %vm1128 = vweird.f32 %v1122
        %vm1129 = vmor %vm1127, %vm1128
        %v1130 = vsel %vm1129, %v1122, %v1126
        %v1131 = vand.u32 2147483647, %v1105
        %vm1132 = vcmp.eq.f32.partialorder %v1131, 8.507059e+37
        %v1133 = vand.u32 %v1105, 2147483648
        %v1134 = vor.u32 1.1754944e-38, %v1133
        %v1135 = vsel %vm1132, %v1134, %v1130
        %v1136 = vmul.f32 1.0, %v1135
        %v1137 = vrcp.pop %v1106
        %v1138 = vmul.f32 %v1106, %v1137
        %v1139 = vsub.f32 1.0, %v1138
        %v1140 = vmul.f32 %v1137, %v1139
        %v1141 = vadd.f32 %v1137, %v1140
        %vm1142 = vweird.f32 %v1106
        %vm1143 = vweird.f32 %v1137
        %vm1144 = vmor %vm1142, %vm1143
        %v1145 = vsel %vm1144, %v1137, %v1141
        %v1146 = vand.u32 2147483647, %v1106
        %vm1147 = vcmp.eq.f32.partialorder %v1146, 8.507059e+37
        %v1148 = vand.u32 %v1106, 2147483648
        %v1149 = vor.u32 1.1754944e-38, %v1148
        %v1150 = vsel %vm1147, %v1149, %v1145
        %v1151 = vmul.f32 1.0, %v1150
        %v1152 = vtanh.pop %v1093
        %v1153 = vld [vmem:[#allocation3] sm:$0x1]
        %v1154 = vmul.f32 %v1136, %v1153
        %v1155 = vmul.f32 %v1121, %v1152
        %v1156 = vadd.f32 %v1154, %v1155
        %v1157 = vtanh.pop %v1156
        %v1158 = vmul.f32 %v1151, %v1157
        %v1159 = vld [vmem:[#allocation12] sm:$0xff]
        %v1160 = vld [vmem:[#allocation12 + $0x8] sm:$0xff]
        %v1161 = vld [vmem:[#allocation12 + $0x10] sm:$0xff]
        %v1162 = vld [vmem:[#allocation12 + $0x18] sm:$0xff]
        %v1163 = vld [vmem:[#allocation12 + $0x20] sm:$0xff]
        %v1164 = vld [vmem:[#allocation12 + $0x28] sm:$0xff]
        %v1165 = vld [vmem:[#allocation12 + $0x30] sm:$0xff]
        %v1166 = vld [vmem:[#allocation12 + $0x38] sm:$0xff]
        %v1167 = vld [vmem:[#allocation12 + $0x40] sm:$0xff]
        %v1168 = vld [vmem:[#allocation12 + $0x48] sm:$0xff]
        %v1169 = vld [vmem:[#allocation12 + $0x50] sm:$0xff]
        %v1170 = vld [vmem:[#allocation12 + $0x58] sm:$0xff]
        %v1171 = vld [vmem:[#allocation12 + $0x60] sm:$0xff]
        %v1172 = vld [vmem:[#allocation12 + $0x68] sm:$0xff]
        %v1173 = vld [vmem:[#allocation12 + $0x70] sm:$0xff]
        %v1174 = vld [vmem:[#allocation12 + $0x78] sm:$0xff]
        %v1175 = vld [vmem:[%s7] sm:$0x1]
        %1176 = vmatpush.msra.mxu0 %v1174
        %1177 = vmatpush.msra.mxu0 %v1173
        %1178 = vmatpush.msra.mxu0 %v1172
        %1179 = vmatpush.msra.mxu0 %v1171
        %1180 = vmatpush.msra.mxu0 %v1170
        %1181 = vmatpush.msra.mxu0 %v1169
        %1182 = vmatpush.msra.mxu0 %v1168
        %1183 = vmatpush.msra.mxu0 %v1167
        %1184 = vmatpush.msra.mxu0 %v1166
        %1185 = vmatpush.msra.mxu0 %v1165
        %1186 = vmatpush.msra.mxu0 %v1164
        %1187 = vmatpush.msra.mxu0 %v1163
        %1188 = vmatpush.msra.mxu0 %v1162
        %1189 = vmatpush.msra.mxu0 %v1161
        %1190 = vmatpush.msra.mxu0 %v1160
        %1191 = vmatpush.msra.mxu0 %v1159
        %1192 = vmatmul.f32.gmra.mxu0 %v1158
        %v1193 = vpop.f32.mrf.mxu0
        %v1194 = vadd.f32 %v1175, %v1193
        %1195 = vdwg.mxu0
        %1196 = vst [vmem:[%s354 + $0x1] sm:$0x1] %v1194
        %1197 = vst.msk [vmem:[#allocation2 + $0x1] sm:$0x1] %vm376, %v1158
        %1198 = vst [vmem:[#allocation3] sm:$0x1] %v1156
        %s1199 = sadd.s32 %s369, 2
        %s1200 = sld [smem:[#allocation5 + %s1199]]
        %s1201 = scalar_lea.vmem [#allocation6], %s1200
        %v1202 = vld [vmem:[%s1201] sm:$0x1]
        %1203 = vst.msk [vmem:[#allocation2] sm:$0x1] %vm376, %v1202
        %v1204 = vld [vmem:[#allocation2] sm:$0x3]
        %v1205 = vld [vmem:[#allocation9] sm:$0xff]
        %v1206 = vld [vmem:[#allocation9 + $0x8] sm:$0xff]
        %v1207 = vld [vmem:[#allocation9 + $0x10] sm:$0xff]
        %v1208 = vld [vmem:[#allocation9 + $0x18] sm:$0xff]
        %v1209 = vld [vmem:[#allocation9 + $0x20] sm:$0xff]
        %v1210 = vld [vmem:[#allocation9 + $0x28] sm:$0xff]
        %v1211 = vld [vmem:[#allocation9 + $0x30] sm:$0xff]
        %v1212 = vld [vmem:[#allocation9 + $0x38] sm:$0xff]
        %v1213 = vld [vmem:[#allocation9 + $0x40] sm:$0xff]
        %v1214 = vld [vmem:[#allocation9 + $0x48] sm:$0xff]
        %v1215 = vld [vmem:[#allocation9 + $0x50] sm:$0xff]
        %v1216 = vld [vmem:[#allocation9 + $0x58] sm:$0xff]
        %v1217 = vld [vmem:[#allocation9 + $0x60] sm:$0xff]
        %v1218 = vld [vmem:[#allocation9 + $0x68] sm:$0xff]
        %v1219 = vld [vmem:[#allocation9 + $0x70] sm:$0xff]
        %v1220 = vld [vmem:[#allocation9 + $0x78] sm:$0xff]
        %v1221 = vld [vmem:[#allocation9 + $0x80] sm:$0xff]
        %v1222 = vld [vmem:[#allocation9 + $0x88] sm:$0xff]
        %v1223 = vld [vmem:[#allocation9 + $0x90] sm:$0xff]
        %v1224 = vld [vmem:[#allocation9 + $0x98] sm:$0xff]
        %v1225 = vld [vmem:[#allocation9 + $0xa0] sm:$0xff]
        %v1226 = vld [vmem:[#allocation9 + $0xa8] sm:$0xff]
        %v1227 = vld [vmem:[#allocation9 + $0xb0] sm:$0xff]
        %v1228 = vld [vmem:[#allocation9 + $0xb8] sm:$0xff]
        %v1229 = vld [vmem:[#allocation9 + $0xc0] sm:$0xff]
        %v1230 = vld [vmem:[#allocation9 + $0xc8] sm:$0xff]
        %v1231 = vld [vmem:[#allocation9 + $0xd0] sm:$0xff]
        %v1232 = vld [vmem:[#allocation9 + $0xd8] sm:$0xff]
        %v1233 = vld [vmem:[#allocation9 + $0xe0] sm:$0xff]
        %v1234 = vld [vmem:[#allocation9 + $0xe8] sm:$0xff]
        %v1235 = vld [vmem:[#allocation9 + $0xf0] sm:$0xff]
        %v1236 = vld [vmem:[#allocation9 + $0xf8] sm:$0xff]
        %v1237 = vld [vmem:[#allocation9 + $0x100] sm:$0xff]
        %v1238 = vld [vmem:[#allocation9 + $0x108] sm:$0xff]
        %v1239 = vld [vmem:[#allocation9 + $0x110] sm:$0xff]
        %v1240 = vld [vmem:[#allocation9 + $0x118] sm:$0xff]
        %v1241 = vld [vmem:[#allocation9 + $0x120] sm:$0xff]
        %v1242 = vld [vmem:[#allocation9 + $0x128] sm:$0xff]
        %v1243 = vld [vmem:[#allocation9 + $0x130] sm:$0xff]
        %v1244 = vld [vmem:[#allocation9 + $0x138] sm:$0xff]
        %v1245 = vld [vmem:[#allocation9 + $0x140] sm:$0xff]
        %v1246 = vld [vmem:[#allocation9 + $0x148] sm:$0xff]
        %v1247 = vld [vmem:[#allocation9 + $0x150] sm:$0xff]
        %v1248 = vld [vmem:[#allocation9 + $0x158] sm:$0xff]
        %v1249 = vld [vmem:[#allocation9 + $0x160] sm:$0xff]
        %v1250 = vld [vmem:[#allocation9 + $0x168] sm:$0xff]
        %v1251 = vld [vmem:[#allocation9 + $0x170] sm:$0xff]
        %v1252 = vld [vmem:[#allocation9 + $0x178] sm:$0xff]
        %v1253 = vld [vmem:[#allocation9 + $0x180] sm:$0xff]
        %v1254 = vld [vmem:[#allocation9 + $0x188] sm:$0xff]
        %v1255 = vld [vmem:[#allocation9 + $0x190] sm:$0xff]
        %v1256 = vld [vmem:[#allocation9 + $0x198] sm:$0xff]
        %v1257 = vld [vmem:[#allocation9 + $0x1a0] sm:$0xff]
        %v1258 = vld [vmem:[#allocation9 + $0x1a8] sm:$0xff]
        %v1259 = vld [vmem:[#allocation9 + $0x1b0] sm:$0xff]
        %v1260 = vld [vmem:[#allocation9 + $0x1b8] sm:$0xff]
        %v1261 = vld [vmem:[#allocation9 + $0x1c0] sm:$0xff]
        %v1262 = vld [vmem:[#allocation9 + $0x1c8] sm:$0xff]
        %v1263 = vld [vmem:[#allocation9 + $0x1d0] sm:$0xff]
        %v1264 = vld [vmem:[#allocation9 + $0x1d8] sm:$0xff]
        %v1265 = vld [vmem:[#allocation9 + $0x1e0] sm:$0xff]
        %v1266 = vld [vmem:[#allocation9 + $0x1e8] sm:$0xff]
        %v1267 = vld [vmem:[#allocation9 + $0x1f0] sm:$0xff]
        %v1268 = vld [vmem:[#allocation9 + $0x1f8] sm:$0xff]
        %v1269 = vld [vmem:[#allocation9 + $0x200] sm:$0xff]
        %v1270 = vld [vmem:[#allocation9 + $0x208] sm:$0xff]
        %v1271 = vld [vmem:[#allocation9 + $0x210] sm:$0xff]
        %v1272 = vld [vmem:[#allocation9 + $0x218] sm:$0xff]
        %v1273 = vld [vmem:[#allocation9 + $0x220] sm:$0xff]
        %v1274 = vld [vmem:[#allocation9 + $0x228] sm:$0xff]
        %v1275 = vld [vmem:[#allocation9 + $0x230] sm:$0xff]
        %v1276 = vld [vmem:[#allocation9 + $0x238] sm:$0xff]
        %v1277 = vld [vmem:[#allocation9 + $0x240] sm:$0xff]
        %v1278 = vld [vmem:[#allocation9 + $0x248] sm:$0xff]
        %v1279 = vld [vmem:[#allocation9 + $0x250] sm:$0xff]
        %v1280 = vld [vmem:[#allocation9 + $0x258] sm:$0xff]
        %v1281 = vld [vmem:[#allocation9 + $0x260] sm:$0xff]
        %v1282 = vld [vmem:[#allocation9 + $0x268] sm:$0xff]
        %v1283 = vld [vmem:[#allocation9 + $0x270] sm:$0xff]
        %v1284 = vld [vmem:[#allocation9 + $0x278] sm:$0xff]
        %v1285 = vld [vmem:[#allocation9 + $0x280] sm:$0xff]
        %v1286 = vld [vmem:[#allocation9 + $0x288] sm:$0xff]
        %v1287 = vld [vmem:[#allocation9 + $0x290] sm:$0xff]
        %v1288 = vld [vmem:[#allocation9 + $0x298] sm:$0xff]
        %v1289 = vld [vmem:[#allocation9 + $0x2a0] sm:$0xff]
        %v1290 = vld [vmem:[#allocation9 + $0x2a8] sm:$0xff]
        %v1291 = vld [vmem:[#allocation9 + $0x2b0] sm:$0xff]
        %v1292 = vld [vmem:[#allocation9 + $0x2b8] sm:$0xff]
        %v1293 = vld [vmem:[#allocation9 + $0x2c0] sm:$0xff]
        %v1294 = vld [vmem:[#allocation9 + $0x2c8] sm:$0xff]
        %v1295 = vld [vmem:[#allocation9 + $0x2d0] sm:$0xff]
        %v1296 = vld [vmem:[#allocation9 + $0x2d8] sm:$0xff]
        %v1297 = vld [vmem:[#allocation9 + $0x2e0] sm:$0xff]
        %v1298 = vld [vmem:[#allocation9 + $0x2e8] sm:$0xff]
        %v1299 = vld [vmem:[#allocation9 + $0x2f0] sm:$0xff]
        %v1300 = vld [vmem:[#allocation9 + $0x2f8] sm:$0xff]
        %v1301 = vld [vmem:[#allocation9 + $0x300] sm:$0xff]
        %v1302 = vld [vmem:[#allocation9 + $0x308] sm:$0xff]
        %v1303 = vld [vmem:[#allocation9 + $0x310] sm:$0xff]
        %v1304 = vld [vmem:[#allocation9 + $0x318] sm:$0xff]
        %v1305 = vld [vmem:[#allocation9 + $0x320] sm:$0xff]
        %v1306 = vld [vmem:[#allocation9 + $0x328] sm:$0xff]
        %v1307 = vld [vmem:[#allocation9 + $0x330] sm:$0xff]
        %v1308 = vld [vmem:[#allocation9 + $0x338] sm:$0xff]
        %v1309 = vld [vmem:[#allocation9 + $0x340] sm:$0xff]
        %v1310 = vld [vmem:[#allocation9 + $0x348] sm:$0xff]
        %v1311 = vld [vmem:[#allocation9 + $0x350] sm:$0xff]
        %v1312 = vld [vmem:[#allocation9 + $0x358] sm:$0xff]
        %v1313 = vld [vmem:[#allocation9 + $0x360] sm:$0xff]
        %v1314 = vld [vmem:[#allocation9 + $0x368] sm:$0xff]
        %v1315 = vld [vmem:[#allocation9 + $0x370] sm:$0xff]
        %v1316 = vld [vmem:[#allocation9 + $0x378] sm:$0xff]
        %v1317 = vld [vmem:[#allocation9 + $0x380] sm:$0xff]
        %v1318 = vld [vmem:[#allocation9 + $0x388] sm:$0xff]
        %v1319 = vld [vmem:[#allocation9 + $0x390] sm:$0xff]
        %v1320 = vld [vmem:[#allocation9 + $0x398] sm:$0xff]
        %v1321 = vld [vmem:[#allocation9 + $0x3a0] sm:$0xff]
        %v1322 = vld [vmem:[#allocation9 + $0x3a8] sm:$0xff]
        %v1323 = vld [vmem:[#allocation9 + $0x3b0] sm:$0xff]
        %v1324 = vld [vmem:[#allocation9 + $0x3b8] sm:$0xff]
        %v1325 = vld [vmem:[#allocation9 + $0x3c0] sm:$0xff]
        %v1326 = vld [vmem:[#allocation9 + $0x3c8] sm:$0xff]
        %v1327 = vld [vmem:[#allocation9 + $0x3d0] sm:$0xff]
        %v1328 = vld [vmem:[#allocation9 + $0x3d8] sm:$0xff]
        %v1329 = vld [vmem:[#allocation9 + $0x3e0] sm:$0xff]
        %v1330 = vld [vmem:[#allocation9 + $0x3e8] sm:$0xff]
        %v1331 = vld [vmem:[#allocation9 + $0x3f0] sm:$0xff]
        %v1332 = vld [vmem:[#allocation9 + $0x3f8] sm:$0xff]
        %v1333 = vld [vmem:[#allocation11] sm:$0xf]
        %v1335 = vperm.slane %v1204, 0
        %v1336 = vperm.slane %v1204, 1
        %v1340 = vperm.slane %v1333, 0
        %v1341 = vperm.slane %v1333, 1
        %v1342 = vperm.slane %v1333, 2
        %v1343 = vperm.slane %v1333, 3
        %1348 = vmatpush.msra.mxu0 %v1265
        %1349 = vmatpush.msra.mxu0 %v1261
        %1350 = vmatpush.msra.mxu0 %v1257
        %1351 = vmatpush.msra.mxu0 %v1253
        %1352 = vmatpush.msra.mxu0 %v1249
        %1353 = vmatpush.msra.mxu0 %v1245
        %1354 = vmatpush.msra.mxu0 %v1241
        %1355 = vmatpush.msra.mxu0 %v1237
        %1356 = vmatpush.msra.mxu0 %v1233
        %1357 = vmatpush.msra.mxu0 %v1229
        %1358 = vmatpush.msra.mxu0 %v1225
        %1359 = vmatpush.msra.mxu0 %v1221
        %1360 = vmatpush.msra.mxu0 %v1217
        %1361 = vmatpush.msra.mxu0 %v1213
        %1362 = vmatpush.msra.mxu0 %v1209
        %1363 = vmatpush.msra.mxu0 %v1205
        %1364 = vmatmul.f32.gmra.mxu0 %v1335
        %v1365 = vpop.f32.mrf.mxu0
        %v1366 = vadd.f32 %v1340, %v1365
        %1367 = vdwg.mxu0
        %1368 = vmatpush.msra.mxu0 %v1329
        %1369 = vmatpush.msra.mxu0 %v1325
        %1370 = vmatpush.msra.mxu0 %v1321
        %1371 = vmatpush.msra.mxu0 %v1317
        %1372 = vmatpush.msra.mxu0 %v1313
        %1373 = vmatpush.msra.mxu0 %v1309
        %1374 = vmatpush.msra.mxu0 %v1305
        %1375 = vmatpush.msra.mxu0 %v1301
        %1376 = vmatpush.msra.mxu0 %v1297
        %1377 = vmatpush.msra.mxu0 %v1293
        %1378 = vmatpush.msra.mxu0 %v1289
        %1379 = vmatpush.msra.mxu0 %v1285
        %1380 = vmatpush.msra.mxu0 %v1281
        %1381 = vmatpush.msra.mxu0 %v1277
        %1382 = vmatpush.msra.mxu0 %v1273
        %1383 = vmatpush.msra.mxu0 %v1269
        %1384 = vmatmul.f32.gmra.mxu0 %v1336
        %v1385 = vpop.f32.mrf.mxu0
        %v1386 = vadd.f32 %v1366, %v1385
        %1387 = vdwg.mxu0
        %1388 = vmatpush.msra.mxu0 %v1266
        %1389 = vmatpush.msra.mxu0 %v1262
        %1390 = vmatpush.msra.mxu0 %v1258
        %1391 = vmatpush.msra.mxu0 %v1254
        %1392 = vmatpush.msra.mxu0 %v1250
        %1393 = vmatpush.msra.mxu0 %v1246
        %1394 = vmatpush.msra.mxu0 %v1242
        %1395 = vmatpush.msra.mxu0 %v1238
        %1396 = vmatpush.msra.mxu0 %v1234
        %1397 = vmatpush.msra.mxu0 %v1230
        %1398 = vmatpush.msra.mxu0 %v1226
        %1399 = vmatpush.msra.mxu0 %v1222
        %1400 = vmatpush.msra.mxu0 %v1218
        %1401 = vmatpush.msra.mxu0 %v1214
        %1402 = vmatpush.msra.mxu0 %v1210
        %1403 = vmatpush.msra.mxu0 %v1206
        %1404 = vmatmul.f32.gmra.mxu0 %v1335
        %v1405 = vpop.f32.mrf.mxu0
        %v1406 = vadd.f32 %v1341, %v1405
        %1407 = vdwg.mxu0
        %1408 = vmatpush.msra.mxu0 %v1330
        %1409 = vmatpush.msra.mxu0 %v1326
        %1410 = vmatpush.msra.mxu0 %v1322
        %1411 = vmatpush.msra.mxu0 %v1318
        %1412 = vmatpush.msra.mxu0 %v1314
        %1413 = vmatpush.msra.mxu0 %v1310
        %1414 = vmatpush.msra.mxu0 %v1306
        %1415 = vmatpush.msra.mxu0 %v1302
        %1416 = vmatpush.msra.mxu0 %v1298
        %1417 = vmatpush.msra.mxu0 %v1294
        %1418 = vmatpush.msra.mxu0 %v1290
        %1419 = vmatpush.msra.mxu0 %v1286
        %1420 = vmatpush.msra.mxu0 %v1282
        %1421 = vmatpush.msra.mxu0 %v1278
        %1422 = vmatpush.msra.mxu0 %v1274
        %1423 = vmatpush.msra.mxu0 %v1270
        %1424 = vmatmul.f32.gmra.mxu0 %v1336
        %v1425 = vpop.f32.mrf.mxu0
        %v1426 = vadd.f32 %v1406, %v1425
        %1427 = vdwg.mxu0
        %1428 = vmatpush.msra.mxu0 %v1267
        %1429 = vmatpush.msra.mxu0 %v1263
        %1430 = vmatpush.msra.mxu0 %v1259
        %1431 = vmatpush.msra.mxu0 %v1255
        %1432 = vmatpush.msra.mxu0 %v1251
        %1433 = vmatpush.msra.mxu0 %v1247
        %1434 = vmatpush.msra.mxu0 %v1243
        %1435 = vmatpush.msra.mxu0 %v1239
        %1436 = vmatpush.msra.mxu0 %v1235
        %1437 = vmatpush.msra.mxu0 %v1231
        %1438 = vmatpush.msra.mxu0 %v1227
        %1439 = vmatpush.msra.mxu0 %v1223
        %1440 = vmatpush.msra.mxu0 %v1219
        %1441 = vmatpush.msra.mxu0 %v1215
        %1442 = vmatpush.msra.mxu0 %v1211
        %1443 = vmatpush.msra.mxu0 %v1207
        %1444 = vmatmul.f32.gmra.mxu0 %v1335
        %v1445 = vpop.f32.mrf.mxu0
        %v1446 = vadd.f32 %v1342, %v1445
        %1447 = vdwg.mxu0
        %1448 = vmatpush.msra.mxu0 %v1331
        %1449 = vmatpush.msra.mxu0 %v1327
        %1450 = vmatpush.msra.mxu0 %v1323
        %1451 = vmatpush.msra.mxu0 %v1319
        %1452 = vmatpush.msra.mxu0 %v1315
        %1453 = vmatpush.msra.mxu0 %v1311
        %1454 = vmatpush.msra.mxu0 %v1307
        %1455 = vmatpush.msra.mxu0 %v1303
        %1456 = vmatpush.msra.mxu0 %v1299
        %1457 = vmatpush.msra.mxu0 %v1295
        %1458 = vmatpush.msra.mxu0 %v1291
        %1459 = vmatpush.msra.mxu0 %v1287
        %1460 = vmatpush.msra.mxu0 %v1283
        %1461 = vmatpush.msra.mxu0 %v1279
        %1462 = vmatpush.msra.mxu0 %v1275
        %1463 = vmatpush.msra.mxu0 %v1271
        %1464 = vmatmul.f32.gmra.mxu0 %v1336
        %v1465 = vpop.f32.mrf.mxu0
        %v1466 = vadd.f32 %v1446, %v1465
        %1467 = vdwg.mxu0
        %1468 = vmatpush.msra.mxu0 %v1268
        %1469 = vmatpush.msra.mxu0 %v1264
        %1470 = vmatpush.msra.mxu0 %v1260
        %1471 = vmatpush.msra.mxu0 %v1256
        %1472 = vmatpush.msra.mxu0 %v1252
        %1473 = vmatpush.msra.mxu0 %v1248
        %1474 = vmatpush.msra.mxu0 %v1244
        %1475 = vmatpush.msra.mxu0 %v1240
        %1476 = vmatpush.msra.mxu0 %v1236
        %1477 = vmatpush.msra.mxu0 %v1232
        %1478 = vmatpush.msra.mxu0 %v1228
        %1479 = vmatpush.msra.mxu0 %v1224
        %1480 = vmatpush.msra.mxu0 %v1220
        %1481 = vmatpush.msra.mxu0 %v1216
        %1482 = vmatpush.msra.mxu0 %v1212
        %1483 = vmatpush.msra.mxu0 %v1208
        %1484 = vmatmul.f32.gmra.mxu0 %v1335
        %v1485 = vpop.f32.mrf.mxu0
        %v1486 = vadd.f32 %v1343, %v1485
        %1487 = vdwg.mxu0
        %1488 = vmatpush.msra.mxu0 %v1332
        %1489 = vmatpush.msra.mxu0 %v1328
        %1490 = vmatpush.msra.mxu0 %v1324
        %1491 = vmatpush.msra.mxu0 %v1320
        %1492 = vmatpush.msra.mxu0 %v1316
        %1493 = vmatpush.msra.mxu0 %v1312
        %1494 = vmatpush.msra.mxu0 %v1308
        %1495 = vmatpush.msra.mxu0 %v1304
        %1496 = vmatpush.msra.mxu0 %v1300
        %1497 = vmatpush.msra.mxu0 %v1296
        %1498 = vmatpush.msra.mxu0 %v1292
        %1499 = vmatpush.msra.mxu0 %v1288
        %1500 = vmatpush.msra.mxu0 %v1284
        %1501 = vmatpush.msra.mxu0 %v1280
        %1502 = vmatpush.msra.mxu0 %v1276
        %1503 = vmatpush.msra.mxu0 %v1272
        %1504 = vmatmul.f32.gmra.mxu0 %v1336
        %v1505 = vpop.f32.mrf.mxu0
        %v1506 = vadd.f32 %v1486, %v1505
        %1507 = vdwg.mxu0
        %v1508 = vxor.u32 %v1386, 2147483648
        %v1509 = vxor.u32 %v1426, 2147483648
        %v1510 = vxor.u32 %v1466, 2147483648
        %v1511 = vmul.f32 %v1508, 1.442695
        %v1512 = vpow.pop %v1511
        %v1513 = vmul.f32 %v1509, 1.442695
        %v1514 = vpow.pop %v1513
        %v1515 = vmul.f32 %v1510, 1.442695
        %v1516 = vpow.pop %v1515
        %v1517 = vadd.f32 %v1512, 1.0
        %v1518 = vadd.f32 %v1514, 1.0
        %v1519 = vadd.f32 %v1516, 1.0
        %v1520 = vrcp.pop %v1517
        %v1521 = vmul.f32 %v1517, %v1520
        %v1522 = vsub.f32 1.0, %v1521
        %v1523 = vmul.f32 %v1520, %v1522
        %v1524 = vadd.f32 %v1520, %v1523
        %vm1525 = vweird.f32 %v1517
        %vm1526 = vweird.f32 %v1520
        %vm1527 = vmor %vm1525, %vm1526
        %v1528 = vsel %vm1527, %v1520, %v1524
        %v1529 = vand.u32 2147483647, %v1517
        %vm1530 = vcmp.eq.f32.partialorder %v1529, 8.507059e+37
        %v1531 = vand.u32 %v1517, 2147483648
        %v1532 = vor.u32 1.1754944e-38, %v1531
        %v1533 = vsel %vm1530, %v1532, %v1528
        %v1534 = vmul.f32 1.0, %v1533
        %v1535 = vrcp.pop %v1518
        %v1536 = vmul.f32 %v1518, %v1535
        %v1537 = vsub.f32 1.0, %v1536
        %v1538 = vmul.f32 %v1535, %v1537
        %v1539 = vadd.f32 %v1535, %v1538
        %vm1540 = vweird.f32 %v1518
        %vm1541 = vweird.f32 %v1535
        %vm1542 = vmor %vm1540, %vm1541
        %v1543 = vsel %vm1542, %v1535, %v1539
        %v1544 = vand.u32 2147483647, %v1518
        %vm1545 = vcmp.eq.f32.partialorder %v1544, 8.507059e+37
        %v1546 = vand.u32 %v1518, 2147483648
        %v1547 = vor.u32 1.1754944e-38, %v1546
        %v1548 = vsel %vm1545, %v1547, %v1543
        %v1549 = vmul.f32 1.0, %v1548
        %v1550 = vrcp.pop %v1519
        %v1551 = vmul.f32 %v1519, %v1550
        %v1552 = vsub.f32 1.0, %v1551
        %v1553 = vmul.f32 %v1550, %v1552
        %v1554 = vadd.f32 %v1550, %v1553
        %vm1555 = vweird.f32 %v1519
        %vm1556 = vweird.f32 %v1550
        %vm1557 = vmor %vm1555, %vm1556
        %v1558 = vsel %vm1557, %v1550, %v1554
        %v1559 = vand.u32 2147483647, %v1519
        %vm1560 = vcmp.eq.f32.partialorder %v1559, 8.507059e+37
        %v1561 = vand.u32 %v1519, 2147483648
        %v1562 = vor.u32 1.1754944e-38, %v1561
        %v1563 = vsel %vm1560, %v1562, %v1558
        %v1564 = vmul.f32 1.0, %v1563
        %v1565 = vtanh.pop %v1506
        %v1566 = vld [vmem:[#allocation3] sm:$0x1]
        %v1567 = vmul.f32 %v1549, %v1566
        %v1568 = vmul.f32 %v1534, %v1565
        %v1569 = vadd.f32 %v1567, %v1568
        %v1570 = vtanh.pop %v1569
        %v1571 = vmul.f32 %v1564, %v1570
        %v1572 = vld [vmem:[#allocation12] sm:$0xff]
        %v1573 = vld [vmem:[#allocation12 + $0x8] sm:$0xff]
        %v1574 = vld [vmem:[#allocation12 + $0x10] sm:$0xff]
        %v1575 = vld [vmem:[#allocation12 + $0x18] sm:$0xff]
        %v1576 = vld [vmem:[#allocation12 + $0x20] sm:$0xff]
        %v1577 = vld [vmem:[#allocation12 + $0x28] sm:$0xff]
        %v1578 = vld [vmem:[#allocation12 + $0x30] sm:$0xff]
        %v1579 = vld [vmem:[#allocation12 + $0x38] sm:$0xff]
        %v1580 = vld [vmem:[#allocation12 + $0x40] sm:$0xff]
        %v1581 = vld [vmem:[#allocation12 + $0x48] sm:$0xff]
        %v1582 = vld [vmem:[#allocation12 + $0x50] sm:$0xff]
        %v1583 = vld [vmem:[#allocation12 + $0x58] sm:$0xff]
        %v1584 = vld [vmem:[#allocation12 + $0x60] sm:$0xff]
        %v1585 = vld [vmem:[#allocation12 + $0x68] sm:$0xff]
        %v1586 = vld [vmem:[#allocation12 + $0x70] sm:$0xff]
        %v1587 = vld [vmem:[#allocation12 + $0x78] sm:$0xff]
        %v1588 = vld [vmem:[%s7] sm:$0x1]
        %1589 = vmatpush.msra.mxu0 %v1587
        %1590 = vmatpush.msra.mxu0 %v1586
        %1591 = vmatpush.msra.mxu0 %v1585
        %1592 = vmatpush.msra.mxu0 %v1584
        %1593 = vmatpush.msra.mxu0 %v1583
        %1594 = vmatpush.msra.mxu0 %v1582
        %1595 = vmatpush.msra.mxu0 %v1581
        %1596 = vmatpush.msra.mxu0 %v1580
        %1597 = vmatpush.msra.mxu0 %v1579
        %1598 = vmatpush.msra.mxu0 %v1578
        %1599 = vmatpush.msra.mxu0 %v1577
        %1600 = vmatpush.msra.mxu0 %v1576
        %1601 = vmatpush.msra.mxu0 %v1575
        %1602 = vmatpush.msra.mxu0 %v1574
        %1603 = vmatpush.msra.mxu0 %v1573
        %1604 = vmatpush.msra.mxu0 %v1572
        %1605 = vmatmul.f32.gmra.mxu0 %v1571
        %v1606 = vpop.f32.mrf.mxu0
        %v1607 = vadd.f32 %v1588, %v1606
        %1608 = vdwg.mxu0
        %1609 = vst [vmem:[%s354 + $0x2] sm:$0x1] %v1607
        %1610 = vst.msk [vmem:[#allocation2 + $0x1] sm:$0x1] %vm376, %v1571
        %1611 = vst [vmem:[#allocation3] sm:$0x1] %v1569
        %s1612 = sadd.s32 %s369, 3
        %s1613 = sld [smem:[#allocation5 + %s1612]]
        %s1614 = scalar_lea.vmem [#allocation6], %s1613
        %v1615 = vld [vmem:[%s1614] sm:$0x1]
        %1616 = vst.msk [vmem:[#allocation2] sm:$0x1] %vm376, %v1615
        %v1617 = vld [vmem:[#allocation2] sm:$0x3]
        %v1618 = vld [vmem:[#allocation9] sm:$0xff]
        %v1619 = vld [vmem:[#allocation9 + $0x8] sm:$0xff]
        %v1620 = vld [vmem:[#allocation9 + $0x10] sm:$0xff]
        %v1621 = vld [vmem:[#allocation9 + $0x18] sm:$0xff]
        %v1622 = vld [vmem:[#allocation9 + $0x20] sm:$0xff]
        %v1623 = vld [vmem:[#allocation9 + $0x28] sm:$0xff]
        %v1624 = vld [vmem:[#allocation9 + $0x30] sm:$0xff]
        %v1625 = vld [vmem:[#allocation9 + $0x38] sm:$0xff]
        %v1626 = vld [vmem:[#allocation9 + $0x40] sm:$0xff]
        %v1627 = vld [vmem:[#allocation9 + $0x48] sm:$0xff]
        %v1628 = vld [vmem:[#allocation9 + $0x50] sm:$0xff]
        %v1629 = vld [vmem:[#allocation9 + $0x58] sm:$0xff]
        %v1630 = vld [vmem:[#allocation9 + $0x60] sm:$0xff]
        %v1631 = vld [vmem:[#allocation9 + $0x68] sm:$0xff]
        %v1632 = vld [vmem:[#allocation9 + $0x70] sm:$0xff]
        %v1633 = vld [vmem:[#allocation9 + $0x78] sm:$0xff]
        %v1634 = vld [vmem:[#allocation9 + $0x80] sm:$0xff]
        %v1635 = vld [vmem:[#allocation9 + $0x88] sm:$0xff]
        %v1636 = vld [vmem:[#allocation9 + $0x90] sm:$0xff]
        %v1637 = vld [vmem:[#allocation9 + $0x98] sm:$0xff]
        %v1638 = vld [vmem:[#allocation9 + $0xa0] sm:$0xff]
        %v1639 = vld [vmem:[#allocation9 + $0xa8] sm:$0xff]
        %v1640 = vld [vmem:[#allocation9 + $0xb0] sm:$0xff]
        %v1641 = vld [vmem:[#allocation9 + $0xb8] sm:$0xff]
        %v1642 = vld [vmem:[#allocation9 + $0xc0] sm:$0xff]
        %v1643 = vld [vmem:[#allocation9 + $0xc8] sm:$0xff]
        %v1644 = vld [vmem:[#allocation9 + $0xd0] sm:$0xff]
        %v1645 = vld [vmem:[#allocation9 + $0xd8] sm:$0xff]
        %v1646 = vld [vmem:[#allocation9 + $0xe0] sm:$0xff]
        %v1647 = vld [vmem:[#allocation9 + $0xe8] sm:$0xff]
        %v1648 = vld [vmem:[#allocation9 + $0xf0] sm:$0xff]
        %v1649 = vld [vmem:[#allocation9 + $0xf8] sm:$0xff]
        %v1650 = vld [vmem:[#allocation9 + $0x100] sm:$0xff]
        %v1651 = vld [vmem:[#allocation9 + $0x108] sm:$0xff]
        %v1652 = vld [vmem:[#allocation9 + $0x110] sm:$0xff]
        %v1653 = vld [vmem:[#allocation9 + $0x118] sm:$0xff]
        %v1654 = vld [vmem:[#allocation9 + $0x120] sm:$0xff]
        %v1655 = vld [vmem:[#allocation9 + $0x128] sm:$0xff]
        %v1656 = vld [vmem:[#allocation9 + $0x130] sm:$0xff]
        %v1657 = vld [vmem:[#allocation9 + $0x138] sm:$0xff]
        %v1658 = vld [vmem:[#allocation9 + $0x140] sm:$0xff]
        %v1659 = vld [vmem:[#allocation9 + $0x148] sm:$0xff]
        %v1660 = vld [vmem:[#allocation9 + $0x150] sm:$0xff]
        %v1661 = vld [vmem:[#allocation9 + $0x158] sm:$0xff]
        %v1662 = vld [vmem:[#allocation9 + $0x160] sm:$0xff]
        %v1663 = vld [vmem:[#allocation9 + $0x168] sm:$0xff]
        %v1664 = vld [vmem:[#allocation9 + $0x170] sm:$0xff]
        %v1665 = vld [vmem:[#allocation9 + $0x178] sm:$0xff]
        %v1666 = vld [vmem:[#allocation9 + $0x180] sm:$0xff]
        %v1667 = vld [vmem:[#allocation9 + $0x188] sm:$0xff]
        %v1668 = vld [vmem:[#allocation9 + $0x190] sm:$0xff]
        %v1669 = vld [vmem:[#allocation9 + $0x198] sm:$0xff]
        %v1670 = vld [vmem:[#allocation9 + $0x1a0] sm:$0xff]
        %v1671 = vld [vmem:[#allocation9 + $0x1a8] sm:$0xff]
        %v1672 = vld [vmem:[#allocation9 + $0x1b0] sm:$0xff]
        %v1673 = vld [vmem:[#allocation9 + $0x1b8] sm:$0xff]
        %v1674 = vld [vmem:[#allocation9 + $0x1c0] sm:$0xff]
        %v1675 = vld [vmem:[#allocation9 + $0x1c8] sm:$0xff]
        %v1676 = vld [vmem:[#allocation9 + $0x1d0] sm:$0xff]
        %v1677 = vld [vmem:[#allocation9 + $0x1d8] sm:$0xff]
        %v1678 = vld [vmem:[#allocation9 + $0x1e0] sm:$0xff]
        %v1679 = vld [vmem:[#allocation9 + $0x1e8] sm:$0xff]
        %v1680 = vld [vmem:[#allocation9 + $0x1f0] sm:$0xff]
        %v1681 = vld [vmem:[#allocation9 + $0x1f8] sm:$0xff]
        %v1682 = vld [vmem:[#allocation9 + $0x200] sm:$0xff]
        %v1683 = vld [vmem:[#allocation9 + $0x208] sm:$0xff]
        %v1684 = vld [vmem:[#allocation9 + $0x210] sm:$0xff]
        %v1685 = vld [vmem:[#allocation9 + $0x218] sm:$0xff]
        %v1686 = vld [vmem:[#allocation9 + $0x220] sm:$0xff]
        %v1687 = vld [vmem:[#allocation9 + $0x228] sm:$0xff]
        %v1688 = vld [vmem:[#allocation9 + $0x230] sm:$0xff]
        %v1689 = vld [vmem:[#allocation9 + $0x238] sm:$0xff]
        %v1690 = vld [vmem:[#allocation9 + $0x240] sm:$0xff]
        %v1691 = vld [vmem:[#allocation9 + $0x248] sm:$0xff]
        %v1692 = vld [vmem:[#allocation9 + $0x250] sm:$0xff]
        %v1693 = vld [vmem:[#allocation9 + $0x258] sm:$0xff]
        %v1694 = vld [vmem:[#allocation9 + $0x260] sm:$0xff]
        %v1695 = vld [vmem:[#allocation9 + $0x268] sm:$0xff]
        %v1696 = vld [vmem:[#allocation9 + $0x270] sm:$0xff]
        %v1697 = vld [vmem:[#allocation9 + $0x278] sm:$0xff]
        %v1698 = vld [vmem:[#allocation9 + $0x280] sm:$0xff]
        %v1699 = vld [vmem:[#allocation9 + $0x288] sm:$0xff]
        %v1700 = vld [vmem:[#allocation9 + $0x290] sm:$0xff]
        %v1701 = vld [vmem:[#allocation9 + $0x298] sm:$0xff]
        %v1702 = vld [vmem:[#allocation9 + $0x2a0] sm:$0xff]
        %v1703 = vld [vmem:[#allocation9 + $0x2a8] sm:$0xff]
        %v1704 = vld [vmem:[#allocation9 + $0x2b0] sm:$0xff]
        %v1705 = vld [vmem:[#allocation9 + $0x2b8] sm:$0xff]
        %v1706 = vld [vmem:[#allocation9 + $0x2c0] sm:$0xff]
        %v1707 = vld [vmem:[#allocation9 + $0x2c8] sm:$0xff]
        %v1708 = vld [vmem:[#allocation9 + $0x2d0] sm:$0xff]
        %v1709 = vld [vmem:[#allocation9 + $0x2d8] sm:$0xff]
        %v1710 = vld [vmem:[#allocation9 + $0x2e0] sm:$0xff]
        %v1711 = vld [vmem:[#allocation9 + $0x2e8] sm:$0xff]
        %v1712 = vld [vmem:[#allocation9 + $0x2f0] sm:$0xff]
        %v1713 = vld [vmem:[#allocation9 + $0x2f8] sm:$0xff]
        %v1714 = vld [vmem:[#allocation9 + $0x300] sm:$0xff]
        %v1715 = vld [vmem:[#allocation9 + $0x308] sm:$0xff]
        %v1716 = vld [vmem:[#allocation9 + $0x310] sm:$0xff]
        %v1717 = vld [vmem:[#allocation9 + $0x318] sm:$0xff]
        %v1718 = vld [vmem:[#allocation9 + $0x320] sm:$0xff]
        %v1719 = vld [vmem:[#allocation9 + $0x328] sm:$0xff]
        %v1720 = vld [vmem:[#allocation9 + $0x330] sm:$0xff]
        %v1721 = vld [vmem:[#allocation9 + $0x338] sm:$0xff]
        %v1722 = vld [vmem:[#allocation9 + $0x340] sm:$0xff]
        %v1723 = vld [vmem:[#allocation9 + $0x348] sm:$0xff]
        %v1724 = vld [vmem:[#allocation9 + $0x350] sm:$0xff]
        %v1725 = vld [vmem:[#allocation9 + $0x358] sm:$0xff]
        %v1726 = vld [vmem:[#allocation9 + $0x360] sm:$0xff]
        %v1727 = vld [vmem:[#allocation9 + $0x368] sm:$0xff]
        %v1728 = vld [vmem:[#allocation9 + $0x370] sm:$0xff]
        %v1729 = vld [vmem:[#allocation9 + $0x378] sm:$0xff]
        %v1730 = vld [vmem:[#allocation9 + $0x380] sm:$0xff]
        %v1731 = vld [vmem:[#allocation9 + $0x388] sm:$0xff]
        %v1732 = vld [vmem:[#allocation9 + $0x390] sm:$0xff]
        %v1733 = vld [vmem:[#allocation9 + $0x398] sm:$0xff]
        %v1734 = vld [vmem:[#allocation9 + $0x3a0] sm:$0xff]
        %v1735 = vld [vmem:[#allocation9 + $0x3a8] sm:$0xff]
        %v1736 = vld [vmem:[#allocation9 + $0x3b0] sm:$0xff]
        %v1737 = vld [vmem:[#allocation9 + $0x3b8] sm:$0xff]
        %v1738 = vld [vmem:[#allocation9 + $0x3c0] sm:$0xff]
        %v1739 = vld [vmem:[#allocation9 + $0x3c8] sm:$0xff]
        %v1740 = vld [vmem:[#allocation9 + $0x3d0] sm:$0xff]
        %v1741 = vld [vmem:[#allocation9 + $0x3d8] sm:$0xff]
        %v1742 = vld [vmem:[#allocation9 + $0x3e0] sm:$0xff]
        %v1743 = vld [vmem:[#allocation9 + $0x3e8] sm:$0xff]
        %v1744 = vld [vmem:[#allocation9 + $0x3f0] sm:$0xff]
        %v1745 = vld [vmem:[#allocation9 + $0x3f8] sm:$0xff]
        %v1746 = vld [vmem:[#allocation11] sm:$0xf]
        %v1748 = vperm.slane %v1617, 0
        %v1749 = vperm.slane %v1617, 1
        %v1753 = vperm.slane %v1746, 0
        %v1754 = vperm.slane %v1746, 1
        %v1755 = vperm.slane %v1746, 2
        %v1756 = vperm.slane %v1746, 3
        %1761 = vmatpush.msra.mxu0 %v1678
        %1762 = vmatpush.msra.mxu0 %v1674
        %1763 = vmatpush.msra.mxu0 %v1670
        %1764 = vmatpush.msra.mxu0 %v1666
        %1765 = vmatpush.msra.mxu0 %v1662
        %1766 = vmatpush.msra.mxu0 %v1658
        %1767 = vmatpush.msra.mxu0 %v1654
        %1768 = vmatpush.msra.mxu0 %v1650
        %1769 = vmatpush.msra.mxu0 %v1646
        %1770 = vmatpush.msra.mxu0 %v1642
        %1771 = vmatpush.msra.mxu0 %v1638
        %1772 = vmatpush.msra.mxu0 %v1634
        %1773 = vmatpush.msra.mxu0 %v1630
        %1774 = vmatpush.msra.mxu0 %v1626
        %1775 = vmatpush.msra.mxu0 %v1622
        %1776 = vmatpush.msra.mxu0 %v1618
        %1777 = vmatmul.f32.gmra.mxu0 %v1748
        %v1778 = vpop.f32.mrf.mxu0
        %v1779 = vadd.f32 %v1753, %v1778
        %1780 = vdwg.mxu0
        %1781 = vmatpush.msra.mxu0 %v1742
        %1782 = vmatpush.msra.mxu0 %v1738
        %1783 = vmatpush.msra.mxu0 %v1734
        %1784 = vmatpush.msra.mxu0 %v1730
        %1785 = vmatpush.msra.mxu0 %v1726
        %1786 = vmatpush.msra.mxu0 %v1722
        %1787 = vmatpush.msra.mxu0 %v1718
        %1788 = vmatpush.msra.mxu0 %v1714
        %1789 = vmatpush.msra.mxu0 %v1710
        %1790 = vmatpush.msra.mxu0 %v1706
        %1791 = vmatpush.msra.mxu0 %v1702
        %1792 = vmatpush.msra.mxu0 %v1698
        %1793 = vmatpush.msra.mxu0 %v1694
        %1794 = vmatpush.msra.mxu0 %v1690
        %1795 = vmatpush.msra.mxu0 %v1686
        %1796 = vmatpush.msra.mxu0 %v1682
        %1797 = vmatmul.f32.gmra.mxu0 %v1749
        %v1798 = vpop.f32.mrf.mxu0
        %v1799 = vadd.f32 %v1779, %v1798
        %1800 = vdwg.mxu0
        %1801 = vmatpush.msra.mxu0 %v1679
        %1802 = vmatpush.msra.mxu0 %v1675
        %1803 = vmatpush.msra.mxu0 %v1671
        %1804 = vmatpush.msra.mxu0 %v1667
        %1805 = vmatpush.msra.mxu0 %v1663
        %1806 = vmatpush.msra.mxu0 %v1659
        %1807 = vmatpush.msra.mxu0 %v1655
        %1808 = vmatpush.msra.mxu0 %v1651
        %1809 = vmatpush.msra.mxu0 %v1647
        %1810 = vmatpush.msra.mxu0 %v1643
        %1811 = vmatpush.msra.mxu0 %v1639
        %1812 = vmatpush.msra.mxu0 %v1635
        %1813 = vmatpush.msra.mxu0 %v1631
        %1814 = vmatpush.msra.mxu0 %v1627
        %1815 = vmatpush.msra.mxu0 %v1623
        %1816 = vmatpush.msra.mxu0 %v1619
        %1817 = vmatmul.f32.gmra.mxu0 %v1748
        %v1818 = vpop.f32.mrf.mxu0
        %v1819 = vadd.f32 %v1754, %v1818
        %1820 = vdwg.mxu0
        %1821 = vmatpush.msra.mxu0 %v1743
        %1822 = vmatpush.msra.mxu0 %v1739
        %1823 = vmatpush.msra.mxu0 %v1735
        %1824 = vmatpush.msra.mxu0 %v1731
        %1825 = vmatpush.msra.mxu0 %v1727
        %1826 = vmatpush.msra.mxu0 %v1723
        %1827 = vmatpush.msra.mxu0 %v1719
        %1828 = vmatpush.msra.mxu0 %v1715
        %1829 = vmatpush.msra.mxu0 %v1711
        %1830 = vmatpush.msra.mxu0 %v1707
        %1831 = vmatpush.msra.mxu0 %v1703
        %1832 = vmatpush.msra.mxu0 %v1699
        %1833 = vmatpush.msra.mxu0 %v1695
        %1834 = vmatpush.msra.mxu0 %v1691
        %1835 = vmatpush.msra.mxu0 %v1687
        %1836 = vmatpush.msra.mxu0 %v1683
        %1837 = vmatmul.f32.gmra.mxu0 %v1749
        %v1838 = vpop.f32.mrf.mxu0
        %v1839 = vadd.f32 %v1819, %v1838
        %1840 = vdwg.mxu0
        %1841 = vmatpush.msra.mxu0 %v1680
        %1842 = vmatpush.msra.mxu0 %v1676
        %1843 = vmatpush.msra.mxu0 %v1672
        %1844 = vmatpush.msra.mxu0 %v1668
        %1845 = vmatpush.msra.mxu0 %v1664
        %1846 = vmatpush.msra.mxu0 %v1660
        %1847 = vmatpush.msra.mxu0 %v1656
        %1848 = vmatpush.msra.mxu0 %v1652
        %1849 = vmatpush.msra.mxu0 %v1648
        %1850 = vmatpush.msra.mxu0 %v1644
        %1851 = vmatpush.msra.mxu0 %v1640
        %1852 = vmatpush.msra.mxu0 %v1636
        %1853 = vmatpush.msra.mxu0 %v1632
        %1854 = vmatpush.msra.mxu0 %v1628
        %1855 = vmatpush.msra.mxu0 %v1624
        %1856 = vmatpush.msra.mxu0 %v1620
        %1857 = vmatmul.f32.gmra.mxu0 %v1748
        %v1858 = vpop.f32.mrf.mxu0
        %v1859 = vadd.f32 %v1755, %v1858
        %1860 = vdwg.mxu0
        %1861 = vmatpush.msra.mxu0 %v1744
        %1862 = vmatpush.msra.mxu0 %v1740
        %1863 = vmatpush.msra.mxu0 %v1736
        %1864 = vmatpush.msra.mxu0 %v1732
        %1865 = vmatpush.msra.mxu0 %v1728
        %1866 = vmatpush.msra.mxu0 %v1724
        %1867 = vmatpush.msra.mxu0 %v1720
        %1868 = vmatpush.msra.mxu0 %v1716
        %1869 = vmatpush.msra.mxu0 %v1712
        %1870 = vmatpush.msra.mxu0 %v1708
        %1871 = vmatpush.msra.mxu0 %v1704
        %1872 = vmatpush.msra.mxu0 %v1700
        %1873 = vmatpush.msra.mxu0 %v1696
        %1874 = vmatpush.msra.mxu0 %v1692
        %1875 = vmatpush.msra.mxu0 %v1688
        %1876 = vmatpush.msra.mxu0 %v1684
        %1877 = vmatmul.f32.gmra.mxu0 %v1749
        %v1878 = vpop.f32.mrf.mxu0
        %v1879 = vadd.f32 %v1859, %v1878
        %1880 = vdwg.mxu0
        %1881 = vmatpush.msra.mxu0 %v1681
        %1882 = vmatpush.msra.mxu0 %v1677
        %1883 = vmatpush.msra.mxu0 %v1673
        %1884 = vmatpush.msra.mxu0 %v1669
        %1885 = vmatpush.msra.mxu0 %v1665
        %1886 = vmatpush.msra.mxu0 %v1661
        %1887 = vmatpush.msra.mxu0 %v1657
        %1888 = vmatpush.msra.mxu0 %v1653
        %1889 = vmatpush.msra.mxu0 %v1649
        %1890 = vmatpush.msra.mxu0 %v1645
        %1891 = vmatpush.msra.mxu0 %v1641
        %1892 = vmatpush.msra.mxu0 %v1637
        %1893 = vmatpush.msra.mxu0 %v1633
        %1894 = vmatpush.msra.mxu0 %v1629
        %1895 = vmatpush.msra.mxu0 %v1625
        %1896 = vmatpush.msra.mxu0 %v1621
        %1897 = vmatmul.f32.gmra.mxu0 %v1748
        %v1898 = vpop.f32.mrf.mxu0
        %v1899 = vadd.f32 %v1756, %v1898
        %1900 = vdwg.mxu0
        %1901 = vmatpush.msra.mxu0 %v1745
        %1902 = vmatpush.msra.mxu0 %v1741
        %1903 = vmatpush.msra.mxu0 %v1737
        %1904 = vmatpush.msra.mxu0 %v1733
        %1905 = vmatpush.msra.mxu0 %v1729
        %1906 = vmatpush.msra.mxu0 %v1725
        %1907 = vmatpush.msra.mxu0 %v1721
        %1908 = vmatpush.msra.mxu0 %v1717
        %1909 = vmatpush.msra.mxu0 %v1713
        %1910 = vmatpush.msra.mxu0 %v1709
        %1911 = vmatpush.msra.mxu0 %v1705
        %1912 = vmatpush.msra.mxu0 %v1701
        %1913 = vmatpush.msra.mxu0 %v1697
        %1914 = vmatpush.msra.mxu0 %v1693
        %1915 = vmatpush.msra.mxu0 %v1689
        %1916 = vmatpush.msra.mxu0 %v1685
        %1917 = vmatmul.f32.gmra.mxu0 %v1749
        %v1918 = vpop.f32.mrf.mxu0
        %v1919 = vadd.f32 %v1899, %v1918
        %1920 = vdwg.mxu0
        %v1921 = vxor.u32 %v1799, 2147483648
        %v1922 = vxor.u32 %v1839, 2147483648
        %v1923 = vxor.u32 %v1879, 2147483648
        %v1924 = vmul.f32 %v1921, 1.442695
        %v1925 = vpow.pop %v1924
        %v1926 = vmul.f32 %v1922, 1.442695
        %v1927 = vpow.pop %v1926
        %v1928 = vmul.f32 %v1923, 1.442695
        %v1929 = vpow.pop %v1928
        %v1930 = vadd.f32 %v1925, 1.0
        %v1931 = vadd.f32 %v1927, 1.0
        %v1932 = vadd.f32 %v1929, 1.0
        %v1933 = vrcp.pop %v1930
        %v1934 = vmul.f32 %v1930, %v1933
        %v1935 = vsub.f32 1.0, %v1934
        %v1936 = vmul.f32 %v1933, %v1935
        %v1937 = vadd.f32 %v1933, %v1936
        %vm1938 = vweird.f32 %v1930
        %vm1939 = vweird.f32 %v1933
        %vm1940 = vmor %vm1938, %vm1939
        %v1941 = vsel %vm1940, %v1933, %v1937
        %v1942 = vand.u32 2147483647, %v1930
        %vm1943 = vcmp.eq.f32.partialorder %v1942, 8.507059e+37
        %v1944 = vand.u32 %v1930, 2147483648
        %v1945 = vor.u32 1.1754944e-38, %v1944
        %v1946 = vsel %vm1943, %v1945, %v1941
        %v1947 = vmul.f32 1.0, %v1946
        %v1948 = vrcp.pop %v1931
        %v1949 = vmul.f32 %v1931, %v1948
        %v1950 = vsub.f32 1.0, %v1949
        %v1951 = vmul.f32 %v1948, %v1950
        %v1952 = vadd.f32 %v1948, %v1951
        %vm1953 = vweird.f32 %v1931
        %vm1954 = vweird.f32 %v1948
        %vm1955 = vmor %vm1953, %vm1954
        %v1956 = vsel %vm1955, %v1948, %v1952
        %v1957 = vand.u32 2147483647, %v1931
        %vm1958 = vcmp.eq.f32.partialorder %v1957, 8.507059e+37
        %v1959 = vand.u32 %v1931, 2147483648
        %v1960 = vor.u32 1.1754944e-38, %v1959
        %v1961 = vsel %vm1958, %v1960, %v1956
        %v1962 = vmul.f32 1.0, %v1961
        %v1963 = vrcp.pop %v1932
        %v1964 = vmul.f32 %v1932, %v1963
        %v1965 = vsub.f32 1.0, %v1964
        %v1966 = vmul.f32 %v1963, %v1965
        %v1967 = vadd.f32 %v1963, %v1966
        %vm1968 = vweird.f32 %v1932
        %vm1969 = vweird.f32 %v1963
        %vm1970 = vmor %vm1968, %vm1969
        %v1971 = vsel %vm1970, %v1963, %v1967
        %v1972 = vand.u32 2147483647, %v1932
        %vm1973 = vcmp.eq.f32.partialorder %v1972, 8.507059e+37
        %v1974 = vand.u32 %v1932, 2147483648
        %v1975 = vor.u32 1.1754944e-38, %v1974
        %v1976 = vsel %vm1973, %v1975, %v1971
        %v1977 = vmul.f32 1.0, %v1976
        %v1978 = vtanh.pop %v1919
        %v1979 = vld [vmem:[#allocation3] sm:$0x1]
        %v1980 = vmul.f32 %v1962, %v1979
        %v1981 = vmul.f32 %v1947, %v1978
        %v1982 = vadd.f32 %v1980, %v1981
        %v1983 = vtanh.pop %v1982
        %v1984 = vmul.f32 %v1977, %v1983
        %v1985 = vld [vmem:[#allocation12] sm:$0xff]
        %v1986 = vld [vmem:[#allocation12 + $0x8] sm:$0xff]
        %v1987 = vld [vmem:[#allocation12 + $0x10] sm:$0xff]
        %v1988 = vld [vmem:[#allocation12 + $0x18] sm:$0xff]
        %v1989 = vld [vmem:[#allocation12 + $0x20] sm:$0xff]
        %v1990 = vld [vmem:[#allocation12 + $0x28] sm:$0xff]
        %v1991 = vld [vmem:[#allocation12 + $0x30] sm:$0xff]
        %v1992 = vld [vmem:[#allocation12 + $0x38] sm:$0xff]
        %v1993 = vld [vmem:[#allocation12 + $0x40] sm:$0xff]
        %v1994 = vld [vmem:[#allocation12 + $0x48] sm:$0xff]
        %v1995 = vld [vmem:[#allocation12 + $0x50] sm:$0xff]
        %v1996 = vld [vmem:[#allocation12 + $0x58] sm:$0xff]
        %v1997 = vld [vmem:[#allocation12 + $0x60] sm:$0xff]
        %v1998 = vld [vmem:[#allocation12 + $0x68] sm:$0xff]
        %v1999 = vld [vmem:[#allocation12 + $0x70] sm:$0xff]
        %v2000 = vld [vmem:[#allocation12 + $0x78] sm:$0xff]
        %v2001 = vld [vmem:[%s7] sm:$0x1]
        %2002 = vmatpush.msra.mxu0 %v2000
        %2003 = vmatpush.msra.mxu0 %v1999
        %2004 = vmatpush.msra.mxu0 %v1998
        %2005 = vmatpush.msra.mxu0 %v1997
        %2006 = vmatpush.msra.mxu0 %v1996
        %2007 = vmatpush.msra.mxu0 %v1995
        %2008 = vmatpush.msra.mxu0 %v1994
        %2009 = vmatpush.msra.mxu0 %v1993
        %2010 = vmatpush.msra.mxu0 %v1992
        %2011 = vmatpush.msra.mxu0 %v1991
        %2012 = vmatpush.msra.mxu0 %v1990
        %2013 = vmatpush.msra.mxu0 %v1989
        %2014 = vmatpush.msra.mxu0 %v1988
        %2015 = vmatpush.msra.mxu0 %v1987
        %2016 = vmatpush.msra.mxu0 %v1986
        %2017 = vmatpush.msra.mxu0 %v1985
        %2018 = vmatmul.f32.gmra.mxu0 %v1984
        %v2019 = vpop.f32.mrf.mxu0
        %v2020 = vadd.f32 %v2001, %v2019
        %2021 = vdwg.mxu0
        %2022 = vst [vmem:[%s354 + $0x3] sm:$0x1] %v2020
        %2023 = vst.msk [vmem:[#allocation2 + $0x1] sm:$0x1] %vm376, %v1984
        %2024 = vst [vmem:[#allocation3] sm:$0x1] %v1982
        %s2025 = sadd.s32 %s369, 4
        %s2026 = sld [smem:[#allocation5 + %s2025]]
        %s2027 = scalar_lea.vmem [#allocation6], %s2026
        %v2028 = vld [vmem:[%s2027] sm:$0x1]
        %2029 = vst.msk [vmem:[#allocation2] sm:$0x1] %vm376, %v2028
        %v2030 = vld [vmem:[#allocation2] sm:$0x3]
        %v2031 = vld [vmem:[#allocation9] sm:$0xff]
        %v2032 = vld [vmem:[#allocation9 + $0x8] sm:$0xff]
        %v2033 = vld [vmem:[#allocation9 + $0x10] sm:$0xff]
        %v2034 = vld [vmem:[#allocation9 + $0x18] sm:$0xff]
        %v2035 = vld [vmem:[#allocation9 + $0x20] sm:$0xff]
        %v2036 = vld [vmem:[#allocation9 + $0x28] sm:$0xff]
        %v2037 = vld [vmem:[#allocation9 + $0x30] sm:$0xff]
        %v2038 = vld [vmem:[#allocation9 + $0x38] sm:$0xff]
        %v2039 = vld [vmem:[#allocation9 + $0x40] sm:$0xff]
        %v2040 = vld [vmem:[#allocation9 + $0x48] sm:$0xff]
        %v2041 = vld [vmem:[#allocation9 + $0x50] sm:$0xff]
        %v2042 = vld [vmem:[#allocation9 + $0x58] sm:$0xff]
        %v2043 = vld [vmem:[#allocation9 + $0x60] sm:$0xff]
        %v2044 = vld [vmem:[#allocation9 + $0x68] sm:$0xff]
        %v2045 = vld [vmem:[#allocation9 + $0x70] sm:$0xff]
        %v2046 = vld [vmem:[#allocation9 + $0x78] sm:$0xff]
        %v2047 = vld [vmem:[#allocation9 + $0x80] sm:$0xff]
        %v2048 = vld [vmem:[#allocation9 + $0x88] sm:$0xff]
        %v2049 = vld [vmem:[#allocation9 + $0x90] sm:$0xff]
        %v2050 = vld [vmem:[#allocation9 + $0x98] sm:$0xff]
        %v2051 = vld [vmem:[#allocation9 + $0xa0] sm:$0xff]
        %v2052 = vld [vmem:[#allocation9 + $0xa8] sm:$0xff]
        %v2053 = vld [vmem:[#allocation9 + $0xb0] sm:$0xff]
        %v2054 = vld [vmem:[#allocation9 + $0xb8] sm:$0xff]
        %v2055 = vld [vmem:[#allocation9 + $0xc0] sm:$0xff]
        %v2056 = vld [vmem:[#allocation9 + $0xc8] sm:$0xff]
        %v2057 = vld [vmem:[#allocation9 + $0xd0] sm:$0xff]
        %v2058 = vld [vmem:[#allocation9 + $0xd8] sm:$0xff]
        %v2059 = vld [vmem:[#allocation9 + $0xe0] sm:$0xff]
        %v2060 = vld [vmem:[#allocation9 + $0xe8] sm:$0xff]
        %v2061 = vld [vmem:[#allocation9 + $0xf0] sm:$0xff]
        %v2062 = vld [vmem:[#allocation9 + $0xf8] sm:$0xff]
        %v2063 = vld [vmem:[#allocation9 + $0x100] sm:$0xff]
        %v2064 = vld [vmem:[#allocation9 + $0x108] sm:$0xff]
        %v2065 = vld [vmem:[#allocation9 + $0x110] sm:$0xff]
        %v2066 = vld [vmem:[#allocation9 + $0x118] sm:$0xff]
        %v2067 = vld [vmem:[#allocation9 + $0x120] sm:$0xff]
        %v2068 = vld [vmem:[#allocation9 + $0x128] sm:$0xff]
        %v2069 = vld [vmem:[#allocation9 + $0x130] sm:$0xff]
        %v2070 = vld [vmem:[#allocation9 + $0x138] sm:$0xff]
        %v2071 = vld [vmem:[#allocation9 + $0x140] sm:$0xff]
        %v2072 = vld [vmem:[#allocation9 + $0x148] sm:$0xff]
        %v2073 = vld [vmem:[#allocation9 + $0x150] sm:$0xff]
        %v2074 = vld [vmem:[#allocation9 + $0x158] sm:$0xff]
        %v2075 = vld [vmem:[#allocation9 + $0x160] sm:$0xff]
        %v2076 = vld [vmem:[#allocation9 + $0x168] sm:$0xff]
        %v2077 = vld [vmem:[#allocation9 + $0x170] sm:$0xff]
        %v2078 = vld [vmem:[#allocation9 + $0x178] sm:$0xff]
        %v2079 = vld [vmem:[#allocation9 + $0x180] sm:$0xff]
        %v2080 = vld [vmem:[#allocation9 + $0x188] sm:$0xff]
        %v2081 = vld [vmem:[#allocation9 + $0x190] sm:$0xff]
        %v2082 = vld [vmem:[#allocation9 + $0x198] sm:$0xff]
        %v2083 = vld [vmem:[#allocation9 + $0x1a0] sm:$0xff]
        %v2084 = vld [vmem:[#allocation9 + $0x1a8] sm:$0xff]
        %v2085 = vld [vmem:[#allocation9 + $0x1b0] sm:$0xff]
        %v2086 = vld [vmem:[#allocation9 + $0x1b8] sm:$0xff]
        %v2087 = vld [vmem:[#allocation9 + $0x1c0] sm:$0xff]
        %v2088 = vld [vmem:[#allocation9 + $0x1c8] sm:$0xff]
        %v2089 = vld [vmem:[#allocation9 + $0x1d0] sm:$0xff]
        %v2090 = vld [vmem:[#allocation9 + $0x1d8] sm:$0xff]
        %v2091 = vld [vmem:[#allocation9 + $0x1e0] sm:$0xff]
        %v2092 = vld [vmem:[#allocation9 + $0x1e8] sm:$0xff]
        %v2093 = vld [vmem:[#allocation9 + $0x1f0] sm:$0xff]
        %v2094 = vld [vmem:[#allocation9 + $0x1f8] sm:$0xff]
        %v2095 = vld [vmem:[#allocation9 + $0x200] sm:$0xff]
        %v2096 = vld [vmem:[#allocation9 + $0x208] sm:$0xff]
        %v2097 = vld [vmem:[#allocation9 + $0x210] sm:$0xff]
        %v2098 = vld [vmem:[#allocation9 + $0x218] sm:$0xff]
        %v2099 = vld [vmem:[#allocation9 + $0x220] sm:$0xff]
        %v2100 = vld [vmem:[#allocation9 + $0x228] sm:$0xff]
        %v2101 = vld [vmem:[#allocation9 + $0x230] sm:$0xff]
        %v2102 = vld [vmem:[#allocation9 + $0x238] sm:$0xff]
        %v2103 = vld [vmem:[#allocation9 + $0x240] sm:$0xff]
        %v2104 = vld [vmem:[#allocation9 + $0x248] sm:$0xff]
        %v2105 = vld [vmem:[#allocation9 + $0x250] sm:$0xff]
        %v2106 = vld [vmem:[#allocation9 + $0x258] sm:$0xff]
        %v2107 = vld [vmem:[#allocation9 + $0x260] sm:$0xff]
        %v2108 = vld [vmem:[#allocation9 + $0x268] sm:$0xff]
        %v2109 = vld [vmem:[#allocation9 + $0x270] sm:$0xff]
        %v2110 = vld [vmem:[#allocation9 + $0x278] sm:$0xff]
        %v2111 = vld [vmem:[#allocation9 + $0x280] sm:$0xff]
        %v2112 = vld [vmem:[#allocation9 + $0x288] sm:$0xff]
        %v2113 = vld [vmem:[#allocation9 + $0x290] sm:$0xff]
        %v2114 = vld [vmem:[#allocation9 + $0x298] sm:$0xff]
        %v2115 = vld [vmem:[#allocation9 + $0x2a0] sm:$0xff]
        %v2116 = vld [vmem:[#allocation9 + $0x2a8] sm:$0xff]
        %v2117 = vld [vmem:[#allocation9 + $0x2b0] sm:$0xff]
        %v2118 = vld [vmem:[#allocation9 + $0x2b8] sm:$0xff]
        %v2119 = vld [vmem:[#allocation9 + $0x2c0] sm:$0xff]
        %v2120 = vld [vmem:[#allocation9 + $0x2c8] sm:$0xff]
        %v2121 = vld [vmem:[#allocation9 + $0x2d0] sm:$0xff]
        %v2122 = vld [vmem:[#allocation9 + $0x2d8] sm:$0xff]
        %v2123 = vld [vmem:[#allocation9 + $0x2e0] sm:$0xff]
        %v2124 = vld [vmem:[#allocation9 + $0x2e8] sm:$0xff]
        %v2125 = vld [vmem:[#allocation9 + $0x2f0] sm:$0xff]
        %v2126 = vld [vmem:[#allocation9 + $0x2f8] sm:$0xff]
        %v2127 = vld [vmem:[#allocation9 + $0x300] sm:$0xff]
        %v2128 = vld [vmem:[#allocation9 + $0x308] sm:$0xff]
        %v2129 = vld [vmem:[#allocation9 + $0x310] sm:$0xff]
        %v2130 = vld [vmem:[#allocation9 + $0x318] sm:$0xff]
        %v2131 = vld [vmem:[#allocation9 + $0x320] sm:$0xff]
        %v2132 = vld [vmem:[#allocation9 + $0x328] sm:$0xff]
        %v2133 = vld [vmem:[#allocation9 + $0x330] sm:$0xff]
        %v2134 = vld [vmem:[#allocation9 + $0x338] sm:$0xff]
        %v2135 = vld [vmem:[#allocation9 + $0x340] sm:$0xff]
        %v2136 = vld [vmem:[#allocation9 + $0x348] sm:$0xff]
        %v2137 = vld [vmem:[#allocation9 + $0x350] sm:$0xff]
        %v2138 = vld [vmem:[#allocation9 + $0x358] sm:$0xff]
        %v2139 = vld [vmem:[#allocation9 + $0x360] sm:$0xff]
        %v2140 = vld [vmem:[#allocation9 + $0x368] sm:$0xff]
        %v2141 = vld [vmem:[#allocation9 + $0x370] sm:$0xff]
        %v2142 = vld [vmem:[#allocation9 + $0x378] sm:$0xff]
        %v2143 = vld [vmem:[#allocation9 + $0x380] sm:$0xff]
        %v2144 = vld [vmem:[#allocation9 + $0x388] sm:$0xff]
        %v2145 = vld [vmem:[#allocation9 + $0x390] sm:$0xff]
        %v2146 = vld [vmem:[#allocation9 + $0x398] sm:$0xff]
        %v2147 = vld [vmem:[#allocation9 + $0x3a0] sm:$0xff]
        %v2148 = vld [vmem:[#allocation9 + $0x3a8] sm:$0xff]
        %v2149 = vld [vmem:[#allocation9 + $0x3b0] sm:$0xff]
        %v2150 = vld [vmem:[#allocation9 + $0x3b8] sm:$0xff]
        %v2151 = vld [vmem:[#allocation9 + $0x3c0] sm:$0xff]
        %v2152 = vld [vmem:[#allocation9 + $0x3c8] sm:$0xff]
        %v2153 = vld [vmem:[#allocation9 + $0x3d0] sm:$0xff]
        %v2154 = vld [vmem:[#allocation9 + $0x3d8] sm:$0xff]
        %v2155 = vld [vmem:[#allocation9 + $0x3e0] sm:$0xff]
        %v2156 = vld [vmem:[#allocation9 + $0x3e8] sm:$0xff]
        %v2157 = vld [vmem:[#allocation9 + $0x3f0] sm:$0xff]
        %v2158 = vld [vmem:[#allocation9 + $0x3f8] sm:$0xff]
        %v2159 = vld [vmem:[#allocation11] sm:$0xf]
        %v2161 = vperm.slane %v2030, 0
        %v2162 = vperm.slane %v2030, 1
        %v2166 = vperm.slane %v2159, 0
        %v2167 = vperm.slane %v2159, 1
        %v2168 = vperm.slane %v2159, 2
        %v2169 = vperm.slane %v2159, 3
        %2174 = vmatpush.msra.mxu0 %v2091
        %2175 = vmatpush.msra.mxu0 %v2087
        %2176 = vmatpush.msra.mxu0 %v2083
        %2177 = vmatpush.msra.mxu0 %v2079
        %2178 = vmatpush.msra.mxu0 %v2075
        %2179 = vmatpush.msra.mxu0 %v2071
        %2180 = vmatpush.msra.mxu0 %v2067
        %2181 = vmatpush.msra.mxu0 %v2063
        %2182 = vmatpush.msra.mxu0 %v2059
        %2183 = vmatpush.msra.mxu0 %v2055
        %2184 = vmatpush.msra.mxu0 %v2051
        %2185 = vmatpush.msra.mxu0 %v2047
        %2186 = vmatpush.msra.mxu0 %v2043
        %2187 = vmatpush.msra.mxu0 %v2039
        %2188 = vmatpush.msra.mxu0 %v2035
        %2189 = vmatpush.msra.mxu0 %v2031
        %2190 = vmatmul.f32.gmra.mxu0 %v2161
        %v2191 = vpop.f32.mrf.mxu0
        %v2192 = vadd.f32 %v2166, %v2191
        %2193 = vdwg.mxu0
        %2194 = vmatpush.msra.mxu0 %v2155
        %2195 = vmatpush.msra.mxu0 %v2151
        %2196 = vmatpush.msra.mxu0 %v2147
        %2197 = vmatpush.msra.mxu0 %v2143
        %2198 = vmatpush.msra.mxu0 %v2139
        %2199 = vmatpush.msra.mxu0 %v2135
        %2200 = vmatpush.msra.mxu0 %v2131
        %2201 = vmatpush.msra.mxu0 %v2127
        %2202 = vmatpush.msra.mxu0 %v2123
        %2203 = vmatpush.msra.mxu0 %v2119
        %2204 = vmatpush.msra.mxu0 %v2115
        %2205 = vmatpush.msra.mxu0 %v2111
        %2206 = vmatpush.msra.mxu0 %v2107
        %2207 = vmatpush.msra.mxu0 %v2103
        %2208 = vmatpush.msra.mxu0 %v2099
        %2209 = vmatpush.msra.mxu0 %v2095
        %2210 = vmatmul.f32.gmra.mxu0 %v2162
        %v2211 = vpop.f32.mrf.mxu0
        %v2212 = vadd.f32 %v2192, %v2211
        %2213 = vdwg.mxu0
        %2214 = vmatpush.msra.mxu0 %v2092
        %2215 = vmatpush.msra.mxu0 %v2088
        %2216 = vmatpush.msra.mxu0 %v2084
        %2217 = vmatpush.msra.mxu0 %v2080
        %2218 = vmatpush.msra.mxu0 %v2076
        %2219 = vmatpush.msra.mxu0 %v2072
        %2220 = vmatpush.msra.mxu0 %v2068
        %2221 = vmatpush.msra.mxu0 %v2064
        %2222 = vmatpush.msra.mxu0 %v2060
        %2223 = vmatpush.msra.mxu0 %v2056
        %2224 = vmatpush.msra.mxu0 %v2052
        %2225 = vmatpush.msra.mxu0 %v2048
        %2226 = vmatpush.msra.mxu0 %v2044
        %2227 = vmatpush.msra.mxu0 %v2040
        %2228 = vmatpush.msra.mxu0 %v2036
        %2229 = vmatpush.msra.mxu0 %v2032
        %2230 = vmatmul.f32.gmra.mxu0 %v2161
        %v2231 = vpop.f32.mrf.mxu0
        %v2232 = vadd.f32 %v2167, %v2231
        %2233 = vdwg.mxu0
        %2234 = vmatpush.msra.mxu0 %v2156
        %2235 = vmatpush.msra.mxu0 %v2152
        %2236 = vmatpush.msra.mxu0 %v2148
        %2237 = vmatpush.msra.mxu0 %v2144
        %2238 = vmatpush.msra.mxu0 %v2140
        %2239 = vmatpush.msra.mxu0 %v2136
        %2240 = vmatpush.msra.mxu0 %v2132
        %2241 = vmatpush.msra.mxu0 %v2128
        %2242 = vmatpush.msra.mxu0 %v2124
        %2243 = vmatpush.msra.mxu0 %v2120
        %2244 = vmatpush.msra.mxu0 %v2116
        %2245 = vmatpush.msra.mxu0 %v2112
        %2246 = vmatpush.msra.mxu0 %v2108
        %2247 = vmatpush.msra.mxu0 %v2104
        %2248 = vmatpush.msra.mxu0 %v2100
        %2249 = vmatpush.msra.mxu0 %v2096
        %2250 = vmatmul.f32.gmra.mxu0 %v2162
        %v2251 = vpop.f32.mrf.mxu0
        %v2252 = vadd.f32 %v2232, %v2251
        %2253 = vdwg.mxu0
        %2254 = vmatpush.msra.mxu0 %v2093
        %2255 = vmatpush.msra.mxu0 %v2089
        %2256 = vmatpush.msra.mxu0 %v2085
        %2257 = vmatpush.msra.mxu0 %v2081
        %2258 = vmatpush.msra.mxu0 %v2077
        %2259 = vmatpush.msra.mxu0 %v2073
        %2260 = vmatpush.msra.mxu0 %v2069
        %2261 = vmatpush.msra.mxu0 %v2065
        %2262 = vmatpush.msra.mxu0 %v2061
        %2263 = vmatpush.msra.mxu0 %v2057
        %2264 = vmatpush.msra.mxu0 %v2053
        %2265 = vmatpush.msra.mxu0 %v2049
        %2266 = vmatpush.msra.mxu0 %v2045
        %2267 = vmatpush.msra.mxu0 %v2041
        %2268 = vmatpush.msra.mxu0 %v2037
        %2269 = vmatpush.msra.mxu0 %v2033
        %2270 = vmatmul.f32.gmra.mxu0 %v2161
        %v2271 = vpop.f32.mrf.mxu0
        %v2272 = vadd.f32 %v2168, %v2271
        %2273 = vdwg.mxu0
        %2274 = vmatpush.msra.mxu0 %v2157
        %2275 = vmatpush.msra.mxu0 %v2153
        %2276 = vmatpush.msra.mxu0 %v2149
        %2277 = vmatpush.msra.mxu0 %v2145
        %2278 = vmatpush.msra.mxu0 %v2141
        %2279 = vmatpush.msra.mxu0 %v2137
        %2280 = vmatpush.msra.mxu0 %v2133
        %2281 = vmatpush.msra.mxu0 %v2129
        %2282 = vmatpush.msra.mxu0 %v2125
        %2283 = vmatpush.msra.mxu0 %v2121
        %2284 = vmatpush.msra.mxu0 %v2117
        %2285 = vmatpush.msra.mxu0 %v2113
        %2286 = vmatpush.msra.mxu0 %v2109
        %2287 = vmatpush.msra.mxu0 %v2105
        %2288 = vmatpush.msra.mxu0 %v2101
        %2289 = vmatpush.msra.mxu0 %v2097
        %2290 = vmatmul.f32.gmra.mxu0 %v2162
        %v2291 = vpop.f32.mrf.mxu0
        %v2292 = vadd.f32 %v2272, %v2291
        %2293 = vdwg.mxu0
        %2294 = vmatpush.msra.mxu0 %v2094
        %2295 = vmatpush.msra.mxu0 %v2090
        %2296 = vmatpush.msra.mxu0 %v2086
        %2297 = vmatpush.msra.mxu0 %v2082
        %2298 = vmatpush.msra.mxu0 %v2078
        %2299 = vmatpush.msra.mxu0 %v2074
        %2300 = vmatpush.msra.mxu0 %v2070
        %2301 = vmatpush.msra.mxu0 %v2066
        %2302 = vmatpush.msra.mxu0 %v2062
        %2303 = vmatpush.msra.mxu0 %v2058
        %2304 = vmatpush.msra.mxu0 %v2054
        %2305 = vmatpush.msra.mxu0 %v2050
        %2306 = vmatpush.msra.mxu0 %v2046
        %2307 = vmatpush.msra.mxu0 %v2042
        %2308 = vmatpush.msra.mxu0 %v2038
        %2309 = vmatpush.msra.mxu0 %v2034
        %2310 = vmatmul.f32.gmra.mxu0 %v2161
        %v2311 = vpop.f32.mrf.mxu0
        %v2312 = vadd.f32 %v2169, %v2311
        %2313 = vdwg.mxu0
        %2314 = vmatpush.msra.mxu0 %v2158
        %2315 = vmatpush.msra.mxu0 %v2154
        %2316 = vmatpush.msra.mxu0 %v2150
        %2317 = vmatpush.msra.mxu0 %v2146
        %2318 = vmatpush.msra.mxu0 %v2142
        %2319 = vmatpush.msra.mxu0 %v2138
        %2320 = vmatpush.msra.mxu0 %v2134
        %2321 = vmatpush.msra.mxu0 %v2130
        %2322 = vmatpush.msra.mxu0 %v2126
        %2323 = vmatpush.msra.mxu0 %v2122
        %2324 = vmatpush.msra.mxu0 %v2118
        %2325 = vmatpush.msra.mxu0 %v2114
        %2326 = vmatpush.msra.mxu0 %v2110
        %2327 = vmatpush.msra.mxu0 %v2106
        %2328 = vmatpush.msra.mxu0 %v2102
        %2329 = vmatpush.msra.mxu0 %v2098
        %2330 = vmatmul.f32.gmra.mxu0 %v2162
        %v2331 = vpop.f32.mrf.mxu0
        %v2332 = vadd.f32 %v2312, %v2331
        %2333 = vdwg.mxu0
        %v2334 = vxor.u32 %v2212, 2147483648
        %v2335 = vxor.u32 %v2252, 2147483648
        %v2336 = vxor.u32 %v2292, 2147483648
        %v2337 = vmul.f32 %v2334, 1.442695
        %v2338 = vpow.pop %v2337
        %v2339 = vmul.f32 %v2335, 1.442695
        %v2340 = vpow.pop %v2339
        %v2341 = vmul.f32 %v2336, 1.442695
        %v2342 = vpow.pop %v2341
        %v2343 = vadd.f32 %v2338, 1.0
        %v2344 = vadd.f32 %v2340, 1.0
        %v2345 = vadd.f32 %v2342, 1.0
        %v2346 = vrcp.pop %v2343
        %v2347 = vmul.f32 %v2343, %v2346
        %v2348 = vsub.f32 1.0, %v2347
        %v2349 = vmul.f32 %v2346, %v2348
        %v2350 = vadd.f32 %v2346, %v2349
        %vm2351 = vweird.f32 %v2343
        %vm2352 = vweird.f32 %v2346
        %vm2353 = vmor %vm2351, %vm2352
        %v2354 = vsel %vm2353, %v2346, %v2350
        %v2355 = vand.u32 2147483647, %v2343
        %vm2356 = vcmp.eq.f32.partialorder %v2355, 8.507059e+37
        %v2357 = vand.u32 %v2343, 2147483648
        %v2358 = vor.u32 1.1754944e-38, %v2357
        %v2359 = vsel %vm2356, %v2358, %v2354
        %v2360 = vmul.f32 1.0, %v2359
        %v2361 = vrcp.pop %v2344
        %v2362 = vmul.f32 %v2344, %v2361
        %v2363 = vsub.f32 1.0, %v2362
        %v2364 = vmul.f32 %v2361, %v2363
        %v2365 = vadd.f32 %v2361, %v2364
        %vm2366 = vweird.f32 %v2344
        %vm2367 = vweird.f32 %v2361
        %vm2368 = vmor %vm2366, %vm2367
        %v2369 = vsel %vm2368, %v2361, %v2365
        %v2370 = vand.u32 2147483647, %v2344
        %vm2371 = vcmp.eq.f32.partialorder %v2370, 8.507059e+37
        %v2372 = vand.u32 %v2344, 2147483648
        %v2373 = vor.u32 1.1754944e-38, %v2372
        %v2374 = vsel %vm2371, %v2373, %v2369
        %v2375 = vmul.f32 1.0, %v2374
        %v2376 = vrcp.pop %v2345
        %v2377 = vmul.f32 %v2345, %v2376
        %v2378 = vsub.f32 1.0, %v2377
        %v2379 = vmul.f32 %v2376, %v2378
        %v2380 = vadd.f32 %v2376, %v2379
        %vm2381 = vweird.f32 %v2345
        %vm2382 = vweird.f32 %v2376
        %vm2383 = vmor %vm2381, %vm2382
        %v2384 = vsel %vm2383, %v2376, %v2380
        %v2385 = vand.u32 2147483647, %v2345
        %vm2386 = vcmp.eq.f32.partialorder %v2385, 8.507059e+37
        %v2387 = vand.u32 %v2345, 2147483648
        %v2388 = vor.u32 1.1754944e-38, %v2387
        %v2389 = vsel %vm2386, %v2388, %v2384
        %v2390 = vmul.f32 1.0, %v2389
        %v2391 = vtanh.pop %v2332
        %v2392 = vld [vmem:[#allocation3] sm:$0x1]
        %v2393 = vmul.f32 %v2375, %v2392
        %v2394 = vmul.f32 %v2360, %v2391
        %v2395 = vadd.f32 %v2393, %v2394
        %v2396 = vtanh.pop %v2395
        %v2397 = vmul.f32 %v2390, %v2396
        %v2398 = vld [vmem:[#allocation12] sm:$0xff]
        %v2399 = vld [vmem:[#allocation12 + $0x8] sm:$0xff]
        %v2400 = vld [vmem:[#allocation12 + $0x10] sm:$0xff]
        %v2401 = vld [vmem:[#allocation12 + $0x18] sm:$0xff]
        %v2402 = vld [vmem:[#allocation12 + $0x20] sm:$0xff]
        %v2403 = vld [vmem:[#allocation12 + $0x28] sm:$0xff]
        %v2404 = vld [vmem:[#allocation12 + $0x30] sm:$0xff]
        %v2405 = vld [vmem:[#allocation12 + $0x38] sm:$0xff]
        %v2406 = vld [vmem:[#allocation12 + $0x40] sm:$0xff]
        %v2407 = vld [vmem:[#allocation12 + $0x48] sm:$0xff]
        %v2408 = vld [vmem:[#allocation12 + $0x50] sm:$0xff]
        %v2409 = vld [vmem:[#allocation12 + $0x58] sm:$0xff]
        %v2410 = vld [vmem:[#allocation12 + $0x60] sm:$0xff]
        %v2411 = vld [vmem:[#allocation12 + $0x68] sm:$0xff]
        %v2412 = vld [vmem:[#allocation12 + $0x70] sm:$0xff]
        %v2413 = vld [vmem:[#allocation12 + $0x78] sm:$0xff]
        %v2414 = vld [vmem:[%s7] sm:$0x1]
        %2415 = vmatpush.msra.mxu0 %v2413
        %2416 = vmatpush.msra.mxu0 %v2412
        %2417 = vmatpush.msra.mxu0 %v2411
        %2418 = vmatpush.msra.mxu0 %v2410
        %2419 = vmatpush.msra.mxu0 %v2409
        %2420 = vmatpush.msra.mxu0 %v2408
        %2421 = vmatpush.msra.mxu0 %v2407
        %2422 = vmatpush.msra.mxu0 %v2406
        %2423 = vmatpush.msra.mxu0 %v2405
        %2424 = vmatpush.msra.mxu0 %v2404
        %2425 = vmatpush.msra.mxu0 %v2403
        %2426 = vmatpush.msra.mxu0 %v2402
        %2427 = vmatpush.msra.mxu0 %v2401
        %2428 = vmatpush.msra.mxu0 %v2400
        %2429 = vmatpush.msra.mxu0 %v2399
        %2430 = vmatpush.msra.mxu0 %v2398
        %2431 = vmatmul.f32.gmra.mxu0 %v2397
        %v2432 = vpop.f32.mrf.mxu0
        %v2433 = vadd.f32 %v2414, %v2432
        %2434 = vdwg.mxu0
        %2435 = vst [vmem:[%s354 + $0x4] sm:$0x1] %v2433
        %2436 = vst.msk [vmem:[#allocation2 + $0x1] sm:$0x1] %vm376, %v2397
        %2437 = vst [vmem:[#allocation3] sm:$0x1] %v2395
        %s2438 = sadd.s32 %s369, 5
        %s2439 = sld [smem:[#allocation5 + %s2438]]
        %s2440 = scalar_lea.vmem [#allocation6], %s2439
        %v2441 = vld [vmem:[%s2440] sm:$0x1]
        %2442 = vst.msk [vmem:[#allocation2] sm:$0x1] %vm376, %v2441
        %v2443 = vld [vmem:[#allocation2] sm:$0x3]
        %v2444 = vld [vmem:[#allocation9] sm:$0xff]
        %v2445 = vld [vmem:[#allocation9 + $0x8] sm:$0xff]
        %v2446 = vld [vmem:[#allocation9 + $0x10] sm:$0xff]
        %v2447 = vld [vmem:[#allocation9 + $0x18] sm:$0xff]
        %v2448 = vld [vmem:[#allocation9 + $0x20] sm:$0xff]
        %v2449 = vld [vmem:[#allocation9 + $0x28] sm:$0xff]
        %v2450 = vld [vmem:[#allocation9 + $0x30] sm:$0xff]
        %v2451 = vld [vmem:[#allocation9 + $0x38] sm:$0xff]
        %v2452 = vld [vmem:[#allocation9 + $0x40] sm:$0xff]
        %v2453 = vld [vmem:[#allocation9 + $0x48] sm:$0xff]
        %v2454 = vld [vmem:[#allocation9 + $0x50] sm:$0xff]
        %v2455 = vld [vmem:[#allocation9 + $0x58] sm:$0xff]
        %v2456 = vld [vmem:[#allocation9 + $0x60] sm:$0xff]
        %v2457 = vld [vmem:[#allocation9 + $0x68] sm:$0xff]
        %v2458 = vld [vmem:[#allocation9 + $0x70] sm:$0xff]
        %v2459 = vld [vmem:[#allocation9 + $0x78] sm:$0xff]
        %v2460 = vld [vmem:[#allocation9 + $0x80] sm:$0xff]
        %v2461 = vld [vmem:[#allocation9 + $0x88] sm:$0xff]
        %v2462 = vld [vmem:[#allocation9 + $0x90] sm:$0xff]
        %v2463 = vld [vmem:[#allocation9 + $0x98] sm:$0xff]
        %v2464 = vld [vmem:[#allocation9 + $0xa0] sm:$0xff]
        %v2465 = vld [vmem:[#allocation9 + $0xa8] sm:$0xff]
        %v2466 = vld [vmem:[#allocation9 + $0xb0] sm:$0xff]
        %v2467 = vld [vmem:[#allocation9 + $0xb8] sm:$0xff]
        %v2468 = vld [vmem:[#allocation9 + $0xc0] sm:$0xff]
        %v2469 = vld [vmem:[#allocation9 + $0xc8] sm:$0xff]
        %v2470 = vld [vmem:[#allocation9 + $0xd0] sm:$0xff]
        %v2471 = vld [vmem:[#allocation9 + $0xd8] sm:$0xff]
        %v2472 = vld [vmem:[#allocation9 + $0xe0] sm:$0xff]
        %v2473 = vld [vmem:[#allocation9 + $0xe8] sm:$0xff]
        %v2474 = vld [vmem:[#allocation9 + $0xf0] sm:$0xff]
        %v2475 = vld [vmem:[#allocation9 + $0xf8] sm:$0xff]
        %v2476 = vld [vmem:[#allocation9 + $0x100] sm:$0xff]
        %v2477 = vld [vmem:[#allocation9 + $0x108] sm:$0xff]
        %v2478 = vld [vmem:[#allocation9 + $0x110] sm:$0xff]
        %v2479 = vld [vmem:[#allocation9 + $0x118] sm:$0xff]
        %v2480 = vld [vmem:[#allocation9 + $0x120] sm:$0xff]
        %v2481 = vld [vmem:[#allocation9 + $0x128] sm:$0xff]
        %v2482 = vld [vmem:[#allocation9 + $0x130] sm:$0xff]
        %v2483 = vld [vmem:[#allocation9 + $0x138] sm:$0xff]
        %v2484 = vld [vmem:[#allocation9 + $0x140] sm:$0xff]
        %v2485 = vld [vmem:[#allocation9 + $0x148] sm:$0xff]
        %v2486 = vld [vmem:[#allocation9 + $0x150] sm:$0xff]
        %v2487 = vld [vmem:[#allocation9 + $0x158] sm:$0xff]
        %v2488 = vld [vmem:[#allocation9 + $0x160] sm:$0xff]
        %v2489 = vld [vmem:[#allocation9 + $0x168] sm:$0xff]
        %v2490 = vld [vmem:[#allocation9 + $0x170] sm:$0xff]
        %v2491 = vld [vmem:[#allocation9 + $0x178] sm:$0xff]
        %v2492 = vld [vmem:[#allocation9 + $0x180] sm:$0xff]
        %v2493 = vld [vmem:[#allocation9 + $0x188] sm:$0xff]
        %v2494 = vld [vmem:[#allocation9 + $0x190] sm:$0xff]
        %v2495 = vld [vmem:[#allocation9 + $0x198] sm:$0xff]
        %v2496 = vld [vmem:[#allocation9 + $0x1a0] sm:$0xff]
        %v2497 = vld [vmem:[#allocation9 + $0x1a8] sm:$0xff]
        %v2498 = vld [vmem:[#allocation9 + $0x1b0] sm:$0xff]
        %v2499 = vld [vmem:[#allocation9 + $0x1b8] sm:$0xff]
        %v2500 = vld [vmem:[#allocation9 + $0x1c0] sm:$0xff]
        %v2501 = vld [vmem:[#allocation9 + $0x1c8] sm:$0xff]
        %v2502 = vld [vmem:[#allocation9 + $0x1d0] sm:$0xff]
        %v2503 = vld [vmem:[#allocation9 + $0x1d8] sm:$0xff]
        %v2504 = vld [vmem:[#allocation9 + $0x1e0] sm:$0xff]
        %v2505 = vld [vmem:[#allocation9 + $0x1e8] sm:$0xff]
        %v2506 = vld [vmem:[#allocation9 + $0x1f0] sm:$0xff]
        %v2507 = vld [vmem:[#allocation9 + $0x1f8] sm:$0xff]
        %v2508 = vld [vmem:[#allocation9 + $0x200] sm:$0xff]
        %v2509 = vld [vmem:[#allocation9 + $0x208] sm:$0xff]
        %v2510 = vld [vmem:[#allocation9 + $0x210] sm:$0xff]
        %v2511 = vld [vmem:[#allocation9 + $0x218] sm:$0xff]
        %v2512 = vld [vmem:[#allocation9 + $0x220] sm:$0xff]
        %v2513 = vld [vmem:[#allocation9 + $0x228] sm:$0xff]
        %v2514 = vld [vmem:[#allocation9 + $0x230] sm:$0xff]
        %v2515 = vld [vmem:[#allocation9 + $0x238] sm:$0xff]
        %v2516 = vld [vmem:[#allocation9 + $0x240] sm:$0xff]
        %v2517 = vld [vmem:[#allocation9 + $0x248] sm:$0xff]
        %v2518 = vld [vmem:[#allocation9 + $0x250] sm:$0xff]
        %v2519 = vld [vmem:[#allocation9 + $0x258] sm:$0xff]
        %v2520 = vld [vmem:[#allocation9 + $0x260] sm:$0xff]
        %v2521 = vld [vmem:[#allocation9 + $0x268] sm:$0xff]
        %v2522 = vld [vmem:[#allocation9 + $0x270] sm:$0xff]
        %v2523 = vld [vmem:[#allocation9 + $0x278] sm:$0xff]
        %v2524 = vld [vmem:[#allocation9 + $0x280] sm:$0xff]
        %v2525 = vld [vmem:[#allocation9 + $0x288] sm:$0xff]
        %v2526 = vld [vmem:[#allocation9 + $0x290] sm:$0xff]
        %v2527 = vld [vmem:[#allocation9 + $0x298] sm:$0xff]
        %v2528 = vld [vmem:[#allocation9 + $0x2a0] sm:$0xff]
        %v2529 = vld [vmem:[#allocation9 + $0x2a8] sm:$0xff]
        %v2530 = vld [vmem:[#allocation9 + $0x2b0] sm:$0xff]
        %v2531 = vld [vmem:[#allocation9 + $0x2b8] sm:$0xff]
        %v2532 = vld [vmem:[#allocation9 + $0x2c0] sm:$0xff]
        %v2533 = vld [vmem:[#allocation9 + $0x2c8] sm:$0xff]
        %v2534 = vld [vmem:[#allocation9 + $0x2d0] sm:$0xff]
        %v2535 = vld [vmem:[#allocation9 + $0x2d8] sm:$0xff]
        %v2536 = vld [vmem:[#allocation9 + $0x2e0] sm:$0xff]
        %v2537 = vld [vmem:[#allocation9 + $0x2e8] sm:$0xff]
        %v2538 = vld [vmem:[#allocation9 + $0x2f0] sm:$0xff]
        %v2539 = vld [vmem:[#allocation9 + $0x2f8] sm:$0xff]
        %v2540 = vld [vmem:[#allocation9 + $0x300] sm:$0xff]
        %v2541 = vld [vmem:[#allocation9 + $0x308] sm:$0xff]
        %v2542 = vld [vmem:[#allocation9 + $0x310] sm:$0xff]
        %v2543 = vld [vmem:[#allocation9 + $0x318] sm:$0xff]
        %v2544 = vld [vmem:[#allocation9 + $0x320] sm:$0xff]
        %v2545 = vld [vmem:[#allocation9 + $0x328] sm:$0xff]
        %v2546 = vld [vmem:[#allocation9 + $0x330] sm:$0xff]
        %v2547 = vld [vmem:[#allocation9 + $0x338] sm:$0xff]
        %v2548 = vld [vmem:[#allocation9 + $0x340] sm:$0xff]
        %v2549 = vld [vmem:[#allocation9 + $0x348] sm:$0xff]
        %v2550 = vld [vmem:[#allocation9 + $0x350] sm:$0xff]
        %v2551 = vld [vmem:[#allocation9 + $0x358] sm:$0xff]
        %v2552 = vld [vmem:[#allocation9 + $0x360] sm:$0xff]
        %v2553 = vld [vmem:[#allocation9 + $0x368] sm:$0xff]
        %v2554 = vld [vmem:[#allocation9 + $0x370] sm:$0xff]
        %v2555 = vld [vmem:[#allocation9 + $0x378] sm:$0xff]
        %v2556 = vld [vmem:[#allocation9 + $0x380] sm:$0xff]
        %v2557 = vld [vmem:[#allocation9 + $0x388] sm:$0xff]
        %v2558 = vld [vmem:[#allocation9 + $0x390] sm:$0xff]
        %v2559 = vld [vmem:[#allocation9 + $0x398] sm:$0xff]
        %v2560 = vld [vmem:[#allocation9 + $0x3a0] sm:$0xff]
        %v2561 = vld [vmem:[#allocation9 + $0x3a8] sm:$0xff]
        %v2562 = vld [vmem:[#allocation9 + $0x3b0] sm:$0xff]
        %v2563 = vld [vmem:[#allocation9 + $0x3b8] sm:$0xff]
        %v2564 = vld [vmem:[#allocation9 + $0x3c0] sm:$0xff]
        %v2565 = vld [vmem:[#allocation9 + $0x3c8] sm:$0xff]
        %v2566 = vld [vmem:[#allocation9 + $0x3d0] sm:$0xff]
        %v2567 = vld [vmem:[#allocation9 + $0x3d8] sm:$0xff]
        %v2568 = vld [vmem:[#allocation9 + $0x3e0] sm:$0xff]
        %v2569 = vld [vmem:[#allocation9 + $0x3e8] sm:$0xff]
        %v2570 = vld [vmem:[#allocation9 + $0x3f0] sm:$0xff]
        %v2571 = vld [vmem:[#allocation9 + $0x3f8] sm:$0xff]
        %v2572 = vld [vmem:[#allocation11] sm:$0xf]
        %v2574 = vperm.slane %v2443, 0
        %v2575 = vperm.slane %v2443, 1
        %v2579 = vperm.slane %v2572, 0
        %v2580 = vperm.slane %v2572, 1
        %v2581 = vperm.slane %v2572, 2
        %v2582 = vperm.slane %v2572, 3
        %2587 = vmatpush.msra.mxu0 %v2504
        %2588 = vmatpush.msra.mxu0 %v2500
        %2589 = vmatpush.msra.mxu0 %v2496
        %2590 = vmatpush.msra.mxu0 %v2492
        %2591 = vmatpush.msra.mxu0 %v2488
        %2592 = vmatpush.msra.mxu0 %v2484
        %2593 = vmatpush.msra.mxu0 %v2480
        %2594 = vmatpush.msra.mxu0 %v2476
        %2595 = vmatpush.msra.mxu0 %v2472
        %2596 = vmatpush.msra.mxu0 %v2468
        %2597 = vmatpush.msra.mxu0 %v2464
        %2598 = vmatpush.msra.mxu0 %v2460
        %2599 = vmatpush.msra.mxu0 %v2456
        %2600 = vmatpush.msra.mxu0 %v2452
        %2601 = vmatpush.msra.mxu0 %v2448
        %2602 = vmatpush.msra.mxu0 %v2444
        %2603 = vmatmul.f32.gmra.mxu0 %v2574
        %v2604 = vpop.f32.mrf.mxu0
        %v2605 = vadd.f32 %v2579, %v2604
        %2606 = vdwg.mxu0
        %2607 = vmatpush.msra.mxu0 %v2568
        %2608 = vmatpush.msra.mxu0 %v2564
        %2609 = vmatpush.msra.mxu0 %v2560
        %2610 = vmatpush.msra.mxu0 %v2556
        %2611 = vmatpush.msra.mxu0 %v2552
        %2612 = vmatpush.msra.mxu0 %v2548
        %2613 = vmatpush.msra.mxu0 %v2544
        %2614 = vmatpush.msra.mxu0 %v2540
        %2615 = vmatpush.msra.mxu0 %v2536
        %2616 = vmatpush.msra.mxu0 %v2532
        %2617 = vmatpush.msra.mxu0 %v2528
        %2618 = vmatpush.msra.mxu0 %v2524
        %2619 = vmatpush.msra.mxu0 %v2520
        %2620 = vmatpush.msra.mxu0 %v2516
        %2621 = vmatpush.msra.mxu0 %v2512
        %2622 = vmatpush.msra.mxu0 %v2508
        %2623 = vmatmul.f32.gmra.mxu0 %v2575
        %v2624 = vpop.f32.mrf.mxu0
        %v2625 = vadd.f32 %v2605, %v2624
        %2626 = vdwg.mxu0
        %2627 = vmatpush.msra.mxu0 %v2505
        %2628 = vmatpush.msra.mxu0 %v2501
        %2629 = vmatpush.msra.mxu0 %v2497
        %2630 = vmatpush.msra.mxu0 %v2493
        %2631 = vmatpush.msra.mxu0 %v2489
        %2632 = vmatpush.msra.mxu0 %v2485
        %2633 = vmatpush.msra.mxu0 %v2481
        %2634 = vmatpush.msra.mxu0 %v2477
        %2635 = vmatpush.msra.mxu0 %v2473
        %2636 = vmatpush.msra.mxu0 %v2469
        %2637 = vmatpush.msra.mxu0 %v2465
        %2638 = vmatpush.msra.mxu0 %v2461
        %2639 = vmatpush.msra.mxu0 %v2457
        %2640 = vmatpush.msra.mxu0 %v2453
        %2641 = vmatpush.msra.mxu0 %v2449
        %2642 = vmatpush.msra.mxu0 %v2445
        %2643 = vmatmul.f32.gmra.mxu0 %v2574
        %v2644 = vpop.f32.mrf.mxu0
        %v2645 = vadd.f32 %v2580, %v2644
        %2646 = vdwg.mxu0
        %2647 = vmatpush.msra.mxu0 %v2569
        %2648 = vmatpush.msra.mxu0 %v2565
        %2649 = vmatpush.msra.mxu0 %v2561
        %2650 = vmatpush.msra.mxu0 %v2557
        %2651 = vmatpush.msra.mxu0 %v2553
        %2652 = vmatpush.msra.mxu0 %v2549
        %2653 = vmatpush.msra.mxu0 %v2545
        %2654 = vmatpush.msra.mxu0 %v2541
        %2655 = vmatpush.msra.mxu0 %v2537
        %2656 = vmatpush.msra.mxu0 %v2533
        %2657 = vmatpush.msra.mxu0 %v2529
        %2658 = vmatpush.msra.mxu0 %v2525
        %2659 = vmatpush.msra.mxu0 %v2521
        %2660 = vmatpush.msra.mxu0 %v2517
        %2661 = vmatpush.msra.mxu0 %v2513
        %2662 = vmatpush.msra.mxu0 %v2509
        %2663 = vmatmul.f32.gmra.mxu0 %v2575
        %v2664 = vpop.f32.mrf.mxu0
        %v2665 = vadd.f32 %v2645, %v2664
        %2666 = vdwg.mxu0
        %2667 = vmatpush.msra.mxu0 %v2506
        %2668 = vmatpush.msra.mxu0 %v2502
        %2669 = vmatpush.msra.mxu0 %v2498
        %2670 = vmatpush.msra.mxu0 %v2494
        %2671 = vmatpush.msra.mxu0 %v2490
        %2672 = vmatpush.msra.mxu0 %v2486
        %2673 = vmatpush.msra.mxu0 %v2482
        %2674 = vmatpush.msra.mxu0 %v2478
        %2675 = vmatpush.msra.mxu0 %v2474
        %2676 = vmatpush.msra.mxu0 %v2470
        %2677 = vmatpush.msra.mxu0 %v2466
        %2678 = vmatpush.msra.mxu0 %v2462
        %2679 = vmatpush.msra.mxu0 %v2458
        %2680 = vmatpush.msra.mxu0 %v2454
        %2681 = vmatpush.msra.mxu0 %v2450
        %2682 = vmatpush.msra.mxu0 %v2446
        %2683 = vmatmul.f32.gmra.mxu0 %v2574
        %v2684 = vpop.f32.mrf.mxu0
        %v2685 = vadd.f32 %v2581, %v2684
        %2686 = vdwg.mxu0
        %2687 = vmatpush.msra.mxu0 %v2570
        %2688 = vmatpush.msra.mxu0 %v2566
        %2689 = vmatpush.msra.mxu0 %v2562
        %2690 = vmatpush.msra.mxu0 %v2558
        %2691 = vmatpush.msra.mxu0 %v2554
        %2692 = vmatpush.msra.mxu0 %v2550
        %2693 = vmatpush.msra.mxu0 %v2546
        %2694 = vmatpush.msra.mxu0 %v2542
        %2695 = vmatpush.msra.mxu0 %v2538
        %2696 = vmatpush.msra.mxu0 %v2534
        %2697 = vmatpush.msra.mxu0 %v2530
        %2698 = vmatpush.msra.mxu0 %v2526
        %2699 = vmatpush.msra.mxu0 %v2522
        %2700 = vmatpush.msra.mxu0 %v2518
        %2701 = vmatpush.msra.mxu0 %v2514
        %2702 = vmatpush.msra.mxu0 %v2510
        %2703 = vmatmul.f32.gmra.mxu0 %v2575
        %v2704 = vpop.f32.mrf.mxu0
        %v2705 = vadd.f32 %v2685, %v2704
        %2706 = vdwg.mxu0
        %2707 = vmatpush.msra.mxu0 %v2507
        %2708 = vmatpush.msra.mxu0 %v2503
        %2709 = vmatpush.msra.mxu0 %v2499
        %2710 = vmatpush.msra.mxu0 %v2495
        %2711 = vmatpush.msra.mxu0 %v2491
        %2712 = vmatpush.msra.mxu0 %v2487
        %2713 = vmatpush.msra.mxu0 %v2483
        %2714 = vmatpush.msra.mxu0 %v2479
        %2715 = vmatpush.msra.mxu0 %v2475
        %2716 = vmatpush.msra.mxu0 %v2471
        %2717 = vmatpush.msra.mxu0 %v2467
        %2718 = vmatpush.msra.mxu0 %v2463
        %2719 = vmatpush.msra.mxu0 %v2459
        %2720 = vmatpush.msra.mxu0 %v2455
        %2721 = vmatpush.msra.mxu0 %v2451
        %2722 = vmatpush.msra.mxu0 %v2447
        %2723 = vmatmul.f32.gmra.mxu0 %v2574
        %v2724 = vpop.f32.mrf.mxu0
        %v2725 = vadd.f32 %v2582, %v2724
        %2726 = vdwg.mxu0
        %2727 = vmatpush.msra.mxu0 %v2571
        %2728 = vmatpush.msra.mxu0 %v2567
        %2729 = vmatpush.msra.mxu0 %v2563
        %2730 = vmatpush.msra.mxu0 %v2559
        %2731 = vmatpush.msra.mxu0 %v2555
        %2732 = vmatpush.msra.mxu0 %v2551
        %2733 = vmatpush.msra.mxu0 %v2547
        %2734 = vmatpush.msra.mxu0 %v2543
        %2735 = vmatpush.msra.mxu0 %v2539
        %2736 = vmatpush.msra.mxu0 %v2535
        %2737 = vmatpush.msra.mxu0 %v2531
        %2738 = vmatpush.msra.mxu0 %v2527
        %2739 = vmatpush.msra.mxu0 %v2523
        %2740 = vmatpush.msra.mxu0 %v2519
        %2741 = vmatpush.msra.mxu0 %v2515
        %2742 = vmatpush.msra.mxu0 %v2511
        %2743 = vmatmul.f32.gmra.mxu0 %v2575
        %v2744 = vpop.f32.mrf.mxu0
        %v2745 = vadd.f32 %v2725, %v2744
        %2746 = vdwg.mxu0
        %v2747 = vxor.u32 %v2625, 2147483648
        %v2748 = vxor.u32 %v2665, 2147483648
        %v2749 = vxor.u32 %v2705, 2147483648
        %v2750 = vmul.f32 %v2747, 1.442695
        %v2751 = vpow.pop %v2750
        %v2752 = vmul.f32 %v2748, 1.442695
        %v2753 = vpow.pop %v2752
        %v2754 = vmul.f32 %v2749, 1.442695
        %v2755 = vpow.pop %v2754
        %v2756 = vadd.f32 %v2751, 1.0
        %v2757 = vadd.f32 %v2753, 1.0
        %v2758 = vadd.f32 %v2755, 1.0
        %v2759 = vrcp.pop %v2756
        %v2760 = vmul.f32 %v2756, %v2759
        %v2761 = vsub.f32 1.0, %v2760
        %v2762 = vmul.f32 %v2759, %v2761
        %v2763 = vadd.f32 %v2759, %v2762
        %vm2764 = vweird.f32 %v2756
        %vm2765 = vweird.f32 %v2759
        %vm2766 = vmor %vm2764, %vm2765
        %v2767 = vsel %vm2766, %v2759, %v2763
        %v2768 = vand.u32 2147483647, %v2756
        %vm2769 = vcmp.eq.f32.partialorder %v2768, 8.507059e+37
        %v2770 = vand.u32 %v2756, 2147483648
        %v2771 = vor.u32 1.1754944e-38, %v2770
        %v2772 = vsel %vm2769, %v2771, %v2767
        %v2773 = vmul.f32 1.0, %v2772
        %v2774 = vrcp.pop %v2757
        %v2775 = vmul.f32 %v2757, %v2774
        %v2776 = vsub.f32 1.0, %v2775
        %v2777 = vmul.f32 %v2774, %v2776
        %v2778 = vadd.f32 %v2774, %v2777
        %vm2779 = vweird.f32 %v2757
        %vm2780 = vweird.f32 %v2774
        %vm2781 = vmor %vm2779, %vm2780
        %v2782 = vsel %vm2781, %v2774, %v2778
        %v2783 = vand.u32 2147483647, %v2757
        %vm2784 = vcmp.eq.f32.partialorder %v2783, 8.507059e+37
        %v2785 = vand.u32 %v2757, 2147483648
        %v2786 = vor.u32 1.1754944e-38, %v2785
        %v2787 = vsel %vm2784, %v2786, %v2782
        %v2788 = vmul.f32 1.0, %v2787
        %v2789 = vrcp.pop %v2758
        %v2790 = vmul.f32 %v2758, %v2789
        %v2791 = vsub.f32 1.0, %v2790
        %v2792 = vmul.f32 %v2789, %v2791
        %v2793 = vadd.f32 %v2789, %v2792
        %vm2794 = vweird.f32 %v2758
        %vm2795 = vweird.f32 %v2789
        %vm2796 = vmor %vm2794, %vm2795
        %v2797 = vsel %vm2796, %v2789, %v2793
        %v2798 = vand.u32 2147483647, %v2758
        %vm2799 = vcmp.eq.f32.partialorder %v2798, 8.507059e+37
        %v2800 = vand.u32 %v2758, 2147483648
        %v2801 = vor.u32 1.1754944e-38, %v2800
        %v2802 = vsel %vm2799, %v2801, %v2797
        %v2803 = vmul.f32 1.0, %v2802
        %v2804 = vtanh.pop %v2745
        %v2805 = vld [vmem:[#allocation3] sm:$0x1]
        %v2806 = vmul.f32 %v2788, %v2805
        %v2807 = vmul.f32 %v2773, %v2804
        %v2808 = vadd.f32 %v2806, %v2807
        %v2809 = vtanh.pop %v2808
        %v2810 = vmul.f32 %v2803, %v2809
        %v2811 = vld [vmem:[#allocation12] sm:$0xff]
        %v2812 = vld [vmem:[#allocation12 + $0x8] sm:$0xff]
        %v2813 = vld [vmem:[#allocation12 + $0x10] sm:$0xff]
        %v2814 = vld [vmem:[#allocation12 + $0x18] sm:$0xff]
        %v2815 = vld [vmem:[#allocation12 + $0x20] sm:$0xff]
        %v2816 = vld [vmem:[#allocation12 + $0x28] sm:$0xff]
        %v2817 = vld [vmem:[#allocation12 + $0x30] sm:$0xff]
        %v2818 = vld [vmem:[#allocation12 + $0x38] sm:$0xff]
        %v2819 = vld [vmem:[#allocation12 + $0x40] sm:$0xff]
        %v2820 = vld [vmem:[#allocation12 + $0x48] sm:$0xff]
        %v2821 = vld [vmem:[#allocation12 + $0x50] sm:$0xff]
        %v2822 = vld [vmem:[#allocation12 + $0x58] sm:$0xff]
        %v2823 = vld [vmem:[#allocation12 + $0x60] sm:$0xff]
        %v2824 = vld [vmem:[#allocation12 + $0x68] sm:$0xff]
        %v2825 = vld [vmem:[#allocation12 + $0x70] sm:$0xff]
        %v2826 = vld [vmem:[#allocation12 + $0x78] sm:$0xff]
        %v2827 = vld [vmem:[%s7] sm:$0x1]
        %2828 = vmatpush.msra.mxu0 %v2826
        %2829 = vmatpush.msra.mxu0 %v2825
        %2830 = vmatpush.msra.mxu0 %v2824
        %2831 = vmatpush.msra.mxu0 %v2823
        %2832 = vmatpush.msra.mxu0 %v2822
        %2833 = vmatpush.msra.mxu0 %v2821
        %2834 = vmatpush.msra.mxu0 %v2820
        %2835 = vmatpush.msra.mxu0 %v2819
        %2836 = vmatpush.msra.mxu0 %v2818
        %2837 = vmatpush.msra.mxu0 %v2817
        %2838 = vmatpush.msra.mxu0 %v2816
        %2839 = vmatpush.msra.mxu0 %v2815
        %2840 = vmatpush.msra.mxu0 %v2814
        %2841 = vmatpush.msra.mxu0 %v2813
        %2842 = vmatpush.msra.mxu0 %v2812
        %2843 = vmatpush.msra.mxu0 %v2811
        %2844 = vmatmul.f32.gmra.mxu0 %v2810
        %v2845 = vpop.f32.mrf.mxu0
        %v2846 = vadd.f32 %v2827, %v2845
        %2847 = vdwg.mxu0
        %2848 = vst [vmem:[%s354 + $0x5] sm:$0x1] %v2846
        %2849 = vst.msk [vmem:[#allocation2 + $0x1] sm:$0x1] %vm376, %v2810
        %2850 = vst [vmem:[#allocation3] sm:$0x1] %v2808
        %s2851 = sadd.s32 %s369, 6
        %s2852 = sld [smem:[#allocation5 + %s2851]]
        %s2853 = scalar_lea.vmem [#allocation6], %s2852
        %v2854 = vld [vmem:[%s2853] sm:$0x1]
        %2855 = vst.msk [vmem:[#allocation2] sm:$0x1] %vm376, %v2854
        %v2856 = vld [vmem:[#allocation2] sm:$0x3]
        %v2857 = vld [vmem:[#allocation9] sm:$0xff]
        %v2858 = vld [vmem:[#allocation9 + $0x8] sm:$0xff]
        %v2859 = vld [vmem:[#allocation9 + $0x10] sm:$0xff]
        %v2860 = vld [vmem:[#allocation9 + $0x18] sm:$0xff]
        %v2861 = vld [vmem:[#allocation9 + $0x20] sm:$0xff]
        %v2862 = vld [vmem:[#allocation9 + $0x28] sm:$0xff]
        %v2863 = vld [vmem:[#allocation9 + $0x30] sm:$0xff]
        %v2864 = vld [vmem:[#allocation9 + $0x38] sm:$0xff]
        %v2865 = vld [vmem:[#allocation9 + $0x40] sm:$0xff]
        %v2866 = vld [vmem:[#allocation9 + $0x48] sm:$0xff]
        %v2867 = vld [vmem:[#allocation9 + $0x50] sm:$0xff]
        %v2868 = vld [vmem:[#allocation9 + $0x58] sm:$0xff]
        %v2869 = vld [vmem:[#allocation9 + $0x60] sm:$0xff]
        %v2870 = vld [vmem:[#allocation9 + $0x68] sm:$0xff]
        %v2871 = vld [vmem:[#allocation9 + $0x70] sm:$0xff]
        %v2872 = vld [vmem:[#allocation9 + $0x78] sm:$0xff]
        %v2873 = vld [vmem:[#allocation9 + $0x80] sm:$0xff]
        %v2874 = vld [vmem:[#allocation9 + $0x88] sm:$0xff]
        %v2875 = vld [vmem:[#allocation9 + $0x90] sm:$0xff]
        %v2876 = vld [vmem:[#allocation9 + $0x98] sm:$0xff]
        %v2877 = vld [vmem:[#allocation9 + $0xa0] sm:$0xff]
        %v2878 = vld [vmem:[#allocation9 + $0xa8] sm:$0xff]
        %v2879 = vld [vmem:[#allocation9 + $0xb0] sm:$0xff]
        %v2880 = vld [vmem:[#allocation9 + $0xb8] sm:$0xff]
        %v2881 = vld [vmem:[#allocation9 + $0xc0] sm:$0xff]
        %v2882 = vld [vmem:[#allocation9 + $0xc8] sm:$0xff]
        %v2883 = vld [vmem:[#allocation9 + $0xd0] sm:$0xff]
        %v2884 = vld [vmem:[#allocation9 + $0xd8] sm:$0xff]
        %v2885 = vld [vmem:[#allocation9 + $0xe0] sm:$0xff]
        %v2886 = vld [vmem:[#allocation9 + $0xe8] sm:$0xff]
        %v2887 = vld [vmem:[#allocation9 + $0xf0] sm:$0xff]
        %v2888 = vld [vmem:[#allocation9 + $0xf8] sm:$0xff]
        %v2889 = vld [vmem:[#allocation9 + $0x100] sm:$0xff]
        %v2890 = vld [vmem:[#allocation9 + $0x108] sm:$0xff]
        %v2891 = vld [vmem:[#allocation9 + $0x110] sm:$0xff]
        %v2892 = vld [vmem:[#allocation9 + $0x118] sm:$0xff]
        %v2893 = vld [vmem:[#allocation9 + $0x120] sm:$0xff]
        %v2894 = vld [vmem:[#allocation9 + $0x128] sm:$0xff]
        %v2895 = vld [vmem:[#allocation9 + $0x130] sm:$0xff]
        %v2896 = vld [vmem:[#allocation9 + $0x138] sm:$0xff]
        %v2897 = vld [vmem:[#allocation9 + $0x140] sm:$0xff]
        %v2898 = vld [vmem:[#allocation9 + $0x148] sm:$0xff]
        %v2899 = vld [vmem:[#allocation9 + $0x150] sm:$0xff]
        %v2900 = vld [vmem:[#allocation9 + $0x158] sm:$0xff]
        %v2901 = vld [vmem:[#allocation9 + $0x160] sm:$0xff]
        %v2902 = vld [vmem:[#allocation9 + $0x168] sm:$0xff]
        %v2903 = vld [vmem:[#allocation9 + $0x170] sm:$0xff]
        %v2904 = vld [vmem:[#allocation9 + $0x178] sm:$0xff]
        %v2905 = vld [vmem:[#allocation9 + $0x180] sm:$0xff]
        %v2906 = vld [vmem:[#allocation9 + $0x188] sm:$0xff]
        %v2907 = vld [vmem:[#allocation9 + $0x190] sm:$0xff]
        %v2908 = vld [vmem:[#allocation9 + $0x198] sm:$0xff]
        %v2909 = vld [vmem:[#allocation9 + $0x1a0] sm:$0xff]
        %v2910 = vld [vmem:[#allocation9 + $0x1a8] sm:$0xff]
        %v2911 = vld [vmem:[#allocation9 + $0x1b0] sm:$0xff]
        %v2912 = vld [vmem:[#allocation9 + $0x1b8] sm:$0xff]
        %v2913 = vld [vmem:[#allocation9 + $0x1c0] sm:$0xff]
        %v2914 = vld [vmem:[#allocation9 + $0x1c8] sm:$0xff]
        %v2915 = vld [vmem:[#allocation9 + $0x1d0] sm:$0xff]
        %v2916 = vld [vmem:[#allocation9 + $0x1d8] sm:$0xff]
        %v2917 = vld [vmem:[#allocation9 + $0x1e0] sm:$0xff]
        %v2918 = vld [vmem:[#allocation9 + $0x1e8] sm:$0xff]
        %v2919 = vld [vmem:[#allocation9 + $0x1f0] sm:$0xff]
        %v2920 = vld [vmem:[#allocation9 + $0x1f8] sm:$0xff]
        %v2921 = vld [vmem:[#allocation9 + $0x200] sm:$0xff]
        %v2922 = vld [vmem:[#allocation9 + $0x208] sm:$0xff]
        %v2923 = vld [vmem:[#allocation9 + $0x210] sm:$0xff]
        %v2924 = vld [vmem:[#allocation9 + $0x218] sm:$0xff]
        %v2925 = vld [vmem:[#allocation9 + $0x220] sm:$0xff]
        %v2926 = vld [vmem:[#allocation9 + $0x228] sm:$0xff]
        %v2927 = vld [vmem:[#allocation9 + $0x230] sm:$0xff]
        %v2928 = vld [vmem:[#allocation9 + $0x238] sm:$0xff]
        %v2929 = vld [vmem:[#allocation9 + $0x240] sm:$0xff]
        %v2930 = vld [vmem:[#allocation9 + $0x248] sm:$0xff]
        %v2931 = vld [vmem:[#allocation9 + $0x250] sm:$0xff]
        %v2932 = vld [vmem:[#allocation9 + $0x258] sm:$0xff]
        %v2933 = vld [vmem:[#allocation9 + $0x260] sm:$0xff]
        %v2934 = vld [vmem:[#allocation9 + $0x268] sm:$0xff]
        %v2935 = vld [vmem:[#allocation9 + $0x270] sm:$0xff]
        %v2936 = vld [vmem:[#allocation9 + $0x278] sm:$0xff]
        %v2937 = vld [vmem:[#allocation9 + $0x280] sm:$0xff]
        %v2938 = vld [vmem:[#allocation9 + $0x288] sm:$0xff]
        %v2939 = vld [vmem:[#allocation9 + $0x290] sm:$0xff]
        %v2940 = vld [vmem:[#allocation9 + $0x298] sm:$0xff]
        %v2941 = vld [vmem:[#allocation9 + $0x2a0] sm:$0xff]
        %v2942 = vld [vmem:[#allocation9 + $0x2a8] sm:$0xff]
        %v2943 = vld [vmem:[#allocation9 + $0x2b0] sm:$0xff]
        %v2944 = vld [vmem:[#allocation9 + $0x2b8] sm:$0xff]
        %v2945 = vld [vmem:[#allocation9 + $0x2c0] sm:$0xff]
        %v2946 = vld [vmem:[#allocation9 + $0x2c8] sm:$0xff]
        %v2947 = vld [vmem:[#allocation9 + $0x2d0] sm:$0xff]
        %v2948 = vld [vmem:[#allocation9 + $0x2d8] sm:$0xff]
        %v2949 = vld [vmem:[#allocation9 + $0x2e0] sm:$0xff]
        %v2950 = vld [vmem:[#allocation9 + $0x2e8] sm:$0xff]
        %v2951 = vld [vmem:[#allocation9 + $0x2f0] sm:$0xff]
        %v2952 = vld [vmem:[#allocation9 + $0x2f8] sm:$0xff]
        %v2953 = vld [vmem:[#allocation9 + $0x300] sm:$0xff]
        %v2954 = vld [vmem:[#allocation9 + $0x308] sm:$0xff]
        %v2955 = vld [vmem:[#allocation9 + $0x310] sm:$0xff]
        %v2956 = vld [vmem:[#allocation9 + $0x318] sm:$0xff]
        %v2957 = vld [vmem:[#allocation9 + $0x320] sm:$0xff]
        %v2958 = vld [vmem:[#allocation9 + $0x328] sm:$0xff]
        %v2959 = vld [vmem:[#allocation9 + $0x330] sm:$0xff]
        %v2960 = vld [vmem:[#allocation9 + $0x338] sm:$0xff]
        %v2961 = vld [vmem:[#allocation9 + $0x340] sm:$0xff]
        %v2962 = vld [vmem:[#allocation9 + $0x348] sm:$0xff]
        %v2963 = vld [vmem:[#allocation9 + $0x350] sm:$0xff]
        %v2964 = vld [vmem:[#allocation9 + $0x358] sm:$0xff]
        %v2965 = vld [vmem:[#allocation9 + $0x360] sm:$0xff]
        %v2966 = vld [vmem:[#allocation9 + $0x368] sm:$0xff]
        %v2967 = vld [vmem:[#allocation9 + $0x370] sm:$0xff]
        %v2968 = vld [vmem:[#allocation9 + $0x378] sm:$0xff]
        %v2969 = vld [vmem:[#allocation9 + $0x380] sm:$0xff]
        %v2970 = vld [vmem:[#allocation9 + $0x388] sm:$0xff]
        %v2971 = vld [vmem:[#allocation9 + $0x390] sm:$0xff]
        %v2972 = vld [vmem:[#allocation9 + $0x398] sm:$0xff]
        %v2973 = vld [vmem:[#allocation9 + $0x3a0] sm:$0xff]
        %v2974 = vld [vmem:[#allocation9 + $0x3a8] sm:$0xff]
        %v2975 = vld [vmem:[#allocation9 + $0x3b0] sm:$0xff]
        %v2976 = vld [vmem:[#allocation9 + $0x3b8] sm:$0xff]
        %v2977 = vld [vmem:[#allocation9 + $0x3c0] sm:$0xff]
        %v2978 = vld [vmem:[#allocation9 + $0x3c8] sm:$0xff]
        %v2979 = vld [vmem:[#allocation9 + $0x3d0] sm:$0xff]
        %v2980 = vld [vmem:[#allocation9 + $0x3d8] sm:$0xff]
        %v2981 = vld [vmem:[#allocation9 + $0x3e0] sm:$0xff]
        %v2982 = vld [vmem:[#allocation9 + $0x3e8] sm:$0xff]
        %v2983 = vld [vmem:[#allocation9 + $0x3f0] sm:$0xff]
        %v2984 = vld [vmem:[#allocation9 + $0x3f8] sm:$0xff]
        %v2985 = vld [vmem:[#allocation11] sm:$0xf]
        %v2987 = vperm.slane %v2856, 0
        %v2988 = vperm.slane %v2856, 1
        %v2992 = vperm.slane %v2985, 0
        %v2993 = vperm.slane %v2985, 1
        %v2994 = vperm.slane %v2985, 2
        %v2995 = vperm.slane %v2985, 3
        %3000 = vmatpush.msra.mxu0 %v2917
        %3001 = vmatpush.msra.mxu0 %v2913
        %3002 = vmatpush.msra.mxu0 %v2909
        %3003 = vmatpush.msra.mxu0 %v2905
        %3004 = vmatpush.msra.mxu0 %v2901
        %3005 = vmatpush.msra.mxu0 %v2897
        %3006 = vmatpush.msra.mxu0 %v2893
        %3007 = vmatpush.msra.mxu0 %v2889
        %3008 = vmatpush.msra.mxu0 %v2885
        %3009 = vmatpush.msra.mxu0 %v2881
        %3010 = vmatpush.msra.mxu0 %v2877
        %3011 = vmatpush.msra.mxu0 %v2873
        %3012 = vmatpush.msra.mxu0 %v2869
        %3013 = vmatpush.msra.mxu0 %v2865
        %3014 = vmatpush.msra.mxu0 %v2861
        %3015 = vmatpush.msra.mxu0 %v2857
        %3016 = vmatmul.f32.gmra.mxu0 %v2987
        %v3017 = vpop.f32.mrf.mxu0
        %v3018 = vadd.f32 %v2992, %v3017
        %3019 = vdwg.mxu0
        %3020 = vmatpush.msra.mxu0 %v2981
        %3021 = vmatpush.msra.mxu0 %v2977
        %3022 = vmatpush.msra.mxu0 %v2973
        %3023 = vmatpush.msra.mxu0 %v2969
        %3024 = vmatpush.msra.mxu0 %v2965
        %3025 = vmatpush.msra.mxu0 %v2961
        %3026 = vmatpush.msra.mxu0 %v2957
        %3027 = vmatpush.msra.mxu0 %v2953
        %3028 = vmatpush.msra.mxu0 %v2949
        %3029 = vmatpush.msra.mxu0 %v2945
        %3030 = vmatpush.msra.mxu0 %v2941
        %3031 = vmatpush.msra.mxu0 %v2937
        %3032 = vmatpush.msra.mxu0 %v2933
        %3033 = vmatpush.msra.mxu0 %v2929
        %3034 = vmatpush.msra.mxu0 %v2925
        %3035 = vmatpush.msra.mxu0 %v2921
        %3036 = vmatmul.f32.gmra.mxu0 %v2988
        %v3037 = vpop.f32.mrf.mxu0
        %v3038 = vadd.f32 %v3018, %v3037
        %3039 = vdwg.mxu0
        %3040 = vmatpush.msra.mxu0 %v2918
        %3041 = vmatpush.msra.mxu0 %v2914
        %3042 = vmatpush.msra.mxu0 %v2910
        %3043 = vmatpush.msra.mxu0 %v2906
        %3044 = vmatpush.msra.mxu0 %v2902
        %3045 = vmatpush.msra.mxu0 %v2898
        %3046 = vmatpush.msra.mxu0 %v2894
        %3047 = vmatpush.msra.mxu0 %v2890
        %3048 = vmatpush.msra.mxu0 %v2886
        %3049 = vmatpush.msra.mxu0 %v2882
        %3050 = vmatpush.msra.mxu0 %v2878
        %3051 = vmatpush.msra.mxu0 %v2874
        %3052 = vmatpush.msra.mxu0 %v2870
        %3053 = vmatpush.msra.mxu0 %v2866
        %3054 = vmatpush.msra.mxu0 %v2862
        %3055 = vmatpush.msra.mxu0 %v2858
        %3056 = vmatmul.f32.gmra.mxu0 %v2987
        %v3057 = vpop.f32.mrf.mxu0
        %v3058 = vadd.f32 %v2993, %v3057
        %3059 = vdwg.mxu0
        %3060 = vmatpush.msra.mxu0 %v2982
        %3061 = vmatpush.msra.mxu0 %v2978
        %3062 = vmatpush.msra.mxu0 %v2974
        %3063 = vmatpush.msra.mxu0 %v2970
        %3064 = vmatpush.msra.mxu0 %v2966
        %3065 = vmatpush.msra.mxu0 %v2962
        %3066 = vmatpush.msra.mxu0 %v2958
        %3067 = vmatpush.msra.mxu0 %v2954
        %3068 = vmatpush.msra.mxu0 %v2950
        %3069 = vmatpush.msra.mxu0 %v2946
        %3070 = vmatpush.msra.mxu0 %v2942
        %3071 = vmatpush.msra.mxu0 %v2938
        %3072 = vmatpush.msra.mxu0 %v2934
        %3073 = vmatpush.msra.mxu0 %v2930
        %3074 = vmatpush.msra.mxu0 %v2926
        %3075 = vmatpush.msra.mxu0 %v2922
        %3076 = vmatmul.f32.gmra.mxu0 %v2988
        %v3077 = vpop.f32.mrf.mxu0
        %v3078 = vadd.f32 %v3058, %v3077
        %3079 = vdwg.mxu0
        %3080 = vmatpush.msra.mxu0 %v2919
        %3081 = vmatpush.msra.mxu0 %v2915
        %3082 = vmatpush.msra.mxu0 %v2911
        %3083 = vmatpush.msra.mxu0 %v2907
        %3084 = vmatpush.msra.mxu0 %v2903
        %3085 = vmatpush.msra.mxu0 %v2899
        %3086 = vmatpush.msra.mxu0 %v2895
        %3087 = vmatpush.msra.mxu0 %v2891
        %3088 = vmatpush.msra.mxu0 %v2887
        %3089 = vmatpush.msra.mxu0 %v2883
        %3090 = vmatpush.msra.mxu0 %v2879
        %3091 = vmatpush.msra.mxu0 %v2875
        %3092 = vmatpush.msra.mxu0 %v2871
        %3093 = vmatpush.msra.mxu0 %v2867
        %3094 = vmatpush.msra.mxu0 %v2863
        %3095 = vmatpush.msra.mxu0 %v2859
        %3096 = vmatmul.f32.gmra.mxu0 %v2987
        %v3097 = vpop.f32.mrf.mxu0
        %v3098 = vadd.f32 %v2994, %v3097
        %3099 = vdwg.mxu0
        %3100 = vmatpush.msra.mxu0 %v2983
        %3101 = vmatpush.msra.mxu0 %v2979
        %3102 = vmatpush.msra.mxu0 %v2975
        %3103 = vmatpush.msra.mxu0 %v2971
        %3104 = vmatpush.msra.mxu0 %v2967
        %3105 = vmatpush.msra.mxu0 %v2963
        %3106 = vmatpush.msra.mxu0 %v2959
        %3107 = vmatpush.msra.mxu0 %v2955
        %3108 = vmatpush.msra.mxu0 %v2951
        %3109 = vmatpush.msra.mxu0 %v2947
        %3110 = vmatpush.msra.mxu0 %v2943
        %3111 = vmatpush.msra.mxu0 %v2939
        %3112 = vmatpush.msra.mxu0 %v2935
        %3113 = vmatpush.msra.mxu0 %v2931
        %3114 = vmatpush.msra.mxu0 %v2927
        %3115 = vmatpush.msra.mxu0 %v2923
        %3116 = vmatmul.f32.gmra.mxu0 %v2988
        %v3117 = vpop.f32.mrf.mxu0
        %v3118 = vadd.f32 %v3098, %v3117
        %3119 = vdwg.mxu0
        %3120 = vmatpush.msra.mxu0 %v2920
        %3121 = vmatpush.msra.mxu0 %v2916
        %3122 = vmatpush.msra.mxu0 %v2912
        %3123 = vmatpush.msra.mxu0 %v2908
        %3124 = vmatpush.msra.mxu0 %v2904
        %3125 = vmatpush.msra.mxu0 %v2900
        %3126 = vmatpush.msra.mxu0 %v2896
        %3127 = vmatpush.msra.mxu0 %v2892
        %3128 = vmatpush.msra.mxu0 %v2888
        %3129 = vmatpush.msra.mxu0 %v2884
        %3130 = vmatpush.msra.mxu0 %v2880
        %3131 = vmatpush.msra.mxu0 %v2876
        %3132 = vmatpush.msra.mxu0 %v2872
        %3133 = vmatpush.msra.mxu0 %v2868
        %3134 = vmatpush.msra.mxu0 %v2864
        %3135 = vmatpush.msra.mxu0 %v2860
        %3136 = vmatmul.f32.gmra.mxu0 %v2987
        %v3137 = vpop.f32.mrf.mxu0
        %v3138 = vadd.f32 %v2995, %v3137
        %3139 = vdwg.mxu0
        %3140 = vmatpush.msra.mxu0 %v2984
        %3141 = vmatpush.msra.mxu0 %v2980
        %3142 = vmatpush.msra.mxu0 %v2976
        %3143 = vmatpush.msra.mxu0 %v2972
        %3144 = vmatpush.msra.mxu0 %v2968
        %3145 = vmatpush.msra.mxu0 %v2964
        %3146 = vmatpush.msra.mxu0 %v2960
        %3147 = vmatpush.msra.mxu0 %v2956
        %3148 = vmatpush.msra.mxu0 %v2952
        %3149 = vmatpush.msra.mxu0 %v2948
        %3150 = vmatpush.msra.mxu0 %v2944
        %3151 = vmatpush.msra.mxu0 %v2940
        %3152 = vmatpush.msra.mxu0 %v2936
        %3153 = vmatpush.msra.mxu0 %v2932
        %3154 = vmatpush.msra.mxu0 %v2928
        %3155 = vmatpush.msra.mxu0 %v2924
        %3156 = vmatmul.f32.gmra.mxu0 %v2988
        %v3157 = vpop.f32.mrf.mxu0
        %v3158 = vadd.f32 %v3138, %v3157
        %3159 = vdwg.mxu0
        %v3160 = vxor.u32 %v3038, 2147483648
        %v3161 = vxor.u32 %v3078, 2147483648
        %v3162 = vxor.u32 %v3118, 2147483648
        %v3163 = vmul.f32 %v3160, 1.442695
        %v3164 = vpow.pop %v3163
        %v3165 = vmul.f32 %v3161, 1.442695
        %v3166 = vpow.pop %v3165
        %v3167 = vmul.f32 %v3162, 1.442695
        %v3168 = vpow.pop %v3167
        %v3169 = vadd.f32 %v3164, 1.0
        %v3170 = vadd.f32 %v3166, 1.0
        %v3171 = vadd.f32 %v3168, 1.0
        %v3172 = vrcp.pop %v3169
        %v3173 = vmul.f32 %v3169, %v3172
        %v3174 = vsub.f32 1.0, %v3173
        %v3175 = vmul.f32 %v3172, %v3174
        %v3176 = vadd.f32 %v3172, %v3175
        %vm3177 = vweird.f32 %v3169
        %vm3178 = vweird.f32 %v3172
        %vm3179 = vmor %vm3177, %vm3178
        %v3180 = vsel %vm3179, %v3172, %v3176
        %v3181 = vand.u32 2147483647, %v3169
        %vm3182 = vcmp.eq.f32.partialorder %v3181, 8.507059e+37
        %v3183 = vand.u32 %v3169, 2147483648
        %v3184 = vor.u32 1.1754944e-38, %v3183
        %v3185 = vsel %vm3182, %v3184, %v3180
        %v3186 = vmul.f32 1.0, %v3185
        %v3187 = vrcp.pop %v3170
        %v3188 = vmul.f32 %v3170, %v3187
        %v3189 = vsub.f32 1.0, %v3188
        %v3190 = vmul.f32 %v3187, %v3189
        %v3191 = vadd.f32 %v3187, %v3190
        %vm3192 = vweird.f32 %v3170
        %vm3193 = vweird.f32 %v3187
        %vm3194 = vmor %vm3192, %vm3193
        %v3195 = vsel %vm3194, %v3187, %v3191
        %v3196 = vand.u32 2147483647, %v3170
        %vm3197 = vcmp.eq.f32.partialorder %v3196, 8.507059e+37
        %v3198 = vand.u32 %v3170, 2147483648
        %v3199 = vor.u32 1.1754944e-38, %v3198
        %v3200 = vsel %vm3197, %v3199, %v3195
        %v3201 = vmul.f32 1.0, %v3200
        %v3202 = vrcp.pop %v3171
        %v3203 = vmul.f32 %v3171, %v3202
        %v3204 = vsub.f32 1.0, %v3203
        %v3205 = vmul.f32 %v3202, %v3204
        %v3206 = vadd.f32 %v3202, %v3205
        %vm3207 = vweird.f32 %v3171
        %vm3208 = vweird.f32 %v3202
        %vm3209 = vmor %vm3207, %vm3208
        %v3210 = vsel %vm3209, %v3202, %v3206
        %v3211 = vand.u32 2147483647, %v3171
        %vm3212 = vcmp.eq.f32.partialorder %v3211, 8.507059e+37
        %v3213 = vand.u32 %v3171, 2147483648
        %v3214 = vor.u32 1.1754944e-38, %v3213
        %v3215 = vsel %vm3212, %v3214, %v3210
        %v3216 = vmul.f32 1.0, %v3215
        %v3217 = vtanh.pop %v3158
        %v3218 = vld [vmem:[#allocation3] sm:$0x1]
        %v3219 = vmul.f32 %v3201, %v3218
        %v3220 = vmul.f32 %v3186, %v3217
        %v3221 = vadd.f32 %v3219, %v3220
        %v3222 = vtanh.pop %v3221
        %v3223 = vmul.f32 %v3216, %v3222
        %v3224 = vld [vmem:[#allocation12] sm:$0xff]
        %v3225 = vld [vmem:[#allocation12 + $0x8] sm:$0xff]
        %v3226 = vld [vmem:[#allocation12 + $0x10] sm:$0xff]
        %v3227 = vld [vmem:[#allocation12 + $0x18] sm:$0xff]
        %v3228 = vld [vmem:[#allocation12 + $0x20] sm:$0xff]
        %v3229 = vld [vmem:[#allocation12 + $0x28] sm:$0xff]
        %v3230 = vld [vmem:[#allocation12 + $0x30] sm:$0xff]
        %v3231 = vld [vmem:[#allocation12 + $0x38] sm:$0xff]
        %v3232 = vld [vmem:[#allocation12 + $0x40] sm:$0xff]
        %v3233 = vld [vmem:[#allocation12 + $0x48] sm:$0xff]
        %v3234 = vld [vmem:[#allocation12 + $0x50] sm:$0xff]
        %v3235 = vld [vmem:[#allocation12 + $0x58] sm:$0xff]
        %v3236 = vld [vmem:[#allocation12 + $0x60] sm:$0xff]
        %v3237 = vld [vmem:[#allocation12 + $0x68] sm:$0xff]
        %v3238 = vld [vmem:[#allocation12 + $0x70] sm:$0xff]
        %v3239 = vld [vmem:[#allocation12 + $0x78] sm:$0xff]
        %v3240 = vld [vmem:[%s7] sm:$0x1]
        %3241 = vmatpush.msra.mxu0 %v3239
        %3242 = vmatpush.msra.mxu0 %v3238
        %3243 = vmatpush.msra.mxu0 %v3237
        %3244 = vmatpush.msra.mxu0 %v3236
        %3245 = vmatpush.msra.mxu0 %v3235
        %3246 = vmatpush.msra.mxu0 %v3234
        %3247 = vmatpush.msra.mxu0 %v3233
        %3248 = vmatpush.msra.mxu0 %v3232
        %3249 = vmatpush.msra.mxu0 %v3231
        %3250 = vmatpush.msra.mxu0 %v3230
        %3251 = vmatpush.msra.mxu0 %v3229
        %3252 = vmatpush.msra.mxu0 %v3228
        %3253 = vmatpush.msra.mxu0 %v3227
        %3254 = vmatpush.msra.mxu0 %v3226
        %3255 = vmatpush.msra.mxu0 %v3225
        %3256 = vmatpush.msra.mxu0 %v3224
        %3257 = vmatmul.f32.gmra.mxu0 %v3223
        %v3258 = vpop.f32.mrf.mxu0
        %v3259 = vadd.f32 %v3240, %v3258
        %3260 = vdwg.mxu0
        %3261 = vst [vmem:[%s354 + $0x6] sm:$0x1] %v3259
        %3262 = vst.msk [vmem:[#allocation2 + $0x1] sm:$0x1] %vm376, %v3223
        %3263 = vst [vmem:[#allocation3] sm:$0x1] %v3221
        %s3264 = sadd.s32 %s369, 7
        %s3265 = sld [smem:[#allocation5 + %s3264]]
        %s3266 = scalar_lea.vmem [#allocation6], %s3265
        %v3267 = vld [vmem:[%s3266] sm:$0x1]
        %3268 = vst.msk [vmem:[#allocation2] sm:$0x1] %vm376, %v3267
        %v3269 = vld [vmem:[#allocation2] sm:$0x3]
        %v3270 = vld [vmem:[#allocation9] sm:$0xff]
        %v3271 = vld [vmem:[#allocation9 + $0x8] sm:$0xff]
        %v3272 = vld [vmem:[#allocation9 + $0x10] sm:$0xff]
        %v3273 = vld [vmem:[#allocation9 + $0x18] sm:$0xff]
        %v3274 = vld [vmem:[#allocation9 + $0x20] sm:$0xff]
        %v3275 = vld [vmem:[#allocation9 + $0x28] sm:$0xff]
        %v3276 = vld [vmem:[#allocation9 + $0x30] sm:$0xff]
        %v3277 = vld [vmem:[#allocation9 + $0x38] sm:$0xff]
        %v3278 = vld [vmem:[#allocation9 + $0x40] sm:$0xff]
        %v3279 = vld [vmem:[#allocation9 + $0x48] sm:$0xff]
        %v3280 = vld [vmem:[#allocation9 + $0x50] sm:$0xff]
        %v3281 = vld [vmem:[#allocation9 + $0x58] sm:$0xff]
        %v3282 = vld [vmem:[#allocation9 + $0x60] sm:$0xff]
        %v3283 = vld [vmem:[#allocation9 + $0x68] sm:$0xff]
        %v3284 = vld [vmem:[#allocation9 + $0x70] sm:$0xff]
        %v3285 = vld [vmem:[#allocation9 + $0x78] sm:$0xff]
        %v3286 = vld [vmem:[#allocation9 + $0x80] sm:$0xff]
        %v3287 = vld [vmem:[#allocation9 + $0x88] sm:$0xff]
        %v3288 = vld [vmem:[#allocation9 + $0x90] sm:$0xff]
        %v3289 = vld [vmem:[#allocation9 + $0x98] sm:$0xff]
        %v3290 = vld [vmem:[#allocation9 + $0xa0] sm:$0xff]
        %v3291 = vld [vmem:[#allocation9 + $0xa8] sm:$0xff]
        %v3292 = vld [vmem:[#allocation9 + $0xb0] sm:$0xff]
        %v3293 = vld [vmem:[#allocation9 + $0xb8] sm:$0xff]
        %v3294 = vld [vmem:[#allocation9 + $0xc0] sm:$0xff]
        %v3295 = vld [vmem:[#allocation9 + $0xc8] sm:$0xff]
        %v3296 = vld [vmem:[#allocation9 + $0xd0] sm:$0xff]
        %v3297 = vld [vmem:[#allocation9 + $0xd8] sm:$0xff]
        %v3298 = vld [vmem:[#allocation9 + $0xe0] sm:$0xff]
        %v3299 = vld [vmem:[#allocation9 + $0xe8] sm:$0xff]
        %v3300 = vld [vmem:[#allocation9 + $0xf0] sm:$0xff]
        %v3301 = vld [vmem:[#allocation9 + $0xf8] sm:$0xff]
        %v3302 = vld [vmem:[#allocation9 + $0x100] sm:$0xff]
        %v3303 = vld [vmem:[#allocation9 + $0x108] sm:$0xff]
        %v3304 = vld [vmem:[#allocation9 + $0x110] sm:$0xff]
        %v3305 = vld [vmem:[#allocation9 + $0x118] sm:$0xff]
        %v3306 = vld [vmem:[#allocation9 + $0x120] sm:$0xff]
        %v3307 = vld [vmem:[#allocation9 + $0x128] sm:$0xff]
        %v3308 = vld [vmem:[#allocation9 + $0x130] sm:$0xff]
        %v3309 = vld [vmem:[#allocation9 + $0x138] sm:$0xff]
        %v3310 = vld [vmem:[#allocation9 + $0x140] sm:$0xff]
        %v3311 = vld [vmem:[#allocation9 + $0x148] sm:$0xff]
        %v3312 = vld [vmem:[#allocation9 + $0x150] sm:$0xff]
        %v3313 = vld [vmem:[#allocation9 + $0x158] sm:$0xff]
        %v3314 = vld [vmem:[#allocation9 + $0x160] sm:$0xff]
        %v3315 = vld [vmem:[#allocation9 + $0x168] sm:$0xff]
        %v3316 = vld [vmem:[#allocation9 + $0x170] sm:$0xff]
        %v3317 = vld [vmem:[#allocation9 + $0x178] sm:$0xff]
        %v3318 = vld [vmem:[#allocation9 + $0x180] sm:$0xff]
        %v3319 = vld [vmem:[#allocation9 + $0x188] sm:$0xff]
        %v3320 = vld [vmem:[#allocation9 + $0x190] sm:$0xff]
        %v3321 = vld [vmem:[#allocation9 + $0x198] sm:$0xff]
        %v3322 = vld [vmem:[#allocation9 + $0x1a0] sm:$0xff]
        %v3323 = vld [vmem:[#allocation9 + $0x1a8] sm:$0xff]
        %v3324 = vld [vmem:[#allocation9 + $0x1b0] sm:$0xff]
        %v3325 = vld [vmem:[#allocation9 + $0x1b8] sm:$0xff]
        %v3326 = vld [vmem:[#allocation9 + $0x1c0] sm:$0xff]
        %v3327 = vld [vmem:[#allocation9 + $0x1c8] sm:$0xff]
        %v3328 = vld [vmem:[#allocation9 + $0x1d0] sm:$0xff]
        %v3329 = vld [vmem:[#allocation9 + $0x1d8] sm:$0xff]
        %v3330 = vld [vmem:[#allocation9 + $0x1e0] sm:$0xff]
        %v3331 = vld [vmem:[#allocation9 + $0x1e8] sm:$0xff]
        %v3332 = vld [vmem:[#allocation9 + $0x1f0] sm:$0xff]
        %v3333 = vld [vmem:[#allocation9 + $0x1f8] sm:$0xff]
        %v3334 = vld [vmem:[#allocation9 + $0x200] sm:$0xff]
        %v3335 = vld [vmem:[#allocation9 + $0x208] sm:$0xff]
        %v3336 = vld [vmem:[#allocation9 + $0x210] sm:$0xff]
        %v3337 = vld [vmem:[#allocation9 + $0x218] sm:$0xff]
        %v3338 = vld [vmem:[#allocation9 + $0x220] sm:$0xff]
        %v3339 = vld [vmem:[#allocation9 + $0x228] sm:$0xff]
        %v3340 = vld [vmem:[#allocation9 + $0x230] sm:$0xff]
        %v3341 = vld [vmem:[#allocation9 + $0x238] sm:$0xff]
        %v3342 = vld [vmem:[#allocation9 + $0x240] sm:$0xff]
        %v3343 = vld [vmem:[#allocation9 + $0x248] sm:$0xff]
        %v3344 = vld [vmem:[#allocation9 + $0x250] sm:$0xff]
        %v3345 = vld [vmem:[#allocation9 + $0x258] sm:$0xff]
        %v3346 = vld [vmem:[#allocation9 + $0x260] sm:$0xff]
        %v3347 = vld [vmem:[#allocation9 + $0x268] sm:$0xff]
        %v3348 = vld [vmem:[#allocation9 + $0x270] sm:$0xff]
        %v3349 = vld [vmem:[#allocation9 + $0x278] sm:$0xff]
        %v3350 = vld [vmem:[#allocation9 + $0x280] sm:$0xff]
        %v3351 = vld [vmem:[#allocation9 + $0x288] sm:$0xff]
        %v3352 = vld [vmem:[#allocation9 + $0x290] sm:$0xff]
        %v3353 = vld [vmem:[#allocation9 + $0x298] sm:$0xff]
        %v3354 = vld [vmem:[#allocation9 + $0x2a0] sm:$0xff]
        %v3355 = vld [vmem:[#allocation9 + $0x2a8] sm:$0xff]
        %v3356 = vld [vmem:[#allocation9 + $0x2b0] sm:$0xff]
        %v3357 = vld [vmem:[#allocation9 + $0x2b8] sm:$0xff]
        %v3358 = vld [vmem:[#allocation9 + $0x2c0] sm:$0xff]
        %v3359 = vld [vmem:[#allocation9 + $0x2c8] sm:$0xff]
        %v3360 = vld [vmem:[#allocation9 + $0x2d0] sm:$0xff]
        %v3361 = vld [vmem:[#allocation9 + $0x2d8] sm:$0xff]
        %v3362 = vld [vmem:[#allocation9 + $0x2e0] sm:$0xff]
        %v3363 = vld [vmem:[#allocation9 + $0x2e8] sm:$0xff]
        %v3364 = vld [vmem:[#allocation9 + $0x2f0] sm:$0xff]
        %v3365 = vld [vmem:[#allocation9 + $0x2f8] sm:$0xff]
        %v3366 = vld [vmem:[#allocation9 + $0x300] sm:$0xff]
        %v3367 = vld [vmem:[#allocation9 + $0x308] sm:$0xff]
        %v3368 = vld [vmem:[#allocation9 + $0x310] sm:$0xff]
        %v3369 = vld [vmem:[#allocation9 + $0x318] sm:$0xff]
        %v3370 = vld [vmem:[#allocation9 + $0x320] sm:$0xff]
        %v3371 = vld [vmem:[#allocation9 + $0x328] sm:$0xff]
        %v3372 = vld [vmem:[#allocation9 + $0x330] sm:$0xff]
        %v3373 = vld [vmem:[#allocation9 + $0x338] sm:$0xff]
        %v3374 = vld [vmem:[#allocation9 + $0x340] sm:$0xff]
        %v3375 = vld [vmem:[#allocation9 + $0x348] sm:$0xff]
        %v3376 = vld [vmem:[#allocation9 + $0x350] sm:$0xff]
        %v3377 = vld [vmem:[#allocation9 + $0x358] sm:$0xff]
        %v3378 = vld [vmem:[#allocation9 + $0x360] sm:$0xff]
        %v3379 = vld [vmem:[#allocation9 + $0x368] sm:$0xff]
        %v3380 = vld [vmem:[#allocation9 + $0x370] sm:$0xff]
        %v3381 = vld [vmem:[#allocation9 + $0x378] sm:$0xff]
        %v3382 = vld [vmem:[#allocation9 + $0x380] sm:$0xff]
        %v3383 = vld [vmem:[#allocation9 + $0x388] sm:$0xff]
        %v3384 = vld [vmem:[#allocation9 + $0x390] sm:$0xff]
        %v3385 = vld [vmem:[#allocation9 + $0x398] sm:$0xff]
        %v3386 = vld [vmem:[#allocation9 + $0x3a0] sm:$0xff]
        %v3387 = vld [vmem:[#allocation9 + $0x3a8] sm:$0xff]
        %v3388 = vld [vmem:[#allocation9 + $0x3b0] sm:$0xff]
        %v3389 = vld [vmem:[#allocation9 + $0x3b8] sm:$0xff]
        %v3390 = vld [vmem:[#allocation9 + $0x3c0] sm:$0xff]
        %v3391 = vld [vmem:[#allocation9 + $0x3c8] sm:$0xff]
        %v3392 = vld [vmem:[#allocation9 + $0x3d0] sm:$0xff]
        %v3393 = vld [vmem:[#allocation9 + $0x3d8] sm:$0xff]
        %v3394 = vld [vmem:[#allocation9 + $0x3e0] sm:$0xff]
        %v3395 = vld [vmem:[#allocation9 + $0x3e8] sm:$0xff]
        %v3396 = vld [vmem:[#allocation9 + $0x3f0] sm:$0xff]
        %v3397 = vld [vmem:[#allocation9 + $0x3f8] sm:$0xff]
        %v3398 = vld [vmem:[#allocation11] sm:$0xf]
        %v3400 = vperm.slane %v3269, 0
        %v3401 = vperm.slane %v3269, 1
        %v3405 = vperm.slane %v3398, 0
        %v3406 = vperm.slane %v3398, 1
        %v3407 = vperm.slane %v3398, 2
        %v3408 = vperm.slane %v3398, 3
        %3413 = vmatpush.msra.mxu0 %v3330
        %3414 = vmatpush.msra.mxu0 %v3326
        %3415 = vmatpush.msra.mxu0 %v3322
        %3416 = vmatpush.msra.mxu0 %v3318
        %3417 = vmatpush.msra.mxu0 %v3314
        %3418 = vmatpush.msra.mxu0 %v3310
        %3419 = vmatpush.msra.mxu0 %v3306
        %3420 = vmatpush.msra.mxu0 %v3302
        %3421 = vmatpush.msra.mxu0 %v3298
        %3422 = vmatpush.msra.mxu0 %v3294
        %3423 = vmatpush.msra.mxu0 %v3290
        %3424 = vmatpush.msra.mxu0 %v3286
        %3425 = vmatpush.msra.mxu0 %v3282
        %3426 = vmatpush.msra.mxu0 %v3278
        %3427 = vmatpush.msra.mxu0 %v3274
        %3428 = vmatpush.msra.mxu0 %v3270
        %3429 = vmatmul.f32.gmra.mxu0 %v3400
        %v3430 = vpop.f32.mrf.mxu0
        %v3431 = vadd.f32 %v3405, %v3430
        %3432 = vdwg.mxu0
        %3433 = vmatpush.msra.mxu0 %v3394
        %3434 = vmatpush.msra.mxu0 %v3390
        %3435 = vmatpush.msra.mxu0 %v3386
        %3436 = vmatpush.msra.mxu0 %v3382
        %3437 = vmatpush.msra.mxu0 %v3378
        %3438 = vmatpush.msra.mxu0 %v3374
        %3439 = vmatpush.msra.mxu0 %v3370
        %3440 = vmatpush.msra.mxu0 %v3366
        %3441 = vmatpush.msra.mxu0 %v3362
        %3442 = vmatpush.msra.mxu0 %v3358
        %3443 = vmatpush.msra.mxu0 %v3354
        %3444 = vmatpush.msra.mxu0 %v3350
        %3445 = vmatpush.msra.mxu0 %v3346
        %3446 = vmatpush.msra.mxu0 %v3342
        %3447 = vmatpush.msra.mxu0 %v3338
        %3448 = vmatpush.msra.mxu0 %v3334
        %3449 = vmatmul.f32.gmra.mxu0 %v3401
        %v3450 = vpop.f32.mrf.mxu0
        %v3451 = vadd.f32 %v3431, %v3450
        %3452 = vdwg.mxu0
        %3453 = vmatpush.msra.mxu0 %v3331
        %3454 = vmatpush.msra.mxu0 %v3327
        %3455 = vmatpush.msra.mxu0 %v3323
        %3456 = vmatpush.msra.mxu0 %v3319
        %3457 = vmatpush.msra.mxu0 %v3315
        %3458 = vmatpush.msra.mxu0 %v3311
        %3459 = vmatpush.msra.mxu0 %v3307
        %3460 = vmatpush.msra.mxu0 %v3303
        %3461 = vmatpush.msra.mxu0 %v3299
        %3462 = vmatpush.msra.mxu0 %v3295
        %3463 = vmatpush.msra.mxu0 %v3291
        %3464 = vmatpush.msra.mxu0 %v3287
        %3465 = vmatpush.msra.mxu0 %v3283
        %3466 = vmatpush.msra.mxu0 %v3279
        %3467 = vmatpush.msra.mxu0 %v3275
        %3468 = vmatpush.msra.mxu0 %v3271
        %3469 = vmatmul.f32.gmra.mxu0 %v3400
        %v3470 = vpop.f32.mrf.mxu0
        %v3471 = vadd.f32 %v3406, %v3470
        %3472 = vdwg.mxu0
        %3473 = vmatpush.msra.mxu0 %v3395
        %3474 = vmatpush.msra.mxu0 %v3391
        %3475 = vmatpush.msra.mxu0 %v3387
        %3476 = vmatpush.msra.mxu0 %v3383
        %3477 = vmatpush.msra.mxu0 %v3379
        %3478 = vmatpush.msra.mxu0 %v3375
        %3479 = vmatpush.msra.mxu0 %v3371
        %3480 = vmatpush.msra.mxu0 %v3367
        %3481 = vmatpush.msra.mxu0 %v3363
        %3482 = vmatpush.msra.mxu0 %v3359
        %3483 = vmatpush.msra.mxu0 %v3355
        %3484 = vmatpush.msra.mxu0 %v3351
        %3485 = vmatpush.msra.mxu0 %v3347
        %3486 = vmatpush.msra.mxu0 %v3343
        %3487 = vmatpush.msra.mxu0 %v3339
        %3488 = vmatpush.msra.mxu0 %v3335
        %3489 = vmatmul.f32.gmra.mxu0 %v3401
        %v3490 = vpop.f32.mrf.mxu0
        %v3491 = vadd.f32 %v3471, %v3490
        %3492 = vdwg.mxu0
        %3493 = vmatpush.msra.mxu0 %v3332
        %3494 = vmatpush.msra.mxu0 %v3328
        %3495 = vmatpush.msra.mxu0 %v3324
        %3496 = vmatpush.msra.mxu0 %v3320
        %3497 = vmatpush.msra.mxu0 %v3316
        %3498 = vmatpush.msra.mxu0 %v3312
        %3499 = vmatpush.msra.mxu0 %v3308
        %3500 = vmatpush.msra.mxu0 %v3304
        %3501 = vmatpush.msra.mxu0 %v3300
        %3502 = vmatpush.msra.mxu0 %v3296
        %3503 = vmatpush.msra.mxu0 %v3292
        %3504 = vmatpush.msra.mxu0 %v3288
        %3505 = vmatpush.msra.mxu0 %v3284
        %3506 = vmatpush.msra.mxu0 %v3280
        %3507 = vmatpush.msra.mxu0 %v3276
        %3508 = vmatpush.msra.mxu0 %v3272
        %3509 = vmatmul.f32.gmra.mxu0 %v3400
        %v3510 = vpop.f32.mrf.mxu0
        %v3511 = vadd.f32 %v3407, %v3510
        %3512 = vdwg.mxu0
        %3513 = vmatpush.msra.mxu0 %v3396
        %3514 = vmatpush.msra.mxu0 %v3392
        %3515 = vmatpush.msra.mxu0 %v3388
        %3516 = vmatpush.msra.mxu0 %v3384
        %3517 = vmatpush.msra.mxu0 %v3380
        %3518 = vmatpush.msra.mxu0 %v3376
        %3519 = vmatpush.msra.mxu0 %v3372
        %3520 = vmatpush.msra.mxu0 %v3368
        %3521 = vmatpush.msra.mxu0 %v3364
        %3522 = vmatpush.msra.mxu0 %v3360
        %3523 = vmatpush.msra.mxu0 %v3356
        %3524 = vmatpush.msra.mxu0 %v3352
        %3525 = vmatpush.msra.mxu0 %v3348
        %3526 = vmatpush.msra.mxu0 %v3344
        %3527 = vmatpush.msra.mxu0 %v3340
        %3528 = vmatpush.msra.mxu0 %v3336
        %3529 = vmatmul.f32.gmra.mxu0 %v3401
        %v3530 = vpop.f32.mrf.mxu0
        %v3531 = vadd.f32 %v3511, %v3530
        %3532 = vdwg.mxu0
        %3533 = vmatpush.msra.mxu0 %v3333
        %3534 = vmatpush.msra.mxu0 %v3329
        %3535 = vmatpush.msra.mxu0 %v3325
        %3536 = vmatpush.msra.mxu0 %v3321
        %3537 = vmatpush.msra.mxu0 %v3317
        %3538 = vmatpush.msra.mxu0 %v3313
        %3539 = vmatpush.msra.mxu0 %v3309
        %3540 = vmatpush.msra.mxu0 %v3305
        %3541 = vmatpush.msra.mxu0 %v3301
        %3542 = vmatpush.msra.mxu0 %v3297
        %3543 = vmatpush.msra.mxu0 %v3293
        %3544 = vmatpush.msra.mxu0 %v3289
        %3545 = vmatpush.msra.mxu0 %v3285
        %3546 = vmatpush.msra.mxu0 %v3281
        %3547 = vmatpush.msra.mxu0 %v3277
        %3548 = vmatpush.msra.mxu0 %v3273
        %3549 = vmatmul.f32.gmra.mxu0 %v3400
        %v3550 = vpop.f32.mrf.mxu0
        %v3551 = vadd.f32 %v3408, %v3550
        %3552 = vdwg.mxu0
        %3553 = vmatpush.msra.mxu0 %v3397
        %3554 = vmatpush.msra.mxu0 %v3393
        %3555 = vmatpush.msra.mxu0 %v3389
        %3556 = vmatpush.msra.mxu0 %v3385
        %3557 = vmatpush.msra.mxu0 %v3381
        %3558 = vmatpush.msra.mxu0 %v3377
        %3559 = vmatpush.msra.mxu0 %v3373
        %3560 = vmatpush.msra.mxu0 %v3369
        %3561 = vmatpush.msra.mxu0 %v3365
        %3562 = vmatpush.msra.mxu0 %v3361
        %3563 = vmatpush.msra.mxu0 %v3357
        %3564 = vmatpush.msra.mxu0 %v3353
        %3565 = vmatpush.msra.mxu0 %v3349
        %3566 = vmatpush.msra.mxu0 %v3345
        %3567 = vmatpush.msra.mxu0 %v3341
        %3568 = vmatpush.msra.mxu0 %v3337
        %3569 = vmatmul.f32.gmra.mxu0 %v3401
        %v3570 = vpop.f32.mrf.mxu0
        %v3571 = vadd.f32 %v3551, %v3570
        %3572 = vdwg.mxu0
        %v3573 = vxor.u32 %v3451, 2147483648
        %v3574 = vxor.u32 %v3491, 2147483648
        %v3575 = vxor.u32 %v3531, 2147483648
        %v3576 = vmul.f32 %v3573, 1.442695
        %v3577 = vpow.pop %v3576
        %v3578 = vmul.f32 %v3574, 1.442695
        %v3579 = vpow.pop %v3578
        %v3580 = vmul.f32 %v3575, 1.442695
        %v3581 = vpow.pop %v3580
        %v3582 = vadd.f32 %v3577, 1.0
        %v3583 = vadd.f32 %v3579, 1.0
        %v3584 = vadd.f32 %v3581, 1.0
        %v3585 = vrcp.pop %v3582
        %v3586 = vmul.f32 %v3582, %v3585
        %v3587 = vsub.f32 1.0, %v3586
        %v3588 = vmul.f32 %v3585, %v3587
        %v3589 = vadd.f32 %v3585, %v3588
        %vm3590 = vweird.f32 %v3582
        %vm3591 = vweird.f32 %v3585
        %vm3592 = vmor %vm3590, %vm3591
        %v3593 = vsel %vm3592, %v3585, %v3589
        %v3594 = vand.u32 2147483647, %v3582
        %vm3595 = vcmp.eq.f32.partialorder %v3594, 8.507059e+37
        %v3596 = vand.u32 %v3582, 2147483648
        %v3597 = vor.u32 1.1754944e-38, %v3596
        %v3598 = vsel %vm3595, %v3597, %v3593
        %v3599 = vmul.f32 1.0, %v3598
        %v3600 = vrcp.pop %v3583
        %v3601 = vmul.f32 %v3583, %v3600
        %v3602 = vsub.f32 1.0, %v3601
        %v3603 = vmul.f32 %v3600, %v3602
        %v3604 = vadd.f32 %v3600, %v3603
        %vm3605 = vweird.f32 %v3583
        %vm3606 = vweird.f32 %v3600
        %vm3607 = vmor %vm3605, %vm3606
        %v3608 = vsel %vm3607, %v3600, %v3604
        %v3609 = vand.u32 2147483647, %v3583
        %vm3610 = vcmp.eq.f32.partialorder %v3609, 8.507059e+37
        %v3611 = vand.u32 %v3583, 2147483648
        %v3612 = vor.u32 1.1754944e-38, %v3611
        %v3613 = vsel %vm3610, %v3612, %v3608
        %v3614 = vmul.f32 1.0, %v3613
        %v3615 = vrcp.pop %v3584
        %v3616 = vmul.f32 %v3584, %v3615
        %v3617 = vsub.f32 1.0, %v3616
        %v3618 = vmul.f32 %v3615, %v3617
        %v3619 = vadd.f32 %v3615, %v3618
        %vm3620 = vweird.f32 %v3584
        %vm3621 = vweird.f32 %v3615
        %vm3622 = vmor %vm3620, %vm3621
        %v3623 = vsel %vm3622, %v3615, %v3619
        %v3624 = vand.u32 2147483647, %v3584
        %vm3625 = vcmp.eq.f32.partialorder %v3624, 8.507059e+37
        %v3626 = vand.u32 %v3584, 2147483648
        %v3627 = vor.u32 1.1754944e-38, %v3626
        %v3628 = vsel %vm3625, %v3627, %v3623
        %v3629 = vmul.f32 1.0, %v3628
        %v3630 = vtanh.pop %v3571
        %v3631 = vld [vmem:[#allocation3] sm:$0x1]
        %v3632 = vmul.f32 %v3614, %v3631
        %v3633 = vmul.f32 %v3599, %v3630
        %v3634 = vadd.f32 %v3632, %v3633
        %v3635 = vtanh.pop %v3634
        %v3636 = vmul.f32 %v3629, %v3635
        %v3637 = vld [vmem:[#allocation12] sm:$0xff]
        %v3638 = vld [vmem:[#allocation12 + $0x8] sm:$0xff]
        %v3639 = vld [vmem:[#allocation12 + $0x10] sm:$0xff]
        %v3640 = vld [vmem:[#allocation12 + $0x18] sm:$0xff]
        %v3641 = vld [vmem:[#allocation12 + $0x20] sm:$0xff]
        %v3642 = vld [vmem:[#allocation12 + $0x28] sm:$0xff]
        %v3643 = vld [vmem:[#allocation12 + $0x30] sm:$0xff]
        %v3644 = vld [vmem:[#allocation12 + $0x38] sm:$0xff]
        %v3645 = vld [vmem:[#allocation12 + $0x40] sm:$0xff]
        %v3646 = vld [vmem:[#allocation12 + $0x48] sm:$0xff]
        %v3647 = vld [vmem:[#allocation12 + $0x50] sm:$0xff]
        %v3648 = vld [vmem:[#allocation12 + $0x58] sm:$0xff]
        %v3649 = vld [vmem:[#allocation12 + $0x60] sm:$0xff]
        %v3650 = vld [vmem:[#allocation12 + $0x68] sm:$0xff]
        %v3651 = vld [vmem:[#allocation12 + $0x70] sm:$0xff]
        %v3652 = vld [vmem:[#allocation12 + $0x78] sm:$0xff]
        %v3653 = vld [vmem:[%s7] sm:$0x1]
        %3654 = vmatpush.msra.mxu0 %v3652
        %3655 = vmatpush.msra.mxu0 %v3651
        %3656 = vmatpush.msra.mxu0 %v3650
        %3657 = vmatpush.msra.mxu0 %v3649
        %3658 = vmatpush.msra.mxu0 %v3648
        %3659 = vmatpush.msra.mxu0 %v3647
        %3660 = vmatpush.msra.mxu0 %v3646
        %3661 = vmatpush.msra.mxu0 %v3645
        %3662 = vmatpush.msra.mxu0 %v3644
        %3663 = vmatpush.msra.mxu0 %v3643
        %3664 = vmatpush.msra.mxu0 %v3642
        %3665 = vmatpush.msra.mxu0 %v3641
        %3666 = vmatpush.msra.mxu0 %v3640
        %3667 = vmatpush.msra.mxu0 %v3639
        %3668 = vmatpush.msra.mxu0 %v3638
        %3669 = vmatpush.msra.mxu0 %v3637
        %3670 = vmatmul.f32.gmra.mxu0 %v3636
        %v3671 = vpop.f32.mrf.mxu0
        %v3672 = vadd.f32 %v3653, %v3671
        %3673 = vdwg.mxu0
        %3674 = vst [vmem:[%s354 + $0x7] sm:$0x1] %v3672
        %3675 = vst.msk [vmem:[#allocation2 + $0x1] sm:$0x1] %vm376, %v3636
        %3676 = vst [vmem:[#allocation3] sm:$0x1] %v3634
        %p3677 = scmp.eq.s32.totalorder %s36, 1
        // Predicated region
        $region69: #{tpu_custom_call.1} parent=47 // pred_check
          %p3678 = pneg %p3677
        $region70: #{tpu_custom_call.1} parent=47 // pred_check_branch
          %3680 = sbr.rel (%p3678) target = $region72
        $region71: #{tpu_custom_call.1} parent=47 // pred_region
          %v3681 = vld [vmem:[#allocation2 + $0x1] sm:$0x1]
          %3682 = vst.msk [vmem:[#allocation15] sm:$0x1] %vm376, %v3681
          %v3683 = vld [vmem:[#allocation3] sm:$0x1]
          %3684 = vst.msk [vmem:[#allocation15 + $0x1] sm:$0x1] %vm376, %v3683
        $region72: #{tpu_custom_call.1} parent=47 // pred_fallthru
          _
        %s3685 = sand.u32 %s191, 1
        %s3686 = scalar_lea.sflag [#allocation8], %s3685
        %s3687 = sand.u32 %s191, 1
        %s3688 = smul.addr %s3687, 8
        %s3689 = scalar_lea.vmem [#allocation14], %s3688
        // Predicated region
        $region73: #{tpu_custom_call.1} parent=47 // pred_check
          %p3690 = pneg %p201
        $region74: #{tpu_custom_call.1} parent=47 // pred_check_branch
          %3692 = sbr.rel (%p3690) target = $region76
        $region75: #{tpu_custom_call.1} parent=47 // pred_region
          %3694 = vsyncadd %s3686, 0
          %s3695 = smul.addr %s36, 8
          %s3696 = scalar_lea.hbm %s8, %s3695
          %s3698 = sshll.u32 %s3689, 4
          %s3699 = int_to_ptr.vmem [resolvable:$true] %s3698
          %s3700 = sshll.u32 %s3696, 4
          %s3701 = int_to_ptr.hbm [resolvable:$true] %s3700
          %3703 = dma.vmem_to_hbm [thread:$0]  %s3699, 128, %s3701, %s3686
        $region76: #{tpu_custom_call.1} parent=47 // pred_fallthru
          _
        // Predicated region
        $region77: #{tpu_custom_call.1} parent=47 // pred_check
          %p3704 = pneg %p222
        $region78: #{tpu_custom_call.1} parent=47 // pred_check_branch
          %3706 = sbr.rel (%p3704) target = $region80
        $region79: #{tpu_custom_call.1} parent=47 // pred_region
          %3708 = vsyncadd [#allocation16], 0
          %s3710 = sshll.u32 [#allocation15], 4
          %s3711 = int_to_ptr.vmem [resolvable:$true] %s3710
          %s3712 = sshll.u32 %s9, 4
          %s3713 = int_to_ptr.hbm [resolvable:$true] %s3712
          %3715 = dma.vmem_to_hbm [thread:$0]  %s3711, 32, %s3713, [#allocation16]
        $region80: #{tpu_custom_call.1} parent=47 // pred_fallthru
          _
        // Predicated region
        $region81: #{tpu_custom_call.1} parent=47 // pred_check
          %p3716 = pneg %p222
        $region82: #{tpu_custom_call.1} parent=47 // pred_check_branch
          %3718 = sbr.rel (%p3716) target = $region84
        $region83: #{tpu_custom_call.1} parent=47 // pred_region
          %3720 = dma.done [#allocation16], 32
        $region84: #{tpu_custom_call.1} parent=47 // pred_fallthru
          _
      $region48: #{tpu_custom_call.1} parent=5 // pred_fallthru
        _
      %p3721 = scmp.le.s32.totalorder 2, %s31
      // Predicated region
      $region85: #{tpu_custom_call.1} parent=5 // pred_check
        %p3722 = pneg %p3721
      $region86: #{tpu_custom_call.1} parent=5 // pred_check_branch
        %3724 = sbr.rel (%p3722) target = $region88
      $region87: #{tpu_custom_call.1} parent=5 // pred_region
        %s3725 = ssub.s32 %s31, 2
        // Predicated region
        $region89: #{tpu_custom_call.1} parent=87 // pred_check
          %p3726 = pneg %p207
        $region90: #{tpu_custom_call.1} parent=87 // pred_check_branch
          %3728 = sbr.rel (%p3726) target = $region92
        $region91: #{tpu_custom_call.1} parent=87 // pred_region
          %s3729 = sand.u32 %s192, 1
          %s3730 = scalar_lea.sflag [#allocation8], %s3729
          %s3731 = sand.u32 %s192, 1
          %s3732 = smul.addr %s3731, 8
          %s3733 = scalar_lea.vmem [#allocation14], %s3732
          %3735 = dma.done %s3730, 128
        $region92: #{tpu_custom_call.1} parent=87 // pred_fallthru
          _
      $region88: #{tpu_custom_call.1} parent=5 // pred_fallthru
        _
    $region6: #{tpu_custom_call.1} parent=1 // loop_footer
      %s35 = sadd.s32 1, %s31
    $region7: #{tpu_custom_call.1} parent=1 // loop_footer_branch
      %30 = sbr.rel target = $region3
    $region8: #{tpu_custom_call.1} parent=1 // loop_exit
      _
    %3736 = vsyncpa [#allocation7], 1
    %s3737 = scalar_lea.sflag [#allocation7], 1
    %3738 = vsyncpa %s3737, 1
    %3739 = vsyncpa [#allocation10], 1
    %3740 = vsyncpa [#allocation13], 1
    %3741 = vsyncpa [#allocation8], 1
    %s3742 = scalar_lea.sflag [#allocation8], 1
    %3743 = vsyncpa %s3742, 1
    %3744 = vsyncpa [#allocation16], 1

</llo_original>
